<compile_context>
chip_gen: v7x
topology: tpu7x:2x2x1
jax: 0.10.0
libtpu: 0.0.40
codegen_flags: <defaults>
</compile_context>

<pallas_src>
import functools

import jax
import jax.numpy as jnp
import numpy as np
from jax.experimental import pallas as pl
from jax.experimental.pallas import tpu as pltpu


def _round_up(a, b):
    return ((a + b - 1) // b) * b


# ---------------------------------------------------------------------------
# Pallas kernel: full SIREN forward for one tile of points.
# omega_0 is pre-folded into the weights/biases by the wrapper.
# ---------------------------------------------------------------------------
def siren_kernel(p_ref, w1_ref, b1_ref, wh_ref, bh_ref, wf_ref, bf_ref, o_ref,
                 *, n_blocks, dim):
    # p_ref:  (TM, dim)            f32
    # w1_ref: (dim, H)   f32       b1_ref: (1, H)   f32   (omega folded in)
    # wh_ref: (nb, H, H) bf16      bh_ref: (nb, H)  f32   (omega folded in)
    # wf_ref: (H, out)   bf16      bf_ref: (1, out) f32
    # o_ref:  (TM, out)  f32
    x = p_ref[...]  # (TM, dim) f32

    # ---- first sine layer ----
    if dim <= 8:
        # K=dim (=3) would waste the MXU: do broadcast FMAs on the VPU instead.
        h = b1_ref[...]                                   # (1, H) -> broadcasts
        for d in range(dim):
            h = h + x[:, d:d + 1] * w1_ref[d:d + 1, :]    # (TM,1)*(1,H)
    else:
        h = jnp.dot(x, w1_ref[...],
                    preferred_element_type=jnp.float32) + b1_ref[...]
    h = jnp.sin(h)                                        # f32, (TM, H)

    # ---- hidden sine layers (static unroll; n_blocks is compile-time) ----
    for i in range(n_blocks):
        z = jnp.dot(h.astype(jnp.bfloat16), wh_ref[i],
                    preferred_element_type=jnp.float32)   # bf16 x bf16 -> f32
        z = z + bh_ref[i][None, :]                        # f32 bias
        h = jnp.sin(z)                                    # f32

    # ---- outermost linear layer (no sine) ----
    out = jnp.dot(h.astype(jnp.bfloat16), wf_ref[...],
                  preferred_element_type=jnp.float32) + bf_ref[...]
    o_ref[...] = out.astype(o_ref.dtype)


# ---------------------------------------------------------------------------
# Parameter construction (matches the PyTorch init semantics), in f32.
# ---------------------------------------------------------------------------
def init_siren_params(key, dim, hidden_size, n_blocks, out_dim,
                      first_omega_0=30.0, hidden_omega_0=30.0):
    ks = jax.random.split(key, 8)

    def uni(k, shape, bound):
        return jax.random.uniform(k, shape, jnp.float32, -bound, bound)

    # first layer: weight U(-1/in, 1/in); bias torch default U(+-1/sqrt(in))
    w1 = uni(ks[0], (dim, hidden_size), 1.0 / dim)
    b1 = uni(ks[1], (1, hidden_size), 1.0 / np.sqrt(dim))

    # hidden / final layers: weight U(+-sqrt(6/in)/omega); bias torch default
    hb = np.sqrt(6.0 / hidden_size) / hidden_omega_0
    wh = uni(ks[2], (max(n_blocks, 1), hidden_size, hidden_size), hb)
    bh = uni(ks[3], (max(n_blocks, 1), hidden_size), 1.0 / np.sqrt(hidden_size))
    wf = uni(ks[4], (hidden_size, out_dim), hb)
    bf = uni(ks[5], (1, out_dim), 1.0 / np.sqrt(hidden_size))

    return dict(w1=w1, b1=b1, wh=wh, bh=bh, wf=wf, bf=bf)


# ---------------------------------------------------------------------------
# Wrapper: SirenDecoder.forward
# ---------------------------------------------------------------------------
def siren_decoder_forward(p, params, *, n_blocks, out_dim,
                          first_omega_0=30.0, hidden_omega_0=30.0,
                          only_occupancy=False, only_texture=False,
                          tile_m=1024):
    assert p.ndim in (2, 3)
    orig_ndim = p.ndim
    if p.ndim == 3:
        B, N, dim = p.shape
        M = B * N
    else:
        M, dim = p.shape
        B, N = None, None

    p2 = p.reshape(M, dim).astype(jnp.float32)

    # ---- fold omega into weights/biases once (O(H^2)); bf16 matmul operands ----
    w1 = (params["w1"] * first_omega_0).astype(jnp.float32)
    b1 = (params["b1"] * first_omega_0).astype(jnp.float32)
    wh = (params["wh"] * hidden_omega_0).astype(jnp.bfloat16)
    bh = (params["bh"] * hidden_omega_0).astype(jnp.float32)
    wf = params["wf"].astype(jnp.bfloat16)
    bf = params["bf"].astype(jnp.float32)

    H = w1.shape[1]
    nb_eff = wh.shape[0]

    # ---- tile size: big (amortize grid-step overhead) but keep >=8 grid steps
    # on small inputs so both v7x TensorCores get work. Always a multiple of 128.
    tm = _round_up(int(tile_m), 128)
    cap = max(128, _round_up(pl.cdiv(M, 8), 128))
    tm = min(tm, cap)

    M_pad = _round_up(M, tm)
    if M_pad != M:
        p2 = jnp.pad(p2, ((0, M_pad - M), (0, 0)))
    grid = (M_pad // tm,)

    kernel = functools.partial(siren_kernel, n_blocks=n_blocks, dim=dim)

    out = pl.pallas_call(
        kernel,
        out_shape=jax.ShapeDtypeStruct((M_pad, out_dim), jnp.float32),
        grid_spec=pltpu.PrefetchScalarGridSpec(
            num_scalar_prefetch=0,
            grid=grid,
            in_specs=[
                pl.BlockSpec((tm, dim), lambda i: (i, 0)),        # points tile
                # constant-index weight/bias blocks: fetched once by pipeliner
                pl.BlockSpec((dim, H), lambda i: (0, 0)),         # w1 (f32)
                pl.BlockSpec((1, H), lambda i: (0, 0)),           # b1 (f32)
                pl.BlockSpec((nb_eff, H, H), lambda i: (0, 0, 0)),  # wh (bf16)
                pl.BlockSpec((nb_eff, H), lambda i: (0, 0)),      # bh (f32)
                pl.BlockSpec((H, out_dim), lambda i: (0, 0)),     # wf (bf16)
                pl.BlockSpec((1, out_dim), lambda i: (0, 0)),     # bf (f32)
            ],
            out_specs=pl.BlockSpec((tm, out_dim), lambda i: (i, 0)),
        ),
        compiler_params=pltpu.CompilerParams(
            dimension_semantics=("parallel",)),
    )(p2, w1, b1, wh, bh, wf, bf)

    out = out[:M]
    if orig_ndim == 3:
        out = out.reshape(B, N, out_dim)

    # post-processing slices (cheap glue, plain JAX)
    if only_occupancy:
        out = out[..., 0]
    elif only_texture:
        out = out[..., 1:4]
    # out.squeeze(-1): no-op unless trailing dim is 1
    if out.shape[-1] == 1:
        out = out[..., 0]
    return out


# ---------------------------------------------------------------------------
# Pure-JAX reference replicating the kernel's exact numerics
# (folded omegas, bf16 matmul operands, f32 accumulation / bias / sin).
# ---------------------------------------------------------------------------
def siren_ref(p, params, n_blocks, first_omega_0=30.0, hidden_omega_0=30.0):
    x = p.astype(jnp.float32)
    w1 = params["w1"] * first_omega_0
    b1 = params["b1"] * first_omega_0
    h = jnp.sin(x @ w1 + b1)
    for i in range(n_blocks):
        whi = (params["wh"][i] * hidden_omega_0).astype(jnp.bfloat16)
        bhi = params["bh"][i] * hidden_omega_0
        z = jnp.dot(h.astype(jnp.bfloat16), whi,
                    preferred_element_type=jnp.float32) + bhi[None, :]
        h = jnp.sin(z)
    wf = params["wf"].astype(jnp.bfloat16)
    return jnp.dot(h.astype(jnp.bfloat16), wf,
                   preferred_element_type=jnp.float32) + params["bf"]


if __name__ == "__main__":
    # Small, module-consistent shapes: dim=3 coords, hidden=128, 2 hidden
    # blocks, out_dim=4; points (B=2, N=200, 3).
    dim, hidden_size, n_blocks, out_dim = 3, 128, 2, 4
    key = jax.random.PRNGKey(0)
    kp, kw = jax.random.split(key)

    params = init_siren_params(kw, dim, hidden_size, n_blocks, out_dim)

    B, N = 2, 200
    p = jax.random.uniform(kp, (B, N, dim), jnp.float32, -1.0, 1.0)

    out = siren_decoder_forward(p, params, n_blocks=n_blocks, out_dim=out_dim)
    out = jax.block_until_ready(out)

    ref = siren_ref(p.reshape(-1, dim), params, n_blocks).reshape(B, N, out_dim)
    np.testing.assert_allclose(np.asarray(out), np.asarray(ref),
                               rtol=1e-3, atol=1e-3)
    assert out.shape == (B, N, out_dim)

    print("KERNEL_OK")
</pallas_src>

<mosaic_0001>
module attributes {stable_mosaic.version = 11 : i64} {
  func.func @siren_kernel(%arg0: i32, %arg1: memref<128x3xf32, #tpu.memory_space<vmem>>, %arg2: memref<3x128xf32, #tpu.memory_space<vmem>>, %arg3: memref<1x128xf32, #tpu.memory_space<vmem>>, %arg4: memref<2x128x128xbf16, #tpu.memory_space<vmem>>, %arg5: memref<2x128xf32, #tpu.memory_space<vmem>>, %arg6: memref<128x4xbf16, #tpu.memory_space<vmem>>, %arg7: memref<1x4xf32, #tpu.memory_space<vmem>>, %arg8: memref<128x4xf32, #tpu.memory_space<vmem>>) attributes {dimension_semantics = [#tpu.dimension_semantics<parallel>], iteration_bounds = array<i64: 4>, scalar_prefetch = 0 : i64, scratch_operands = 0 : i64, tpu.core_type = #tpu.core_type<tc>, window_params = [{transform_indices = @transform_0, window_bounds = array<i64: 128, 3>}, {pipeline_mode = #tpu.pipeline_mode<synchronous>, transform_indices = @transform_1, window_bounds = array<i64: 3, 128>}, {pipeline_mode = #tpu.pipeline_mode<synchronous>, transform_indices = @transform_2, window_bounds = array<i64: 1, 128>}, {pipeline_mode = #tpu.pipeline_mode<synchronous>, transform_indices = @transform_3, window_bounds = array<i64: 2, 128, 128>}, {pipeline_mode = #tpu.pipeline_mode<synchronous>, transform_indices = @transform_4, window_bounds = array<i64: 2, 128>}, {pipeline_mode = #tpu.pipeline_mode<synchronous>, transform_indices = @transform_5, window_bounds = array<i64: 128, 4>}, {pipeline_mode = #tpu.pipeline_mode<synchronous>, transform_indices = @transform_6, window_bounds = array<i64: 1, 4>}, {transform_indices = @transform_7, window_bounds = array<i64: 128, 4>}]} {
    %c0 = arith.constant 0 : index
    %c0_0 = arith.constant 0 : index
    %0 = vector.load %arg1[%c0, %c0_0] : memref<128x3xf32, #tpu.memory_space<vmem>>, vector<128x3xf32>
    %c0_1 = arith.constant 0 : index
    %c0_2 = arith.constant 0 : index
    %1 = vector.load %arg3[%c0_1, %c0_2] : memref<1x128xf32, #tpu.memory_space<vmem>>, vector<1x128xf32>
    %2 = vector.extract_strided_slice %0 {offsets = [0, 0], sizes = [128, 1], strides = [1, 1]} : vector<128x3xf32> to vector<128x1xf32>
    %c0_3 = arith.constant 0 : index
    %c0_4 = arith.constant 0 : index
    %3 = vector.load %arg2[%c0_3, %c0_4] : memref<3x128xf32, #tpu.memory_space<vmem>>, vector<1x128xf32>
    %4 = vector.broadcast %2 : vector<128x1xf32> to vector<128x128xf32>
    %5 = vector.broadcast %3 : vector<1x128xf32> to vector<128x128xf32>
    %6 = arith.mulf %4, %5 : vector<128x128xf32>
    %7 = vector.broadcast %1 : vector<1x128xf32> to vector<128x128xf32>
    %8 = arith.addf %7, %6 : vector<128x128xf32>
    %9 = vector.extract_strided_slice %0 {offsets = [0, 1], sizes = [128, 1], strides = [1, 1]} : vector<128x3xf32> to vector<128x1xf32>
    %c1 = arith.constant 1 : index
    %c0_5 = arith.constant 0 : index
    %10 = vector.load %arg2[%c1, %c0_5] : memref<3x128xf32, #tpu.memory_space<vmem>>, vector<1x128xf32>
    %11 = vector.broadcast %9 : vector<128x1xf32> to vector<128x128xf32>
    %12 = vector.broadcast %10 : vector<1x128xf32> to vector<128x128xf32>
    %13 = arith.mulf %11, %12 : vector<128x128xf32>
    %14 = arith.addf %8, %13 : vector<128x128xf32>
    %15 = vector.extract_strided_slice %0 {offsets = [0, 2], sizes = [128, 1], strides = [1, 1]} : vector<128x3xf32> to vector<128x1xf32>
    %c2 = arith.constant 2 : index
    %c0_6 = arith.constant 0 : index
    %16 = vector.load %arg2[%c2, %c0_6] : memref<3x128xf32, #tpu.memory_space<vmem>>, vector<1x128xf32>
    %17 = vector.broadcast %15 : vector<128x1xf32> to vector<128x128xf32>
    %18 = vector.broadcast %16 : vector<1x128xf32> to vector<128x128xf32>
    %19 = arith.mulf %17, %18 : vector<128x128xf32>
    %20 = arith.addf %14, %19 : vector<128x128xf32>
    %21 = math.sin %20 : vector<128x128xf32>
    %22 = arith.truncf %21 : vector<128x128xf32> to vector<128x128xbf16>
    %c0_7 = arith.constant 0 : index
    %c0_8 = arith.constant 0 : index
    %c0_9 = arith.constant 0 : index
    %23 = vector.load %arg4[%c0_7, %c0_8, %c0_9] : memref<2x128x128xbf16, #tpu.memory_space<vmem>>, vector<1x128x128xbf16>
    %24 = vector.shape_cast %23 : vector<1x128x128xbf16> to vector<128x128xbf16>
    %cst = arith.constant dense<0.000000e+00> : vector<128x128xf32>
    %25 = tpu.matmul %22, %24, %cst {dimension_numbers = #tpu.dot_dimension_numbers<[1], [0], [0], [1], [0, 0, 1, 1], [], []>} : vector<128x128xbf16>, vector<128x128xbf16>, vector<128x128xf32> -> vector<128x128xf32>
    %c0_10 = arith.constant 0 : index
    %c0_11 = arith.constant 0 : index
    %26 = vector.load %arg5[%c0_10, %c0_11] : memref<2x128xf32, #tpu.memory_space<vmem>>, vector<1x128xf32>
    %27 = vector.shape_cast %26 : vector<1x128xf32> to vector<128xf32>
    %28 = vector.shape_cast %27 : vector<128xf32> to vector<1x128xf32>
    %29 = vector.broadcast %28 : vector<1x128xf32> to vector<128x128xf32>
    %30 = arith.addf %25, %29 : vector<128x128xf32>
    %31 = math.sin %30 : vector<128x128xf32>
    %32 = arith.truncf %31 : vector<128x128xf32> to vector<128x128xbf16>
    %c1_12 = arith.constant 1 : index
    %c0_13 = arith.constant 0 : index
    %c0_14 = arith.constant 0 : index
    %33 = vector.load %arg4[%c1_12, %c0_13, %c0_14] : memref<2x128x128xbf16, #tpu.memory_space<vmem>>, vector<1x128x128xbf16>
    %34 = vector.shape_cast %33 : vector<1x128x128xbf16> to vector<128x128xbf16>
    %cst_15 = arith.constant dense<0.000000e+00> : vector<128x128xf32>
    %35 = tpu.matmul %32, %34, %cst_15 {dimension_numbers = #tpu.dot_dimension_numbers<[1], [0], [0], [1], [0, 0, 1, 1], [], []>} : vector<128x128xbf16>, vector<128x128xbf16>, vector<128x128xf32> -> vector<128x128xf32>
    %c1_16 = arith.constant 1 : index
    %c0_17 = arith.constant 0 : index
    %36 = vector.load %arg5[%c1_16, %c0_17] : memref<2x128xf32, #tpu.memory_space<vmem>>, vector<1x128xf32>
    %37 = vector.shape_cast %36 : vector<1x128xf32> to vector<128xf32>
    %38 = vector.shape_cast %37 : vector<128xf32> to vector<1x128xf32>
    %39 = vector.broadcast %38 : vector<1x128xf32> to vector<128x128xf32>
    %40 = arith.addf %35, %39 : vector<128x128xf32>
    %41 = math.sin %40 : vector<128x128xf32>
    %42 = arith.truncf %41 : vector<128x128xf32> to vector<128x128xbf16>
    %c0_18 = arith.constant 0 : index
    %c0_19 = arith.constant 0 : index
    %43 = vector.load %arg6[%c0_18, %c0_19] : memref<128x4xbf16, #tpu.memory_space<vmem>>, vector<128x4xbf16>
    %cst_20 = arith.constant dense<0.000000e+00> : vector<128x4xf32>
    %44 = tpu.matmul %42, %43, %cst_20 {dimension_numbers = #tpu.dot_dimension_numbers<[1], [0], [0], [1], [0, 0, 1, 1], [], []>} : vector<128x128xbf16>, vector<128x4xbf16>, vector<128x4xf32> -> vector<128x4xf32>
    %c0_21 = arith.constant 0 : index
    %c0_22 = arith.constant 0 : index
    %45 = vector.load %arg7[%c0_21, %c0_22] : memref<1x4xf32, #tpu.memory_space<vmem>>, vector<1x4xf32>
    %46 = vector.broadcast %45 : vector<1x4xf32> to vector<128x4xf32>
    %47 = arith.addf %44, %46 : vector<128x4xf32>
    %c0_23 = arith.constant 0 : index
    %c0_24 = arith.constant 0 : index
    %48 = vector.load %arg8[%c0_23, %c0_24] : memref<128x4xf32, #tpu.memory_space<vmem>>, vector<128x4xf32>
    tpu.vector_store %arg8[%c0_23, %c0_24], %47 {strides = array<i32>} : memref<128x4xf32, #tpu.memory_space<vmem>>, vector<128x4xf32>,
    return
  }
  func.func @transform_0(%arg0: i32) -> (i32, i32) {
    %c0_i32 = arith.constant 0 : i32
    %c0_i32_0 = arith.constant 0 : i32
    return %arg0, %c0_i32 : i32, i32
  }
  func.func @transform_1(%arg0: i32) -> (i32, i32) {
    %c0_i32 = arith.constant 0 : i32
    %c0_i32_0 = arith.constant 0 : i32
    %c0_i32_1 = arith.constant 0 : i32
    return %c0_i32, %c0_i32_0 : i32, i32
  }
  func.func @transform_2(%arg0: i32) -> (i32, i32) {
    %c0_i32 = arith.constant 0 : i32
    %c0_i32_0 = arith.constant 0 : i32
    %c0_i32_1 = arith.constant 0 : i32
    return %c0_i32, %c0_i32_0 : i32, i32
  }
  func.func @transform_3(%arg0: i32) -> (i32, i32, i32) {
    %c0_i32 = arith.constant 0 : i32
    %c0_i32_0 = arith.constant 0 : i32
    %c0_i32_1 = arith.constant 0 : i32
    %c0_i32_2 = arith.constant 0 : i32
    return %c0_i32, %c0_i32_0, %c0_i32_1 : i32, i32, i32
  }
  func.func @transform_4(%arg0: i32) -> (i32, i32) {
    %c0_i32 = arith.constant 0 : i32
    %c0_i32_0 = arith.constant 0 : i32
    %c0_i32_1 = arith.constant 0 : i32
    return %c0_i32, %c0_i32_0 : i32, i32
  }
  func.func @transform_5(%arg0: i32) -> (i32, i32) {
    %c0_i32 = arith.constant 0 : i32
    %c0_i32_0 = arith.constant 0 : i32
    %c0_i32_1 = arith.constant 0 : i32
    return %c0_i32, %c0_i32_0 : i32, i32
  }
  func.func @transform_6(%arg0: i32) -> (i32, i32) {
    %c0_i32 = arith.constant 0 : i32
    %c0_i32_0 = arith.constant 0 : i32
    %c0_i32_1 = arith.constant 0 : i32
    return %c0_i32, %c0_i32_0 : i32, i32
  }
  func.func @transform_7(%arg0: i32) -> (i32, i32) {
    %c0_i32 = arith.constant 0 : i32
    %c0_i32_0 = arith.constant 0 : i32
    return %arg0, %c0_i32 : i32, i32
  }
}

</mosaic_0001>

<llo_original>
// kernel: tpu_custom_call.1
$region0: #{tpu_custom_call.1}
  #allocation0 [shape = 'u32[]', space=smem, size = 0x4, offset = 0x4, fixed_abs, tag = 'smem constant byte address 0x4 - core index']
  #allocation1 [shape = 'u32[144,128]{1,0:T(1,128)}', space=vmem, size = 0x12000, scoped, tag = 'internal scratch']
  %s0 = inlined_call_operand.vmem [shape: f32[512,3], index: 0, kind: input, shape index: {}]
  %s1 = inlined_call_operand.vmem [shape: f32[3,128], index: 1, kind: input, shape index: {}]
  %s2 = inlined_call_operand.vmem [shape: f32[1,128], index: 2, kind: input, shape index: {}]
  %s3 = inlined_call_operand.vmem [shape: bf16[2,128,128], index: 3, kind: input, shape index: {}]
  %s4 = inlined_call_operand.vmem [shape: f32[2,128], index: 4, kind: input, shape index: {}]
  %s5 = inlined_call_operand.vmem [shape: bf16[128,4], index: 5, kind: input, shape index: {}]
  %s6 = inlined_call_operand.vmem [shape: f32[1,4], index: 6, kind: input, shape index: {}]
  %s7 = inlined_call_operand.vmem [shape: f32[512,4], index: 7, kind: output, shape index: {}]
  %s8 = sld [smem:[#allocation0]]
  $region61: #{tpu_custom_call.1} parent=0
    _
  %s10 = ssub.s32 1, %s8
  %s11 = scalar_select 0, %s10, %s8
  loop: start=0, step=1, limit=6
  $region2: #{tpu_custom_call.1} parent=0 // loop_pre_header
    _
  $region3: #{tpu_custom_call.1} parent=0 // loop_header
    %s13 = sphi 0, %s17
    %p14 = scmp.ge.s32.totalorder %s13, 6
    %s23 = sphi 0, %s25
    %s26 = sphi 0, %s23
    %s27 = sphi 0, %s26
    %s43 = sphi 0, %s27
    %s47 = sphi 0, %s47
    %s49 = sphi 0, %s47
    %s50 = sphi 0, %s49
    %s64 = sphi 0, %s50
    %s68 = sphi 0, %s68
    %s70 = sphi 0, %s68
    %s71 = sphi 0, %s70
    %s85 = sphi 0, %s71
    %s89 = sphi 0, %s89
    %s91 = sphi 0, %s89
    %s92 = sphi 0, %s91
    %s106 = sphi 0, %s92
    %s110 = sphi 0, %s110
    %s112 = sphi 0, %s110
    %s113 = sphi 0, %s112
    %s127 = sphi 0, %s113
    %s131 = sphi 0, %s131
    %s133 = sphi 0, %s131
    %s134 = sphi 0, %s133
    %s148 = sphi 0, %s134
    %s152 = sphi 0, %s152
    %s154 = sphi 0, %s152
    %s155 = sphi 0, %s154
    %s169 = sphi 0, %s155
    %s175 = sphi 0, %s177
    %s178 = sphi 0, %s175
    %s179 = sphi 0, %s178
    %s195 = sphi 0, %s179
  $region4: #{tpu_custom_call.1} parent=0 // loop_header_branch
    %16 = sbr.rel (%p14) target = $region8
  $region5: #{tpu_custom_call.1} parent=0 // loop_body
    %s18 = ssub.s32 %s13, 1
    %s19 = ssub.s32 %s13, 2
    %s20 = sadd.s32 %s13, 1
    %s21 = ssub.s32 %s13, %s20
    %p22 = scmp.eq.s32.totalorder %s21, 0
    %s24 = sadd.s32 %s23, 1
    %s25 = scalar_select %p22, %s23, %s24
    %p28 = pneg %p22
    %p29 = scmp.eq.s32.totalorder %s13, 3
    %p30 = por %p28, %p29
    %p31 = scmp.ne.s32.totalorder %s23, %s26
    %p32 = scmp.eq.s32.totalorder %s13, 0
    %p33 = por %p31, %p32
    %p34 = scmp.ne.s32.totalorder %s23, %s26
    %p35 = scmp.eq.s32.totalorder %s18, 3
    %p36 = por %p34, %p35
    %p37 = scmp.ne.s32.totalorder %s26, %s27
    %p38 = scmp.eq.s32.totalorder %s18, 0
    %p39 = por %p37, %p38
    %p40 = scmp.ne.s32.totalorder %s26, %s27
    %p41 = scmp.eq.s32.totalorder %s19, 3
    %p42 = por %p40, %p41
    %p44 = scmp.ne.s32.totalorder %s27, %s43
    %p45 = scmp.eq.s32.totalorder %s19, 0
    %p46 = por %p44, %p45
    %s48 = sadd.s32 %s47, 1
    %p51 = scmp.eq.s32.totalorder %s13, 3
    %p52 = scmp.ne.s32.totalorder %s47, %s49
    %p53 = scmp.eq.s32.totalorder %s13, 0
    %p54 = por %p52, %p53
    %p55 = scmp.ne.s32.totalorder %s47, %s49
    %p56 = scmp.eq.s32.totalorder %s18, 3
    %p57 = por %p55, %p56
    %p58 = scmp.ne.s32.totalorder %s49, %s50
    %p59 = scmp.eq.s32.totalorder %s18, 0
    %p60 = por %p58, %p59
    %p61 = scmp.ne.s32.totalorder %s49, %s50
    %p62 = scmp.eq.s32.totalorder %s19, 3
    %p63 = por %p61, %p62
    %p65 = scmp.ne.s32.totalorder %s50, %s64
    %p66 = scmp.eq.s32.totalorder %s19, 0
    %p67 = por %p65, %p66
    %s69 = sadd.s32 %s68, 1
    %p72 = scmp.eq.s32.totalorder %s13, 3
    %p73 = scmp.ne.s32.totalorder %s68, %s70
    %p74 = scmp.eq.s32.totalorder %s13, 0
    %p75 = por %p73, %p74
    %p76 = scmp.ne.s32.totalorder %s68, %s70
    %p77 = scmp.eq.s32.totalorder %s18, 3
    %p78 = por %p76, %p77
    %p79 = scmp.ne.s32.totalorder %s70, %s71
    %p80 = scmp.eq.s32.totalorder %s18, 0
    %p81 = por %p79, %p80
    %p82 = scmp.ne.s32.totalorder %s70, %s71
    %p83 = scmp.eq.s32.totalorder %s19, 3
    %p84 = por %p82, %p83
    %p86 = scmp.ne.s32.totalorder %s71, %s85
    %p87 = scmp.eq.s32.totalorder %s19, 0
    %p88 = por %p86, %p87
    %s90 = sadd.s32 %s89, 1
    %p93 = scmp.eq.s32.totalorder %s13, 3
    %p94 = scmp.ne.s32.totalorder %s89, %s91
    %p95 = scmp.eq.s32.totalorder %s13, 0
    %p96 = por %p94, %p95
    %p97 = scmp.ne.s32.totalorder %s89, %s91
    %p98 = scmp.eq.s32.totalorder %s18, 3
    %p99 = por %p97, %p98
    %p100 = scmp.ne.s32.totalorder %s91, %s92
    %p101 = scmp.eq.s32.totalorder %s18, 0
    %p102 = por %p100, %p101
    %p103 = scmp.ne.s32.totalorder %s91, %s92
    %p104 = scmp.eq.s32.totalorder %s19, 3
    %p105 = por %p103, %p104
    %p107 = scmp.ne.s32.totalorder %s92, %s106
    %p108 = scmp.eq.s32.totalorder %s19, 0
    %p109 = por %p107, %p108
    %s111 = sadd.s32 %s110, 1
    %p114 = scmp.eq.s32.totalorder %s13, 3
    %p115 = scmp.ne.s32.totalorder %s110, %s112
    %p116 = scmp.eq.s32.totalorder %s13, 0
    %p117 = por %p115, %p116
    %p118 = scmp.ne.s32.totalorder %s110, %s112
    %p119 = scmp.eq.s32.totalorder %s18, 3
    %p120 = por %p118, %p119
    %p121 = scmp.ne.s32.totalorder %s112, %s113
    %p122 = scmp.eq.s32.totalorder %s18, 0
    %p123 = por %p121, %p122
    %p124 = scmp.ne.s32.totalorder %s112, %s113
    %p125 = scmp.eq.s32.totalorder %s19, 3
    %p126 = por %p124, %p125
    %p128 = scmp.ne.s32.totalorder %s113, %s127
    %p129 = scmp.eq.s32.totalorder %s19, 0
    %p130 = por %p128, %p129
    %s132 = sadd.s32 %s131, 1
    %p135 = scmp.eq.s32.totalorder %s13, 3
    %p136 = scmp.ne.s32.totalorder %s131, %s133
    %p137 = scmp.eq.s32.totalorder %s13, 0
    %p138 = por %p136, %p137
    %p139 = scmp.ne.s32.totalorder %s131, %s133
    %p140 = scmp.eq.s32.totalorder %s18, 3
    %p141 = por %p139, %p140
    %p142 = scmp.ne.s32.totalorder %s133, %s134
    %p143 = scmp.eq.s32.totalorder %s18, 0
    %p144 = por %p142, %p143
    %p145 = scmp.ne.s32.totalorder %s133, %s134
    %p146 = scmp.eq.s32.totalorder %s19, 3
    %p147 = por %p145, %p146
    %p149 = scmp.ne.s32.totalorder %s134, %s148
    %p150 = scmp.eq.s32.totalorder %s19, 0
    %p151 = por %p149, %p150
    %s153 = sadd.s32 %s152, 1
    %p156 = scmp.eq.s32.totalorder %s13, 3
    %p157 = scmp.ne.s32.totalorder %s152, %s154
    %p158 = scmp.eq.s32.totalorder %s13, 0
    %p159 = por %p157, %p158
    %p160 = scmp.ne.s32.totalorder %s152, %s154
    %p161 = scmp.eq.s32.totalorder %s18, 3
    %p162 = por %p160, %p161
    %p163 = scmp.ne.s32.totalorder %s154, %s155
    %p164 = scmp.eq.s32.totalorder %s18, 0
    %p165 = por %p163, %p164
    %p166 = scmp.ne.s32.totalorder %s154, %s155
    %p167 = scmp.eq.s32.totalorder %s19, 3
    %p168 = por %p166, %p167
    %p170 = scmp.ne.s32.totalorder %s155, %s169
    %p171 = scmp.eq.s32.totalorder %s19, 0
    %p172 = por %p170, %p171
    %s173 = ssub.s32 %s13, %s20
    %p174 = scmp.eq.s32.totalorder %s173, 0
    %s176 = sadd.s32 %s175, 1
    %s177 = scalar_select %p174, %s175, %s176
    %p180 = pneg %p174
    %p181 = scmp.eq.s32.totalorder %s13, 3
    %p182 = por %p180, %p181
    %p183 = scmp.ne.s32.totalorder %s175, %s178
    %p184 = scmp.eq.s32.totalorder %s13, 0
    %p185 = por %p183, %p184
    %p186 = scmp.ne.s32.totalorder %s175, %s178
    %p187 = scmp.eq.s32.totalorder %s18, 3
    %p188 = por %p186, %p187
    %p189 = scmp.ne.s32.totalorder %s178, %s179
    %p190 = scmp.eq.s32.totalorder %s18, 0
    %p191 = por %p189, %p190
    %p192 = scmp.ne.s32.totalorder %s178, %s179
    %p193 = scmp.eq.s32.totalorder %s19, 3
    %p194 = por %p192, %p193
    %p196 = scmp.ne.s32.totalorder %s179, %s195
    %p197 = scmp.eq.s32.totalorder %s19, 0
    %p198 = por %p196, %p197
    %p199 = scmp.le.s32.totalorder 1, %s13
    %p200 = scmp.lt.s32.totalorder %s13, 5
    %p201 = pnand %p199, %p200
    %p202 = pneg %p201
    // Predicated region
    $region9: #{tpu_custom_call.1} parent=5 // pred_check
      _
    $region10: #{tpu_custom_call.1} parent=5 // pred_check_branch
      %204 = sbr.rel (%p201) target = $region12
    $region11: #{tpu_custom_call.1} parent=5 // pred_region
      %s205 = ssub.s32 %s13, 1
      // Predicated region
      $region13: #{tpu_custom_call.1} parent=11 // pred_check
        %p206 = pneg %p60
      $region14: #{tpu_custom_call.1} parent=11 // pred_check_branch
        %208 = sbr.rel (%p206) target = $region16
      $region15: #{tpu_custom_call.1} parent=11 // pred_region
        _
      $region16: #{tpu_custom_call.1} parent=11 // pred_fallthru
        _
      // Predicated region
      $region17: #{tpu_custom_call.1} parent=11 // pred_check
        %p209 = pneg %p81
      $region18: #{tpu_custom_call.1} parent=11 // pred_check_branch
        %211 = sbr.rel (%p209) target = $region20
      $region19: #{tpu_custom_call.1} parent=11 // pred_region
        _
      $region20: #{tpu_custom_call.1} parent=11 // pred_fallthru
        _
      // Predicated region
      $region21: #{tpu_custom_call.1} parent=11 // pred_check
        %p212 = pneg %p102
      $region22: #{tpu_custom_call.1} parent=11 // pred_check_branch
        %214 = sbr.rel (%p212) target = $region24
      $region23: #{tpu_custom_call.1} parent=11 // pred_region
        _
      $region24: #{tpu_custom_call.1} parent=11 // pred_fallthru
        _
      // Predicated region
      $region25: #{tpu_custom_call.1} parent=11 // pred_check
        %p215 = pneg %p123
      $region26: #{tpu_custom_call.1} parent=11 // pred_check_branch
        %217 = sbr.rel (%p215) target = $region28
      $region27: #{tpu_custom_call.1} parent=11 // pred_region
        _
      $region28: #{tpu_custom_call.1} parent=11 // pred_fallthru
        _
      // Predicated region
      $region29: #{tpu_custom_call.1} parent=11 // pred_check
        %p218 = pneg %p144
      $region30: #{tpu_custom_call.1} parent=11 // pred_check_branch
        %220 = sbr.rel (%p218) target = $region32
      $region31: #{tpu_custom_call.1} parent=11 // pred_region
        _
      $region32: #{tpu_custom_call.1} parent=11 // pred_fallthru
        _
      // Predicated region
      $region33: #{tpu_custom_call.1} parent=11 // pred_check
        %p221 = pneg %p165
      $region34: #{tpu_custom_call.1} parent=11 // pred_check_branch
        %223 = sbr.rel (%p221) target = $region36
      $region35: #{tpu_custom_call.1} parent=11 // pred_region
        _
      $region36: #{tpu_custom_call.1} parent=11 // pred_fallthru
        _
    $region12: #{tpu_custom_call.1} parent=5 // pred_fallthru
      _
    %p224 = scmp.lt.s32.totalorder %s13, 4
    // Predicated region
    $region37: #{tpu_custom_call.1} parent=5 // pred_check
      %p225 = pneg %p224
    $region38: #{tpu_custom_call.1} parent=5 // pred_check_branch
      %227 = sbr.rel (%p225) target = $region40
    $region39: #{tpu_custom_call.1} parent=5 // pred_region
      // Predicated region
      $region41: #{tpu_custom_call.1} parent=39 // pred_check
        %p228 = pneg %p33
      $region42: #{tpu_custom_call.1} parent=39 // pred_check_branch
        %230 = sbr.rel (%p228) target = $region44
      $region43: #{tpu_custom_call.1} parent=39 // pred_region
        %s231 = smul.u32 16, %s13
        %p232 = scmp.lt.s32.totalorder %s231, 63
        %s233 = scalar_select %p232, %s231, 63
        %s234 = smul.addr %s233, 8
        %s235 = scalar_lea.vmem %s0, %s234
        %s236 = smul.u32 16, %s13
      $region44: #{tpu_custom_call.1} parent=39 // pred_fallthru
        _
    $region40: #{tpu_custom_call.1} parent=5 // pred_fallthru
      _
    %p237 = scmp.le.s32.totalorder 1, %s13
    %p238 = scmp.lt.s32.totalorder %s13, 5
    %p239 = pnand %p237, %p238
    %p240 = pneg %p239
    // Predicated region
    $region45: #{tpu_custom_call.1} parent=5 // pred_check
      _
    $region46: #{tpu_custom_call.1} parent=5 // pred_check_branch
      %242 = sbr.rel (%p239) target = $region48
    $region47: #{tpu_custom_call.1} parent=5 // pred_region
      %s243 = ssub.s32 %s13, 1
      %s244 = smul.u32 16, %s18
      %p245 = scmp.lt.s32.totalorder %s244, 63
      %s246 = scalar_select %p245, %s244, 63
      %s247 = smul.addr %s246, 8
      %s248 = scalar_lea.vmem %s0, %s247
      %p249 = pneg %p39
      %p250 = pneg %p36
      %p251 = pneg %p60
      %p252 = pneg %p57
      %p253 = pneg %p81
      %p254 = pneg %p78
      %p255 = pneg %p102
      %p256 = pneg %p99
      %p257 = pneg %p123
      %p258 = pneg %p120
      %p259 = pneg %p144
      %p260 = pneg %p141
      %p261 = pneg %p165
      %p262 = pneg %p162
      %p263 = pneg %p191
      %p264 = pneg %p188
      %s265 = smul.u32 16, %s18
      %p266 = scmp.lt.s32.totalorder %s265, 63
      %s267 = scalar_select %p266, %s265, 63
      %s268 = smul.addr %s267, 8
      %s269 = scalar_lea.vmem %s7, %s268
      %s270 = smul.u32 16, %s18
      %p271 = scmp.lt.s32.totalorder %s270, 63
      %s272 = scalar_select %p271, %s270, 63
      %s273 = smul.addr %s272, 8
      %s274 = scalar_lea.vmem %s0, %s273
      %s275 = smul.u32 16, %s18
      %s276 = smul.u32 16, %s18
      %p277 = scmp.lt.s32.totalorder %s276, 63
      %s278 = scalar_select %p277, %s276, 63
      %s279 = smul.addr %s278, 8
      %s280 = scalar_lea.vmem %s7, %s279
      %s281 = smul.u32 16, %s18
      %v283 = vld [vmem:[%s274] sm:$0xff]
      %v284 = vld [vmem:[%s274 + $0x8] sm:$0xff]
      %v285 = vld [vmem:[%s274 + $0x10] sm:$0xff]
      %v286 = vld [vmem:[%s274 + $0x18] sm:$0xff]
      %v287 = vld [vmem:[%s274 + $0x20] sm:$0xff]
      %v288 = vld [vmem:[%s274 + $0x28] sm:$0xff]
      %v289 = vld [vmem:[%s274 + $0x30] sm:$0xff]
      %v290 = vld [vmem:[%s274 + $0x38] sm:$0xff]
      %v291 = vld [vmem:[%s274 + $0x40] sm:$0xff]
      %v292 = vld [vmem:[%s274 + $0x48] sm:$0xff]
      %v293 = vld [vmem:[%s274 + $0x50] sm:$0xff]
      %v294 = vld [vmem:[%s274 + $0x58] sm:$0xff]
      %v295 = vld [vmem:[%s274 + $0x60] sm:$0xff]
      %v296 = vld [vmem:[%s274 + $0x68] sm:$0xff]
      %v297 = vld [vmem:[%s274 + $0x70] sm:$0xff]
      %v298 = vld [vmem:[%s274 + $0x78] sm:$0xff]
      %v299 = vld [vmem:[%s2] sm:$0x1]
      %v300 = vld [vmem:[%s1] sm:$0x1]
      %302 = vset.pattern.permute.xlu0 0
      %303 = vperm.xlu0 %302, %v283
      %v304 = vpop.permute.xlu0 %303
      %307 = vset.pattern.permute.xlu0 0
      %308 = vperm.xlu0 %307, %v284
      %v309 = vpop.permute.xlu0 %308
      %312 = vset.pattern.permute.xlu0 0
      %313 = vperm.xlu0 %312, %v285
      %v314 = vpop.permute.xlu0 %313
      %317 = vset.pattern.permute.xlu0 0
      %318 = vperm.xlu0 %317, %v286
      %v319 = vpop.permute.xlu0 %318
      %322 = vset.pattern.permute.xlu0 0
      %323 = vperm.xlu0 %322, %v287
      %v324 = vpop.permute.xlu0 %323
      %327 = vset.pattern.permute.xlu0 0
      %328 = vperm.xlu0 %327, %v288
      %v329 = vpop.permute.xlu0 %328
      %332 = vset.pattern.permute.xlu0 0
      %333 = vperm.xlu0 %332, %v289
      %v334 = vpop.permute.xlu0 %333
      %337 = vset.pattern.permute.xlu0 0
      %338 = vperm.xlu0 %337, %v290
      %v339 = vpop.permute.xlu0 %338
      %342 = vset.pattern.permute.xlu0 0
      %343 = vperm.xlu0 %342, %v291
      %v344 = vpop.permute.xlu0 %343
      %347 = vset.pattern.permute.xlu0 0
      %348 = vperm.xlu0 %347, %v292
      %v349 = vpop.permute.xlu0 %348
      %352 = vset.pattern.permute.xlu0 0
      %353 = vperm.xlu0 %352, %v293
      %v354 = vpop.permute.xlu0 %353
      %357 = vset.pattern.permute.xlu0 0
      %358 = vperm.xlu0 %357, %v294
      %v359 = vpop.permute.xlu0 %358
      %362 = vset.pattern.permute.xlu0 0
      %363 = vperm.xlu0 %362, %v295
      %v364 = vpop.permute.xlu0 %363
      %367 = vset.pattern.permute.xlu0 0
      %368 = vperm.xlu0 %367, %v296
      %v369 = vpop.permute.xlu0 %368
      %372 = vset.pattern.permute.xlu0 0
      %373 = vperm.xlu0 %372, %v297
      %v374 = vpop.permute.xlu0 %373
      %377 = vset.pattern.permute.xlu0 0
      %378 = vperm.xlu0 %377, %v298
      %v379 = vpop.permute.xlu0 %378
      %v381 = vlaneseq
      %v382 = vshrl.u32 %v381, 7
      %v383 = vsub.s32 0, %v382
      %v384 = vrot.slane %v300, %v383
      %v385 = vmul.f32 %v304, %v384
      %v386 = vmul.f32 %v309, %v384
      %v387 = vmul.f32 %v314, %v384
      %v388 = vmul.f32 %v319, %v384
      %v389 = vmul.f32 %v324, %v384
      %v390 = vmul.f32 %v329, %v384
      %v391 = vmul.f32 %v334, %v384
      %v392 = vmul.f32 %v339, %v384
      %v393 = vmul.f32 %v344, %v384
      %v394 = vmul.f32 %v349, %v384
      %v395 = vmul.f32 %v354, %v384
      %v396 = vmul.f32 %v359, %v384
      %v397 = vmul.f32 %v364, %v384
      %v398 = vmul.f32 %v369, %v384
      %v399 = vmul.f32 %v374, %v384
      %v400 = vmul.f32 %v379, %v384
      %v402 = vlaneseq
      %v403 = vshrl.u32 %v402, 7
      %v404 = vsub.s32 0, %v403
      %v405 = vrot.slane %v299, %v404
      %v407 = vadd.f32 %v405, %v385
      %v408 = vadd.f32 %v405, %v386
      %v409 = vadd.f32 %v405, %v387
      %v410 = vadd.f32 %v405, %v388
      %v411 = vadd.f32 %v405, %v389
      %v412 = vadd.f32 %v405, %v390
      %v413 = vadd.f32 %v405, %v391
      %v414 = vadd.f32 %v405, %v392
      %v415 = vadd.f32 %v405, %v393
      %v416 = vadd.f32 %v405, %v394
      %v417 = vadd.f32 %v405, %v395
      %v418 = vadd.f32 %v405, %v396
      %v419 = vadd.f32 %v405, %v397
      %v420 = vadd.f32 %v405, %v398
      %v421 = vadd.f32 %v405, %v399
      %v422 = vadd.f32 %v405, %v400
      %v423 = vld [vmem:[%s1 + $0x1] sm:$0x1]
      %424 = vset.pattern.permute.xlu0 1
      %425 = vperm.xlu0 %424, %v283
      %v426 = vpop.permute.xlu0 %425
      %428 = vset.pattern.permute.xlu0 1
      %429 = vperm.xlu0 %428, %v284
      %v430 = vpop.permute.xlu0 %429
      %432 = vset.pattern.permute.xlu0 1
      %433 = vperm.xlu0 %432, %v285
      %v434 = vpop.permute.xlu0 %433
      %436 = vset.pattern.permute.xlu0 1
      %437 = vperm.xlu0 %436, %v286
      %v438 = vpop.permute.xlu0 %437
      %440 = vset.pattern.permute.xlu0 1
      %441 = vperm.xlu0 %440, %v287
      %v442 = vpop.permute.xlu0 %441
      %444 = vset.pattern.permute.xlu0 1
      %445 = vperm.xlu0 %444, %v288
      %v446 = vpop.permute.xlu0 %445
      %448 = vset.pattern.permute.xlu0 1
      %449 = vperm.xlu0 %448, %v289
      %v450 = vpop.permute.xlu0 %449
      %452 = vset.pattern.permute.xlu0 1
      %453 = vperm.xlu0 %452, %v290
      %v454 = vpop.permute.xlu0 %453
      %456 = vset.pattern.permute.xlu0 1
      %457 = vperm.xlu0 %456, %v291
      %v458 = vpop.permute.xlu0 %457
      %460 = vset.pattern.permute.xlu0 1
      %461 = vperm.xlu0 %460, %v292
      %v462 = vpop.permute.xlu0 %461
      %464 = vset.pattern.permute.xlu0 1
      %465 = vperm.xlu0 %464, %v293
      %v466 = vpop.permute.xlu0 %465
      %468 = vset.pattern.permute.xlu0 1
      %469 = vperm.xlu0 %468, %v294
      %v470 = vpop.permute.xlu0 %469
      %472 = vset.pattern.permute.xlu0 1
      %473 = vperm.xlu0 %472, %v295
      %v474 = vpop.permute.xlu0 %473
      %476 = vset.pattern.permute.xlu0 1
      %477 = vperm.xlu0 %476, %v296
      %v478 = vpop.permute.xlu0 %477
      %480 = vset.pattern.permute.xlu0 1
      %481 = vperm.xlu0 %480, %v297
      %v482 = vpop.permute.xlu0 %481
      %484 = vset.pattern.permute.xlu0 1
      %485 = vperm.xlu0 %484, %v298
      %v486 = vpop.permute.xlu0 %485
      %v488 = vlaneseq
      %v489 = vshrl.u32 %v488, 7
      %v490 = vsub.s32 0, %v489
      %v491 = vrot.slane %v423, %v490
      %v492 = vmul.f32 %v426, %v491
      %v493 = vmul.f32 %v430, %v491
      %v494 = vmul.f32 %v434, %v491
      %v495 = vmul.f32 %v438, %v491
      %v496 = vmul.f32 %v442, %v491
      %v497 = vmul.f32 %v446, %v491
      %v498 = vmul.f32 %v450, %v491
      %v499 = vmul.f32 %v454, %v491
      %v500 = vmul.f32 %v458, %v491
      %v501 = vmul.f32 %v462, %v491
      %v502 = vmul.f32 %v466, %v491
      %v503 = vmul.f32 %v470, %v491
      %v504 = vmul.f32 %v474, %v491
      %v505 = vmul.f32 %v478, %v491
      %v506 = vmul.f32 %v482, %v491
      %v507 = vmul.f32 %v486, %v491
      %v508 = vadd.f32 %v407, %v492
      %v509 = vadd.f32 %v408, %v493
      %v510 = vadd.f32 %v409, %v494
      %v511 = vadd.f32 %v410, %v495
      %v512 = vadd.f32 %v411, %v496
      %v513 = vadd.f32 %v412, %v497
      %v514 = vadd.f32 %v413, %v498
      %v515 = vadd.f32 %v414, %v499
      %v516 = vadd.f32 %v415, %v500
      %v517 = vadd.f32 %v416, %v501
      %v518 = vadd.f32 %v417, %v502
      %v519 = vadd.f32 %v418, %v503
      %v520 = vadd.f32 %v419, %v504
      %v521 = vadd.f32 %v420, %v505
      %v522 = vadd.f32 %v421, %v506
      %v523 = vadd.f32 %v422, %v507
      %v524 = vld [vmem:[%s1 + $0x2] sm:$0x1]
      %525 = vset.pattern.permute.xlu0 2
      %526 = vperm.xlu0 %525, %v283
      %v527 = vpop.permute.xlu0 %526
      %529 = vset.pattern.permute.xlu0 2
      %530 = vperm.xlu0 %529, %v284
      %v531 = vpop.permute.xlu0 %530
      %533 = vset.pattern.permute.xlu0 2
      %534 = vperm.xlu0 %533, %v285
      %v535 = vpop.permute.xlu0 %534
      %537 = vset.pattern.permute.xlu0 2
      %538 = vperm.xlu0 %537, %v286
      %v539 = vpop.permute.xlu0 %538
      %541 = vset.pattern.permute.xlu0 2
      %542 = vperm.xlu0 %541, %v287
      %v543 = vpop.permute.xlu0 %542
      %545 = vset.pattern.permute.xlu0 2
      %546 = vperm.xlu0 %545, %v288
      %v547 = vpop.permute.xlu0 %546
      %549 = vset.pattern.permute.xlu0 2
      %550 = vperm.xlu0 %549, %v289
      %v551 = vpop.permute.xlu0 %550
      %553 = vset.pattern.permute.xlu0 2
      %554 = vperm.xlu0 %553, %v290
      %v555 = vpop.permute.xlu0 %554
      %557 = vset.pattern.permute.xlu0 2
      %558 = vperm.xlu0 %557, %v291
      %v559 = vpop.permute.xlu0 %558
      %561 = vset.pattern.permute.xlu0 2
      %562 = vperm.xlu0 %561, %v292
      %v563 = vpop.permute.xlu0 %562
      %565 = vset.pattern.permute.xlu0 2
      %566 = vperm.xlu0 %565, %v293
      %v567 = vpop.permute.xlu0 %566
      %569 = vset.pattern.permute.xlu0 2
      %570 = vperm.xlu0 %569, %v294
      %v571 = vpop.permute.xlu0 %570
      %573 = vset.pattern.permute.xlu0 2
      %574 = vperm.xlu0 %573, %v295
      %v575 = vpop.permute.xlu0 %574
      %577 = vset.pattern.permute.xlu0 2
      %578 = vperm.xlu0 %577, %v296
      %v579 = vpop.permute.xlu0 %578
      %581 = vset.pattern.permute.xlu0 2
      %582 = vperm.xlu0 %581, %v297
      %v583 = vpop.permute.xlu0 %582
      %585 = vset.pattern.permute.xlu0 2
      %586 = vperm.xlu0 %585, %v298
      %v587 = vpop.permute.xlu0 %586
      %v589 = vlaneseq
      %v590 = vshrl.u32 %v589, 7
      %v591 = vsub.s32 0, %v590
      %v592 = vrot.slane %v524, %v591
      %v593 = vmul.f32 %v527, %v592
      %v594 = vmul.f32 %v531, %v592
      %v595 = vmul.f32 %v535, %v592
      %v596 = vmul.f32 %v539, %v592
      %v597 = vmul.f32 %v543, %v592
      %v598 = vmul.f32 %v547, %v592
      %v599 = vmul.f32 %v551, %v592
      %v600 = vmul.f32 %v555, %v592
      %v601 = vmul.f32 %v559, %v592
      %v602 = vmul.f32 %v563, %v592
      %v603 = vmul.f32 %v567, %v592
      %v604 = vmul.f32 %v571, %v592
      %v605 = vmul.f32 %v575, %v592
      %v606 = vmul.f32 %v579, %v592
      %v607 = vmul.f32 %v583, %v592
      %v608 = vmul.f32 %v587, %v592
      %v609 = vadd.f32 %v508, %v593
      %v610 = vadd.f32 %v509, %v594
      %v611 = vadd.f32 %v510, %v595
      %v612 = vadd.f32 %v511, %v596
      %v613 = vadd.f32 %v512, %v597
      %v614 = vadd.f32 %v513, %v598
      %v615 = vadd.f32 %v514, %v599
      %v616 = vadd.f32 %v515, %v600
      %v617 = vadd.f32 %v516, %v601
      %v618 = vadd.f32 %v517, %v602
      %v619 = vadd.f32 %v518, %v603
      %v620 = vadd.f32 %v519, %v604
      %v621 = vadd.f32 %v520, %v605
      %v622 = vadd.f32 %v521, %v606
      %v623 = vadd.f32 %v522, %v607
      %v624 = vadd.f32 %v523, %v608
      %v625 = vand.u32 2147483647, %v609
      %vm626 = vcmp.le.f32.partialorder %v625, 0.7853982
      %vm627 = vcmp.lt.s32.totalorder %v609, 0
      %v628 = vand.u32 %v609, 2139095040
      %v629 = vshrl.u32 %v628, 23
      %v630 = vsub.s32 %v629, 127
      %v631 = vand.u32 2147483647, %v609
      %v632 = vand.u32 %v631, 8388607
      %v633 = vor.u32 %v632, 8388608
      %v634 = vsub.s32 0, %v633
      %v635 = vadd.s32 %v630, 1
      %vm636 = vcmp.gt.s32.totalorder %v635, 0
      %v637 = vsel %vm636, %v635, 0
      %v638 = vshrl.u32 %v637, 5
      %v639 = vand.u32 %v637, 31
      %v640 = vsub.s32 32, %v639
      %v641 = vshrl.u32 683565275, %v640
      %v642 = vshll.u32 683565275, %v639
      %v643 = vshrl.u32 2475754826, %v640
      %v644 = vor.u32 %v642, %v643
      %v645 = vshll.u32 2475754826, %v639
      %v646 = vshrl.u32 2131351028, %v640
      %v647 = vor.u32 %v645, %v646
      %v648 = vshll.u32 2131351028, %v639
      %v649 = vshrl.u32 2102212464, %v640
      %v650 = vor.u32 %v648, %v649
      %v651 = vshll.u32 2102212464, %v639
      %v652 = vshrl.u32 920167782, %v640
      %v653 = vor.u32 %v651, %v652
      %v654 = vshll.u32 920167782, %v639
      %v655 = vshrl.u32 1326507024, %v640
      %v656 = vor.u32 %v654, %v655
      %vm657 = vcmp.lt.s32.totalorder %v638, 1
      %vm658 = vcmp.lt.s32.totalorder %v638, 2
      %vm659 = vcmp.lt.s32.totalorder %v638, 3
      %vm660 = vcmp.lt.s32.totalorder %v638, 4
      %v661 = vsel %vm657, %v641, %v644
      %v662 = vsel %vm660, %v650, 2102212464
      %v663 = vsel %vm659, %v647, %v662
      %v664 = vsel %vm658, %v661, %v663
      %v665 = vsel %vm657, %v644, %v647
      %v666 = vsel %vm660, %v653, 920167782
      %v667 = vsel %vm659, %v650, %v666
      %v668 = vsel %vm658, %v665, %v667
      %v669 = vsel %vm657, %v647, %v650
      %v670 = vsel %vm660, %v656, 1326507024
      %v671 = vsel %vm659, %v653, %v670
      %v672 = vsel %vm658, %v669, %v671
      %v673 = vshll.u32 %v633, 8
      %v674 = vmul.u32.u64.compose %v673, %v672
      %v675 = vextract.low.u32 %v674
      %v676 = vextract.high.u32 %v674
      %v677 = vmul.u32.u64.compose %v673, %v668
      %v678 = vextract.low.u32 %v677
      %v679 = vextract.high.u32 %v677
      %v680 = vmul.u32 %v673, %v664
      %v681 = vadd.s32 %v676, %v678
      %vm682 = vc.u32 %v676, %v678
      %v683 = vadd.s32 %v679, 1
      %v684 = vsel %vm682, %v683, %v679
      %v685 = vadd.s32 %v680, %v684
      %v686 = vadd.s32 %v685, 536870912
      %v687 = vshrl.u32 %v686, 30
      %v688 = vshll.u32 %v687, 30
      %v689 = vsub.s32 %v685, %v688
      %vm690 = vcmp.lt.s32.totalorder %v689, 0
      %v691 = vsub.s32 0, %v689
      %v692 = vsel %vm690, %v691, %v689
      %v693 = vclz %v692
      %v694 = vsub.s32 %v693, 2
      %vm695 = vcmp.gt.s32.totalorder 0, %v694
      %v696 = vsel %vm695, 0, %v694
      %v697 = vsub.s32 32, %v696
      %v698 = vshll.u32 %v689, %v696
      %v699 = vshrl.u32 %v681, %v697
      %v700 = vor.u32 %v698, %v699
      %v701 = vsub.s32 4294967266, %v696
      %v702 = vadd.s32 %v701, 127
      %v703 = vshll.u32 %v702, 23
      %v704 = vor.u32 4788187, %v703
      %v705 = vand.u32 2147483647, %v704
      %v707 = vcvt.s32.f32 %v700
      %v708 = vmul.f32 %v707, %v705
      %v709 = vxor.u32 %v708, 2147483648
      %v710 = vsel %vm627, %v709, %v708
      %v711 = vsub.s32 4, %v687
      %v712 = vsel %vm627, %v711, %v687
      %v713 = vsel %vm626, %v609, %v710
      %v714 = vsel %vm626, 0, %v712
      %v715 = vcosq.f32.pop %v713
      %v716 = vsinq.f32.pop %v713
      %vm717 = vweird.f32 %v609
      %v718 = vadd.s32 %v714, 3
      %v719 = vand.u32 %v718, 3
      %vm720 = vcmp.lt.s32.totalorder %v719, 2
      %vm721 = vcmp.eq.s32.totalorder %v719, 0
      %v722 = vxor.u32 %v716, 2147483648
      %v723 = vsel %vm721, %v715, %v722
      %vm724 = vcmp.eq.s32.totalorder %v719, 2
      %v725 = vxor.u32 %v715, 2147483648
      %v726 = vsel %vm724, %v725, %v716
      %v727 = vsel %vm720, %v723, %v726
      %v728 = vsel %vm717, nan, %v727
      %v729 = vand.u32 2147483647, %v610
      %vm730 = vcmp.le.f32.partialorder %v729, 0.7853982
      %vm731 = vcmp.lt.s32.totalorder %v610, 0
      %v732 = vand.u32 %v610, 2139095040
      %v733 = vshrl.u32 %v732, 23
      %v734 = vsub.s32 %v733, 127
      %v735 = vand.u32 2147483647, %v610
      %v736 = vand.u32 %v735, 8388607
      %v737 = vor.u32 %v736, 8388608
      %v738 = vsub.s32 0, %v737
      %v739 = vadd.s32 %v734, 1
      %vm740 = vcmp.gt.s32.totalorder %v739, 0
      %v741 = vsel %vm740, %v739, 0
      %v742 = vshrl.u32 %v741, 5
      %v743 = vand.u32 %v741, 31
      %v744 = vsub.s32 32, %v743
      %v745 = vshrl.u32 683565275, %v744
      %v746 = vshll.u32 683565275, %v743
      %v747 = vshrl.u32 2475754826, %v744
      %v748 = vor.u32 %v746, %v747
      %v749 = vshll.u32 2475754826, %v743
      %v750 = vshrl.u32 2131351028, %v744
      %v751 = vor.u32 %v749, %v750
      %v752 = vshll.u32 2131351028, %v743
      %v753 = vshrl.u32 2102212464, %v744
      %v754 = vor.u32 %v752, %v753
      %v755 = vshll.u32 2102212464, %v743
      %v756 = vshrl.u32 920167782, %v744
      %v757 = vor.u32 %v755, %v756
      %v758 = vshll.u32 920167782, %v743
      %v759 = vshrl.u32 1326507024, %v744
      %v760 = vor.u32 %v758, %v759
      %vm761 = vcmp.lt.s32.totalorder %v742, 1
      %vm762 = vcmp.lt.s32.totalorder %v742, 2
      %vm763 = vcmp.lt.s32.totalorder %v742, 3
      %vm764 = vcmp.lt.s32.totalorder %v742, 4
      %v765 = vsel %vm761, %v745, %v748
      %v766 = vsel %vm764, %v754, 2102212464
      %v767 = vsel %vm763, %v751, %v766
      %v768 = vsel %vm762, %v765, %v767
      %v769 = vsel %vm761, %v748, %v751
      %v770 = vsel %vm764, %v757, 920167782
      %v771 = vsel %vm763, %v754, %v770
      %v772 = vsel %vm762, %v769, %v771
      %v773 = vsel %vm761, %v751, %v754
      %v774 = vsel %vm764, %v760, 1326507024
      %v775 = vsel %vm763, %v757, %v774
      %v776 = vsel %vm762, %v773, %v775
      %v777 = vshll.u32 %v737, 8
      %v778 = vmul.u32.u64.compose %v777, %v776
      %v779 = vextract.low.u32 %v778
      %v780 = vextract.high.u32 %v778
      %v781 = vmul.u32.u64.compose %v777, %v772
      %v782 = vextract.low.u32 %v781
      %v783 = vextract.high.u32 %v781
      %v784 = vmul.u32 %v777, %v768
      %v785 = vadd.s32 %v780, %v782
      %vm786 = vc.u32 %v780, %v782
      %v787 = vadd.s32 %v783, 1
      %v788 = vsel %vm786, %v787, %v783
      %v789 = vadd.s32 %v784, %v788
      %v790 = vadd.s32 %v789, 536870912
      %v791 = vshrl.u32 %v790, 30
      %v792 = vshll.u32 %v791, 30
      %v793 = vsub.s32 %v789, %v792
      %vm794 = vcmp.lt.s32.totalorder %v793, 0
      %v795 = vsub.s32 0, %v793
      %v796 = vsel %vm794, %v795, %v793
      %v797 = vclz %v796
      %v798 = vsub.s32 %v797, 2
      %vm799 = vcmp.gt.s32.totalorder 0, %v798
      %v800 = vsel %vm799, 0, %v798
      %v801 = vsub.s32 32, %v800
      %v802 = vshll.u32 %v793, %v800
      %v803 = vshrl.u32 %v785, %v801
      %v804 = vor.u32 %v802, %v803
      %v805 = vsub.s32 4294967266, %v800
      %v806 = vadd.s32 %v805, 127
      %v807 = vshll.u32 %v806, 23
      %v808 = vor.u32 4788187, %v807
      %v809 = vand.u32 2147483647, %v808
      %v811 = vcvt.s32.f32 %v804
      %v812 = vmul.f32 %v811, %v809
      %v813 = vxor.u32 %v812, 2147483648
      %v814 = vsel %vm731, %v813, %v812
      %v815 = vsub.s32 4, %v791
      %v816 = vsel %vm731, %v815, %v791
      %v817 = vsel %vm730, %v610, %v814
      %v818 = vsel %vm730, 0, %v816
      %v819 = vcosq.f32.pop %v817
      %v820 = vsinq.f32.pop %v817
      %vm821 = vweird.f32 %v610
      %v822 = vadd.s32 %v818, 3
      %v823 = vand.u32 %v822, 3
      %vm824 = vcmp.lt.s32.totalorder %v823, 2
      %vm825 = vcmp.eq.s32.totalorder %v823, 0
      %v826 = vxor.u32 %v820, 2147483648
      %v827 = vsel %vm825, %v819, %v826
      %vm828 = vcmp.eq.s32.totalorder %v823, 2
      %v829 = vxor.u32 %v819, 2147483648
      %v830 = vsel %vm828, %v829, %v820
      %v831 = vsel %vm824, %v827, %v830
      %v832 = vsel %vm821, nan, %v831
      %v833 = vand.u32 2147483647, %v611
      %vm834 = vcmp.le.f32.partialorder %v833, 0.7853982
      %vm835 = vcmp.lt.s32.totalorder %v611, 0
      %v836 = vand.u32 %v611, 2139095040
      %v837 = vshrl.u32 %v836, 23
      %v838 = vsub.s32 %v837, 127
      %v839 = vand.u32 2147483647, %v611
      %v840 = vand.u32 %v839, 8388607
      %v841 = vor.u32 %v840, 8388608
      %v842 = vsub.s32 0, %v841
      %v843 = vadd.s32 %v838, 1
      %vm844 = vcmp.gt.s32.totalorder %v843, 0
      %v845 = vsel %vm844, %v843, 0
      %v846 = vshrl.u32 %v845, 5
      %v847 = vand.u32 %v845, 31
      %v848 = vsub.s32 32, %v847
      %v849 = vshrl.u32 683565275, %v848
      %v850 = vshll.u32 683565275, %v847
      %v851 = vshrl.u32 2475754826, %v848
      %v852 = vor.u32 %v850, %v851
      %v853 = vshll.u32 2475754826, %v847
      %v854 = vshrl.u32 2131351028, %v848
      %v855 = vor.u32 %v853, %v854
      %v856 = vshll.u32 2131351028, %v847
      %v857 = vshrl.u32 2102212464, %v848
      %v858 = vor.u32 %v856, %v857
      %v859 = vshll.u32 2102212464, %v847
      %v860 = vshrl.u32 920167782, %v848
      %v861 = vor.u32 %v859, %v860
      %v862 = vshll.u32 920167782, %v847
      %v863 = vshrl.u32 1326507024, %v848
      %v864 = vor.u32 %v862, %v863
      %vm865 = vcmp.lt.s32.totalorder %v846, 1
      %vm866 = vcmp.lt.s32.totalorder %v846, 2
      %vm867 = vcmp.lt.s32.totalorder %v846, 3
      %vm868 = vcmp.lt.s32.totalorder %v846, 4
      %v869 = vsel %vm865, %v849, %v852
      %v870 = vsel %vm868, %v858, 2102212464
      %v871 = vsel %vm867, %v855, %v870
      %v872 = vsel %vm866, %v869, %v871
      %v873 = vsel %vm865, %v852, %v855
      %v874 = vsel %vm868, %v861, 920167782
      %v875 = vsel %vm867, %v858, %v874
      %v876 = vsel %vm866, %v873, %v875
      %v877 = vsel %vm865, %v855, %v858
      %v878 = vsel %vm868, %v864, 1326507024
      %v879 = vsel %vm867, %v861, %v878
      %v880 = vsel %vm866, %v877, %v879
      %v881 = vshll.u32 %v841, 8
      %v882 = vmul.u32.u64.compose %v881, %v880
      %v883 = vextract.low.u32 %v882
      %v884 = vextract.high.u32 %v882
      %v885 = vmul.u32.u64.compose %v881, %v876
      %v886 = vextract.low.u32 %v885
      %v887 = vextract.high.u32 %v885
      %v888 = vmul.u32 %v881, %v872
      %v889 = vadd.s32 %v884, %v886
      %vm890 = vc.u32 %v884, %v886
      %v891 = vadd.s32 %v887, 1
      %v892 = vsel %vm890, %v891, %v887
      %v893 = vadd.s32 %v888, %v892
      %v894 = vadd.s32 %v893, 536870912
      %v895 = vshrl.u32 %v894, 30
      %v896 = vshll.u32 %v895, 30
      %v897 = vsub.s32 %v893, %v896
      %vm898 = vcmp.lt.s32.totalorder %v897, 0
      %v899 = vsub.s32 0, %v897
      %v900 = vsel %vm898, %v899, %v897
      %v901 = vclz %v900
      %v902 = vsub.s32 %v901, 2
      %vm903 = vcmp.gt.s32.totalorder 0, %v902
      %v904 = vsel %vm903, 0, %v902
      %v905 = vsub.s32 32, %v904
      %v906 = vshll.u32 %v897, %v904
      %v907 = vshrl.u32 %v889, %v905
      %v908 = vor.u32 %v906, %v907
      %v909 = vsub.s32 4294967266, %v904
      %v910 = vadd.s32 %v909, 127
      %v911 = vshll.u32 %v910, 23
      %v912 = vor.u32 4788187, %v911
      %v913 = vand.u32 2147483647, %v912
      %v915 = vcvt.s32.f32 %v908
      %v916 = vmul.f32 %v915, %v913
      %v917 = vxor.u32 %v916, 2147483648
      %v918 = vsel %vm835, %v917, %v916
      %v919 = vsub.s32 4, %v895
      %v920 = vsel %vm835, %v919, %v895
      %v921 = vsel %vm834, %v611, %v918
      %v922 = vsel %vm834, 0, %v920
      %v923 = vcosq.f32.pop %v921
      %v924 = vsinq.f32.pop %v921
      %vm925 = vweird.f32 %v611
      %v926 = vadd.s32 %v922, 3
      %v927 = vand.u32 %v926, 3
      %vm928 = vcmp.lt.s32.totalorder %v927, 2
      %vm929 = vcmp.eq.s32.totalorder %v927, 0
      %v930 = vxor.u32 %v924, 2147483648
      %v931 = vsel %vm929, %v923, %v930
      %vm932 = vcmp.eq.s32.totalorder %v927, 2
      %v933 = vxor.u32 %v923, 2147483648
      %v934 = vsel %vm932, %v933, %v924
      %v935 = vsel %vm928, %v931, %v934
      %v936 = vsel %vm925, nan, %v935
      %v937 = vand.u32 2147483647, %v612
      %vm938 = vcmp.le.f32.partialorder %v937, 0.7853982
      %vm939 = vcmp.lt.s32.totalorder %v612, 0
      %v940 = vand.u32 %v612, 2139095040
      %v941 = vshrl.u32 %v940, 23
      %v942 = vsub.s32 %v941, 127
      %v943 = vand.u32 2147483647, %v612
      %v944 = vand.u32 %v943, 8388607
      %v945 = vor.u32 %v944, 8388608
      %v946 = vsub.s32 0, %v945
      %v947 = vadd.s32 %v942, 1
      %vm948 = vcmp.gt.s32.totalorder %v947, 0
      %v949 = vsel %vm948, %v947, 0
      %v950 = vshrl.u32 %v949, 5
      %v951 = vand.u32 %v949, 31
      %v952 = vsub.s32 32, %v951
      %v953 = vshrl.u32 683565275, %v952
      %v954 = vshll.u32 683565275, %v951
      %v955 = vshrl.u32 2475754826, %v952
      %v956 = vor.u32 %v954, %v955
      %v957 = vshll.u32 2475754826, %v951
      %v958 = vshrl.u32 2131351028, %v952
      %v959 = vor.u32 %v957, %v958
      %v960 = vshll.u32 2131351028, %v951
      %v961 = vshrl.u32 2102212464, %v952
      %v962 = vor.u32 %v960, %v961
      %v963 = vshll.u32 2102212464, %v951
      %v964 = vshrl.u32 920167782, %v952
      %v965 = vor.u32 %v963, %v964
      %v966 = vshll.u32 920167782, %v951
      %v967 = vshrl.u32 1326507024, %v952
      %v968 = vor.u32 %v966, %v967
      %vm969 = vcmp.lt.s32.totalorder %v950, 1
      %vm970 = vcmp.lt.s32.totalorder %v950, 2
      %vm971 = vcmp.lt.s32.totalorder %v950, 3
      %vm972 = vcmp.lt.s32.totalorder %v950, 4
      %v973 = vsel %vm969, %v953, %v956
      %v974 = vsel %vm972, %v962, 2102212464
      %v975 = vsel %vm971, %v959, %v974
      %v976 = vsel %vm970, %v973, %v975
      %v977 = vsel %vm969, %v956, %v959
      %v978 = vsel %vm972, %v965, 920167782
      %v979 = vsel %vm971, %v962, %v978
      %v980 = vsel %vm970, %v977, %v979
      %v981 = vsel %vm969, %v959, %v962
      %v982 = vsel %vm972, %v968, 1326507024
      %v983 = vsel %vm971, %v965, %v982
      %v984 = vsel %vm970, %v981, %v983
      %v985 = vshll.u32 %v945, 8
      %v986 = vmul.u32.u64.compose %v985, %v984
      %v987 = vextract.low.u32 %v986
      %v988 = vextract.high.u32 %v986
      %v989 = vmul.u32.u64.compose %v985, %v980
      %v990 = vextract.low.u32 %v989
      %v991 = vextract.high.u32 %v989
      %v992 = vmul.u32 %v985, %v976
      %v993 = vadd.s32 %v988, %v990
      %vm994 = vc.u32 %v988, %v990
      %v995 = vadd.s32 %v991, 1
      %v996 = vsel %vm994, %v995, %v991
      %v997 = vadd.s32 %v992, %v996
      %v998 = vadd.s32 %v997, 536870912
      %v999 = vshrl.u32 %v998, 30
      %v1000 = vshll.u32 %v999, 30
      %v1001 = vsub.s32 %v997, %v1000
      %vm1002 = vcmp.lt.s32.totalorder %v1001, 0
      %v1003 = vsub.s32 0, %v1001
      %v1004 = vsel %vm1002, %v1003, %v1001
      %v1005 = vclz %v1004
      %v1006 = vsub.s32 %v1005, 2
      %vm1007 = vcmp.gt.s32.totalorder 0, %v1006
      %v1008 = vsel %vm1007, 0, %v1006
      %v1009 = vsub.s32 32, %v1008
      %v1010 = vshll.u32 %v1001, %v1008
      %v1011 = vshrl.u32 %v993, %v1009
      %v1012 = vor.u32 %v1010, %v1011
      %v1013 = vsub.s32 4294967266, %v1008
      %v1014 = vadd.s32 %v1013, 127
      %v1015 = vshll.u32 %v1014, 23
      %v1016 = vor.u32 4788187, %v1015
      %v1017 = vand.u32 2147483647, %v1016
      %v1019 = vcvt.s32.f32 %v1012
      %v1020 = vmul.f32 %v1019, %v1017
      %v1021 = vxor.u32 %v1020, 2147483648
      %v1022 = vsel %vm939, %v1021, %v1020
      %v1023 = vsub.s32 4, %v999
      %v1024 = vsel %vm939, %v1023, %v999
      %v1025 = vsel %vm938, %v612, %v1022
      %v1026 = vsel %vm938, 0, %v1024
      %v1027 = vcosq.f32.pop %v1025
      %v1028 = vsinq.f32.pop %v1025
      %vm1029 = vweird.f32 %v612
      %v1030 = vadd.s32 %v1026, 3
      %v1031 = vand.u32 %v1030, 3
      %vm1032 = vcmp.lt.s32.totalorder %v1031, 2
      %vm1033 = vcmp.eq.s32.totalorder %v1031, 0
      %v1034 = vxor.u32 %v1028, 2147483648
      %v1035 = vsel %vm1033, %v1027, %v1034
      %vm1036 = vcmp.eq.s32.totalorder %v1031, 2
      %v1037 = vxor.u32 %v1027, 2147483648
      %v1038 = vsel %vm1036, %v1037, %v1028
      %v1039 = vsel %vm1032, %v1035, %v1038
      %v1040 = vsel %vm1029, nan, %v1039
      %v1041 = vand.u32 2147483647, %v613
      %vm1042 = vcmp.le.f32.partialorder %v1041, 0.7853982
      %vm1043 = vcmp.lt.s32.totalorder %v613, 0
      %v1044 = vand.u32 %v613, 2139095040
      %v1045 = vshrl.u32 %v1044, 23
      %v1046 = vsub.s32 %v1045, 127
      %v1047 = vand.u32 2147483647, %v613
      %v1048 = vand.u32 %v1047, 8388607
      %v1049 = vor.u32 %v1048, 8388608
      %v1050 = vsub.s32 0, %v1049
      %v1051 = vadd.s32 %v1046, 1
      %vm1052 = vcmp.gt.s32.totalorder %v1051, 0
      %v1053 = vsel %vm1052, %v1051, 0
      %v1054 = vshrl.u32 %v1053, 5
      %v1055 = vand.u32 %v1053, 31
      %v1056 = vsub.s32 32, %v1055
      %v1057 = vshrl.u32 683565275, %v1056
      %v1058 = vshll.u32 683565275, %v1055
      %v1059 = vshrl.u32 2475754826, %v1056
      %v1060 = vor.u32 %v1058, %v1059
      %v1061 = vshll.u32 2475754826, %v1055
      %v1062 = vshrl.u32 2131351028, %v1056
      %v1063 = vor.u32 %v1061, %v1062
      %v1064 = vshll.u32 2131351028, %v1055
      %v1065 = vshrl.u32 2102212464, %v1056
      %v1066 = vor.u32 %v1064, %v1065
      %v1067 = vshll.u32 2102212464, %v1055
      %v1068 = vshrl.u32 920167782, %v1056
      %v1069 = vor.u32 %v1067, %v1068
      %v1070 = vshll.u32 920167782, %v1055
      %v1071 = vshrl.u32 1326507024, %v1056
      %v1072 = vor.u32 %v1070, %v1071
      %vm1073 = vcmp.lt.s32.totalorder %v1054, 1
      %vm1074 = vcmp.lt.s32.totalorder %v1054, 2
      %vm1075 = vcmp.lt.s32.totalorder %v1054, 3
      %vm1076 = vcmp.lt.s32.totalorder %v1054, 4
      %v1077 = vsel %vm1073, %v1057, %v1060
      %v1078 = vsel %vm1076, %v1066, 2102212464
      %v1079 = vsel %vm1075, %v1063, %v1078
      %v1080 = vsel %vm1074, %v1077, %v1079
      %v1081 = vsel %vm1073, %v1060, %v1063
      %v1082 = vsel %vm1076, %v1069, 920167782
      %v1083 = vsel %vm1075, %v1066, %v1082
      %v1084 = vsel %vm1074, %v1081, %v1083
      %v1085 = vsel %vm1073, %v1063, %v1066
      %v1086 = vsel %vm1076, %v1072, 1326507024
      %v1087 = vsel %vm1075, %v1069, %v1086
      %v1088 = vsel %vm1074, %v1085, %v1087
      %v1089 = vshll.u32 %v1049, 8
      %v1090 = vmul.u32.u64.compose %v1089, %v1088
      %v1091 = vextract.low.u32 %v1090
      %v1092 = vextract.high.u32 %v1090
      %v1093 = vmul.u32.u64.compose %v1089, %v1084
      %v1094 = vextract.low.u32 %v1093
      %v1095 = vextract.high.u32 %v1093
      %v1096 = vmul.u32 %v1089, %v1080
      %v1097 = vadd.s32 %v1092, %v1094
      %vm1098 = vc.u32 %v1092, %v1094
      %v1099 = vadd.s32 %v1095, 1
      %v1100 = vsel %vm1098, %v1099, %v1095
      %v1101 = vadd.s32 %v1096, %v1100
      %v1102 = vadd.s32 %v1101, 536870912
      %v1103 = vshrl.u32 %v1102, 30
      %v1104 = vshll.u32 %v1103, 30
      %v1105 = vsub.s32 %v1101, %v1104
      %vm1106 = vcmp.lt.s32.totalorder %v1105, 0
      %v1107 = vsub.s32 0, %v1105
      %v1108 = vsel %vm1106, %v1107, %v1105
      %v1109 = vclz %v1108
      %v1110 = vsub.s32 %v1109, 2
      %vm1111 = vcmp.gt.s32.totalorder 0, %v1110
      %v1112 = vsel %vm1111, 0, %v1110
      %v1113 = vsub.s32 32, %v1112
      %v1114 = vshll.u32 %v1105, %v1112
      %v1115 = vshrl.u32 %v1097, %v1113
      %v1116 = vor.u32 %v1114, %v1115
      %v1117 = vsub.s32 4294967266, %v1112
      %v1118 = vadd.s32 %v1117, 127
      %v1119 = vshll.u32 %v1118, 23
      %v1120 = vor.u32 4788187, %v1119
      %v1121 = vand.u32 2147483647, %v1120
      %v1123 = vcvt.s32.f32 %v1116
      %v1124 = vmul.f32 %v1123, %v1121
      %v1125 = vxor.u32 %v1124, 2147483648
      %v1126 = vsel %vm1043, %v1125, %v1124
      %v1127 = vsub.s32 4, %v1103
      %v1128 = vsel %vm1043, %v1127, %v1103
      %v1129 = vsel %vm1042, %v613, %v1126
      %v1130 = vsel %vm1042, 0, %v1128
      %v1131 = vcosq.f32.pop %v1129
      %v1132 = vsinq.f32.pop %v1129
      %vm1133 = vweird.f32 %v613
      %v1134 = vadd.s32 %v1130, 3
      %v1135 = vand.u32 %v1134, 3
      %vm1136 = vcmp.lt.s32.totalorder %v1135, 2
      %vm1137 = vcmp.eq.s32.totalorder %v1135, 0
      %v1138 = vxor.u32 %v1132, 2147483648
      %v1139 = vsel %vm1137, %v1131, %v1138
      %vm1140 = vcmp.eq.s32.totalorder %v1135, 2
      %v1141 = vxor.u32 %v1131, 2147483648
      %v1142 = vsel %vm1140, %v1141, %v1132
      %v1143 = vsel %vm1136, %v1139, %v1142
      %v1144 = vsel %vm1133, nan, %v1143
      %v1145 = vand.u32 2147483647, %v614
      %vm1146 = vcmp.le.f32.partialorder %v1145, 0.7853982
      %vm1147 = vcmp.lt.s32.totalorder %v614, 0
      %v1148 = vand.u32 %v614, 2139095040
      %v1149 = vshrl.u32 %v1148, 23
      %v1150 = vsub.s32 %v1149, 127
      %v1151 = vand.u32 2147483647, %v614
      %v1152 = vand.u32 %v1151, 8388607
      %v1153 = vor.u32 %v1152, 8388608
      %v1154 = vsub.s32 0, %v1153
      %v1155 = vadd.s32 %v1150, 1
      %vm1156 = vcmp.gt.s32.totalorder %v1155, 0
      %v1157 = vsel %vm1156, %v1155, 0
      %v1158 = vshrl.u32 %v1157, 5
      %v1159 = vand.u32 %v1157, 31
      %v1160 = vsub.s32 32, %v1159
      %v1161 = vshrl.u32 683565275, %v1160
      %v1162 = vshll.u32 683565275, %v1159
      %v1163 = vshrl.u32 2475754826, %v1160
      %v1164 = vor.u32 %v1162, %v1163
      %v1165 = vshll.u32 2475754826, %v1159
      %v1166 = vshrl.u32 2131351028, %v1160
      %v1167 = vor.u32 %v1165, %v1166
      %v1168 = vshll.u32 2131351028, %v1159
      %v1169 = vshrl.u32 2102212464, %v1160
      %v1170 = vor.u32 %v1168, %v1169
      %v1171 = vshll.u32 2102212464, %v1159
      %v1172 = vshrl.u32 920167782, %v1160
      %v1173 = vor.u32 %v1171, %v1172
      %v1174 = vshll.u32 920167782, %v1159
      %v1175 = vshrl.u32 1326507024, %v1160
      %v1176 = vor.u32 %v1174, %v1175
      %vm1177 = vcmp.lt.s32.totalorder %v1158, 1
      %vm1178 = vcmp.lt.s32.totalorder %v1158, 2
      %vm1179 = vcmp.lt.s32.totalorder %v1158, 3
      %vm1180 = vcmp.lt.s32.totalorder %v1158, 4
      %v1181 = vsel %vm1177, %v1161, %v1164
      %v1182 = vsel %vm1180, %v1170, 2102212464
      %v1183 = vsel %vm1179, %v1167, %v1182
      %v1184 = vsel %vm1178, %v1181, %v1183
      %v1185 = vsel %vm1177, %v1164, %v1167
      %v1186 = vsel %vm1180, %v1173, 920167782
      %v1187 = vsel %vm1179, %v1170, %v1186
      %v1188 = vsel %vm1178, %v1185, %v1187
      %v1189 = vsel %vm1177, %v1167, %v1170
      %v1190 = vsel %vm1180, %v1176, 1326507024
      %v1191 = vsel %vm1179, %v1173, %v1190
      %v1192 = vsel %vm1178, %v1189, %v1191
      %v1193 = vshll.u32 %v1153, 8
      %v1194 = vmul.u32.u64.compose %v1193, %v1192
      %v1195 = vextract.low.u32 %v1194
      %v1196 = vextract.high.u32 %v1194
      %v1197 = vmul.u32.u64.compose %v1193, %v1188
      %v1198 = vextract.low.u32 %v1197
      %v1199 = vextract.high.u32 %v1197
      %v1200 = vmul.u32 %v1193, %v1184
      %v1201 = vadd.s32 %v1196, %v1198
      %vm1202 = vc.u32 %v1196, %v1198
      %v1203 = vadd.s32 %v1199, 1
      %v1204 = vsel %vm1202, %v1203, %v1199
      %v1205 = vadd.s32 %v1200, %v1204
      %v1206 = vadd.s32 %v1205, 536870912
      %v1207 = vshrl.u32 %v1206, 30
      %v1208 = vshll.u32 %v1207, 30
      %v1209 = vsub.s32 %v1205, %v1208
      %vm1210 = vcmp.lt.s32.totalorder %v1209, 0
      %v1211 = vsub.s32 0, %v1209
      %v1212 = vsel %vm1210, %v1211, %v1209
      %v1213 = vclz %v1212
      %v1214 = vsub.s32 %v1213, 2
      %vm1215 = vcmp.gt.s32.totalorder 0, %v1214
      %v1216 = vsel %vm1215, 0, %v1214
      %v1217 = vsub.s32 32, %v1216
      %v1218 = vshll.u32 %v1209, %v1216
      %v1219 = vshrl.u32 %v1201, %v1217
      %v1220 = vor.u32 %v1218, %v1219
      %v1221 = vsub.s32 4294967266, %v1216
      %v1222 = vadd.s32 %v1221, 127
      %v1223 = vshll.u32 %v1222, 23
      %v1224 = vor.u32 4788187, %v1223
      %v1225 = vand.u32 2147483647, %v1224
      %v1227 = vcvt.s32.f32 %v1220
      %v1228 = vmul.f32 %v1227, %v1225
      %v1229 = vxor.u32 %v1228, 2147483648
      %v1230 = vsel %vm1147, %v1229, %v1228
      %v1231 = vsub.s32 4, %v1207
      %v1232 = vsel %vm1147, %v1231, %v1207
      %v1233 = vsel %vm1146, %v614, %v1230
      %v1234 = vsel %vm1146, 0, %v1232
      %v1235 = vcosq.f32.pop %v1233
      %v1236 = vsinq.f32.pop %v1233
      %vm1237 = vweird.f32 %v614
      %v1238 = vadd.s32 %v1234, 3
      %v1239 = vand.u32 %v1238, 3
      %vm1240 = vcmp.lt.s32.totalorder %v1239, 2
      %vm1241 = vcmp.eq.s32.totalorder %v1239, 0
      %v1242 = vxor.u32 %v1236, 2147483648
      %v1243 = vsel %vm1241, %v1235, %v1242
      %vm1244 = vcmp.eq.s32.totalorder %v1239, 2
      %v1245 = vxor.u32 %v1235, 2147483648
      %v1246 = vsel %vm1244, %v1245, %v1236
      %v1247 = vsel %vm1240, %v1243, %v1246
      %v1248 = vsel %vm1237, nan, %v1247
      %v1249 = vand.u32 2147483647, %v615
      %vm1250 = vcmp.le.f32.partialorder %v1249, 0.7853982
      %vm1251 = vcmp.lt.s32.totalorder %v615, 0
      %v1252 = vand.u32 %v615, 2139095040
      %v1253 = vshrl.u32 %v1252, 23
      %v1254 = vsub.s32 %v1253, 127
      %v1255 = vand.u32 2147483647, %v615
      %v1256 = vand.u32 %v1255, 8388607
      %v1257 = vor.u32 %v1256, 8388608
      %v1258 = vsub.s32 0, %v1257
      %v1259 = vadd.s32 %v1254, 1
      %vm1260 = vcmp.gt.s32.totalorder %v1259, 0
      %v1261 = vsel %vm1260, %v1259, 0
      %v1262 = vshrl.u32 %v1261, 5
      %v1263 = vand.u32 %v1261, 31
      %v1264 = vsub.s32 32, %v1263
      %v1265 = vshrl.u32 683565275, %v1264
      %v1266 = vshll.u32 683565275, %v1263
      %v1267 = vshrl.u32 2475754826, %v1264
      %v1268 = vor.u32 %v1266, %v1267
      %v1269 = vshll.u32 2475754826, %v1263
      %v1270 = vshrl.u32 2131351028, %v1264
      %v1271 = vor.u32 %v1269, %v1270
      %v1272 = vshll.u32 2131351028, %v1263
      %v1273 = vshrl.u32 2102212464, %v1264
      %v1274 = vor.u32 %v1272, %v1273
      %v1275 = vshll.u32 2102212464, %v1263
      %v1276 = vshrl.u32 920167782, %v1264
      %v1277 = vor.u32 %v1275, %v1276
      %v1278 = vshll.u32 920167782, %v1263
      %v1279 = vshrl.u32 1326507024, %v1264
      %v1280 = vor.u32 %v1278, %v1279
      %vm1281 = vcmp.lt.s32.totalorder %v1262, 1
      %vm1282 = vcmp.lt.s32.totalorder %v1262, 2
      %vm1283 = vcmp.lt.s32.totalorder %v1262, 3
      %vm1284 = vcmp.lt.s32.totalorder %v1262, 4
      %v1285 = vsel %vm1281, %v1265, %v1268
      %v1286 = vsel %vm1284, %v1274, 2102212464
      %v1287 = vsel %vm1283, %v1271, %v1286
      %v1288 = vsel %vm1282, %v1285, %v1287
      %v1289 = vsel %vm1281, %v1268, %v1271
      %v1290 = vsel %vm1284, %v1277, 920167782
      %v1291 = vsel %vm1283, %v1274, %v1290
      %v1292 = vsel %vm1282, %v1289, %v1291
      %v1293 = vsel %vm1281, %v1271, %v1274
      %v1294 = vsel %vm1284, %v1280, 1326507024
      %v1295 = vsel %vm1283, %v1277, %v1294
      %v1296 = vsel %vm1282, %v1293, %v1295
      %v1297 = vshll.u32 %v1257, 8
      %v1298 = vmul.u32.u64.compose %v1297, %v1296
      %v1299 = vextract.low.u32 %v1298
      %v1300 = vextract.high.u32 %v1298
      %v1301 = vmul.u32.u64.compose %v1297, %v1292
      %v1302 = vextract.low.u32 %v1301
      %v1303 = vextract.high.u32 %v1301
      %v1304 = vmul.u32 %v1297, %v1288
      %v1305 = vadd.s32 %v1300, %v1302
      %vm1306 = vc.u32 %v1300, %v1302
      %v1307 = vadd.s32 %v1303, 1
      %v1308 = vsel %vm1306, %v1307, %v1303
      %v1309 = vadd.s32 %v1304, %v1308
      %v1310 = vadd.s32 %v1309, 536870912
      %v1311 = vshrl.u32 %v1310, 30
      %v1312 = vshll.u32 %v1311, 30
      %v1313 = vsub.s32 %v1309, %v1312
      %vm1314 = vcmp.lt.s32.totalorder %v1313, 0
      %v1315 = vsub.s32 0, %v1313
      %v1316 = vsel %vm1314, %v1315, %v1313
      %v1317 = vclz %v1316
      %v1318 = vsub.s32 %v1317, 2
      %vm1319 = vcmp.gt.s32.totalorder 0, %v1318
      %v1320 = vsel %vm1319, 0, %v1318
      %v1321 = vsub.s32 32, %v1320
      %v1322 = vshll.u32 %v1313, %v1320
      %v1323 = vshrl.u32 %v1305, %v1321
      %v1324 = vor.u32 %v1322, %v1323
      %v1325 = vsub.s32 4294967266, %v1320
      %v1326 = vadd.s32 %v1325, 127
      %v1327 = vshll.u32 %v1326, 23
      %v1328 = vor.u32 4788187, %v1327
      %v1329 = vand.u32 2147483647, %v1328
      %v1331 = vcvt.s32.f32 %v1324
      %v1332 = vmul.f32 %v1331, %v1329
      %v1333 = vxor.u32 %v1332, 2147483648
      %v1334 = vsel %vm1251, %v1333, %v1332
      %v1335 = vsub.s32 4, %v1311
      %v1336 = vsel %vm1251, %v1335, %v1311
      %v1337 = vsel %vm1250, %v615, %v1334
      %v1338 = vsel %vm1250, 0, %v1336
      %v1339 = vcosq.f32.pop %v1337
      %v1340 = vsinq.f32.pop %v1337
      %vm1341 = vweird.f32 %v615
      %v1342 = vadd.s32 %v1338, 3
      %v1343 = vand.u32 %v1342, 3
      %vm1344 = vcmp.lt.s32.totalorder %v1343, 2
      %vm1345 = vcmp.eq.s32.totalorder %v1343, 0
      %v1346 = vxor.u32 %v1340, 2147483648
      %v1347 = vsel %vm1345, %v1339, %v1346
      %vm1348 = vcmp.eq.s32.totalorder %v1343, 2
      %v1349 = vxor.u32 %v1339, 2147483648
      %v1350 = vsel %vm1348, %v1349, %v1340
      %v1351 = vsel %vm1344, %v1347, %v1350
      %v1352 = vsel %vm1341, nan, %v1351
      %v1353 = vand.u32 2147483647, %v616
      %vm1354 = vcmp.le.f32.partialorder %v1353, 0.7853982
      %vm1355 = vcmp.lt.s32.totalorder %v616, 0
      %v1356 = vand.u32 %v616, 2139095040
      %v1357 = vshrl.u32 %v1356, 23
      %v1358 = vsub.s32 %v1357, 127
      %v1359 = vand.u32 2147483647, %v616
      %v1360 = vand.u32 %v1359, 8388607
      %v1361 = vor.u32 %v1360, 8388608
      %v1362 = vsub.s32 0, %v1361
      %v1363 = vadd.s32 %v1358, 1
      %vm1364 = vcmp.gt.s32.totalorder %v1363, 0
      %v1365 = vsel %vm1364, %v1363, 0
      %v1366 = vshrl.u32 %v1365, 5
      %v1367 = vand.u32 %v1365, 31
      %v1368 = vsub.s32 32, %v1367
      %v1369 = vshrl.u32 683565275, %v1368
      %v1370 = vshll.u32 683565275, %v1367
      %v1371 = vshrl.u32 2475754826, %v1368
      %v1372 = vor.u32 %v1370, %v1371
      %v1373 = vshll.u32 2475754826, %v1367
      %v1374 = vshrl.u32 2131351028, %v1368
      %v1375 = vor.u32 %v1373, %v1374
      %v1376 = vshll.u32 2131351028, %v1367
      %v1377 = vshrl.u32 2102212464, %v1368
      %v1378 = vor.u32 %v1376, %v1377
      %v1379 = vshll.u32 2102212464, %v1367
      %v1380 = vshrl.u32 920167782, %v1368
      %v1381 = vor.u32 %v1379, %v1380
      %v1382 = vshll.u32 920167782, %v1367
      %v1383 = vshrl.u32 1326507024, %v1368
      %v1384 = vor.u32 %v1382, %v1383
      %vm1385 = vcmp.lt.s32.totalorder %v1366, 1
      %vm1386 = vcmp.lt.s32.totalorder %v1366, 2
      %vm1387 = vcmp.lt.s32.totalorder %v1366, 3
      %vm1388 = vcmp.lt.s32.totalorder %v1366, 4
      %v1389 = vsel %vm1385, %v1369, %v1372
      %v1390 = vsel %vm1388, %v1378, 2102212464
      %v1391 = vsel %vm1387, %v1375, %v1390
      %v1392 = vsel %vm1386, %v1389, %v1391
      %v1393 = vsel %vm1385, %v1372, %v1375
      %v1394 = vsel %vm1388, %v1381, 920167782
      %v1395 = vsel %vm1387, %v1378, %v1394
      %v1396 = vsel %vm1386, %v1393, %v1395
      %v1397 = vsel %vm1385, %v1375, %v1378
      %v1398 = vsel %vm1388, %v1384, 1326507024
      %v1399 = vsel %vm1387, %v1381, %v1398
      %v1400 = vsel %vm1386, %v1397, %v1399
      %v1401 = vshll.u32 %v1361, 8
      %v1402 = vmul.u32.u64.compose %v1401, %v1400
      %v1403 = vextract.low.u32 %v1402
      %v1404 = vextract.high.u32 %v1402
      %v1405 = vmul.u32.u64.compose %v1401, %v1396
      %v1406 = vextract.low.u32 %v1405
      %v1407 = vextract.high.u32 %v1405
      %v1408 = vmul.u32 %v1401, %v1392
      %v1409 = vadd.s32 %v1404, %v1406
      %vm1410 = vc.u32 %v1404, %v1406
      %v1411 = vadd.s32 %v1407, 1
      %v1412 = vsel %vm1410, %v1411, %v1407
      %v1413 = vadd.s32 %v1408, %v1412
      %v1414 = vadd.s32 %v1413, 536870912
      %v1415 = vshrl.u32 %v1414, 30
      %v1416 = vshll.u32 %v1415, 30
      %v1417 = vsub.s32 %v1413, %v1416
      %vm1418 = vcmp.lt.s32.totalorder %v1417, 0
      %v1419 = vsub.s32 0, %v1417
      %v1420 = vsel %vm1418, %v1419, %v1417
      %v1421 = vclz %v1420
      %v1422 = vsub.s32 %v1421, 2
      %vm1423 = vcmp.gt.s32.totalorder 0, %v1422
      %v1424 = vsel %vm1423, 0, %v1422
      %v1425 = vsub.s32 32, %v1424
      %v1426 = vshll.u32 %v1417, %v1424
      %v1427 = vshrl.u32 %v1409, %v1425
      %v1428 = vor.u32 %v1426, %v1427
      %v1429 = vsub.s32 4294967266, %v1424
      %v1430 = vadd.s32 %v1429, 127
      %v1431 = vshll.u32 %v1430, 23
      %v1432 = vor.u32 4788187, %v1431
      %v1433 = vand.u32 2147483647, %v1432
      %v1435 = vcvt.s32.f32 %v1428
      %v1436 = vmul.f32 %v1435, %v1433
      %v1437 = vxor.u32 %v1436, 2147483648
      %v1438 = vsel %vm1355, %v1437, %v1436
      %v1439 = vsub.s32 4, %v1415
      %v1440 = vsel %vm1355, %v1439, %v1415
      %v1441 = vsel %vm1354, %v616, %v1438
      %v1442 = vsel %vm1354, 0, %v1440
      %v1443 = vcosq.f32.pop %v1441
      %v1444 = vsinq.f32.pop %v1441
      %vm1445 = vweird.f32 %v616
      %v1446 = vadd.s32 %v1442, 3
      %v1447 = vand.u32 %v1446, 3
      %vm1448 = vcmp.lt.s32.totalorder %v1447, 2
      %vm1449 = vcmp.eq.s32.totalorder %v1447, 0
      %v1450 = vxor.u32 %v1444, 2147483648
      %v1451 = vsel %vm1449, %v1443, %v1450
      %vm1452 = vcmp.eq.s32.totalorder %v1447, 2
      %v1453 = vxor.u32 %v1443, 2147483648
      %v1454 = vsel %vm1452, %v1453, %v1444
      %v1455 = vsel %vm1448, %v1451, %v1454
      %v1456 = vsel %vm1445, nan, %v1455
      %v1457 = vand.u32 2147483647, %v617
      %vm1458 = vcmp.le.f32.partialorder %v1457, 0.7853982
      %vm1459 = vcmp.lt.s32.totalorder %v617, 0
      %v1460 = vand.u32 %v617, 2139095040
      %v1461 = vshrl.u32 %v1460, 23
      %v1462 = vsub.s32 %v1461, 127
      %v1463 = vand.u32 2147483647, %v617
      %v1464 = vand.u32 %v1463, 8388607
      %v1465 = vor.u32 %v1464, 8388608
      %v1466 = vsub.s32 0, %v1465
      %v1467 = vadd.s32 %v1462, 1
      %vm1468 = vcmp.gt.s32.totalorder %v1467, 0
      %v1469 = vsel %vm1468, %v1467, 0
      %v1470 = vshrl.u32 %v1469, 5
      %v1471 = vand.u32 %v1469, 31
      %v1472 = vsub.s32 32, %v1471
      %v1473 = vshrl.u32 683565275, %v1472
      %v1474 = vshll.u32 683565275, %v1471
      %v1475 = vshrl.u32 2475754826, %v1472
      %v1476 = vor.u32 %v1474, %v1475
      %v1477 = vshll.u32 2475754826, %v1471
      %v1478 = vshrl.u32 2131351028, %v1472
      %v1479 = vor.u32 %v1477, %v1478
      %v1480 = vshll.u32 2131351028, %v1471
      %v1481 = vshrl.u32 2102212464, %v1472
      %v1482 = vor.u32 %v1480, %v1481
      %v1483 = vshll.u32 2102212464, %v1471
      %v1484 = vshrl.u32 920167782, %v1472
      %v1485 = vor.u32 %v1483, %v1484
      %v1486 = vshll.u32 920167782, %v1471
      %v1487 = vshrl.u32 1326507024, %v1472
      %v1488 = vor.u32 %v1486, %v1487
      %vm1489 = vcmp.lt.s32.totalorder %v1470, 1
      %vm1490 = vcmp.lt.s32.totalorder %v1470, 2
      %vm1491 = vcmp.lt.s32.totalorder %v1470, 3
      %vm1492 = vcmp.lt.s32.totalorder %v1470, 4
      %v1493 = vsel %vm1489, %v1473, %v1476
      %v1494 = vsel %vm1492, %v1482, 2102212464
      %v1495 = vsel %vm1491, %v1479, %v1494
      %v1496 = vsel %vm1490, %v1493, %v1495
      %v1497 = vsel %vm1489, %v1476, %v1479
      %v1498 = vsel %vm1492, %v1485, 920167782
      %v1499 = vsel %vm1491, %v1482, %v1498
      %v1500 = vsel %vm1490, %v1497, %v1499
      %v1501 = vsel %vm1489, %v1479, %v1482
      %v1502 = vsel %vm1492, %v1488, 1326507024
      %v1503 = vsel %vm1491, %v1485, %v1502
      %v1504 = vsel %vm1490, %v1501, %v1503
      %v1505 = vshll.u32 %v1465, 8
      %v1506 = vmul.u32.u64.compose %v1505, %v1504
      %v1507 = vextract.low.u32 %v1506
      %v1508 = vextract.high.u32 %v1506
      %v1509 = vmul.u32.u64.compose %v1505, %v1500
      %v1510 = vextract.low.u32 %v1509
      %v1511 = vextract.high.u32 %v1509
      %v1512 = vmul.u32 %v1505, %v1496
      %v1513 = vadd.s32 %v1508, %v1510
      %vm1514 = vc.u32 %v1508, %v1510
      %v1515 = vadd.s32 %v1511, 1
      %v1516 = vsel %vm1514, %v1515, %v1511
      %v1517 = vadd.s32 %v1512, %v1516
      %v1518 = vadd.s32 %v1517, 536870912
      %v1519 = vshrl.u32 %v1518, 30
      %v1520 = vshll.u32 %v1519, 30
      %v1521 = vsub.s32 %v1517, %v1520
      %vm1522 = vcmp.lt.s32.totalorder %v1521, 0
      %v1523 = vsub.s32 0, %v1521
      %v1524 = vsel %vm1522, %v1523, %v1521
      %v1525 = vclz %v1524
      %v1526 = vsub.s32 %v1525, 2
      %vm1527 = vcmp.gt.s32.totalorder 0, %v1526
      %v1528 = vsel %vm1527, 0, %v1526
      %v1529 = vsub.s32 32, %v1528
      %v1530 = vshll.u32 %v1521, %v1528
      %v1531 = vshrl.u32 %v1513, %v1529
      %v1532 = vor.u32 %v1530, %v1531
      %v1533 = vsub.s32 4294967266, %v1528
      %v1534 = vadd.s32 %v1533, 127
      %v1535 = vshll.u32 %v1534, 23
      %v1536 = vor.u32 4788187, %v1535
      %v1537 = vand.u32 2147483647, %v1536
      %v1539 = vcvt.s32.f32 %v1532
      %v1540 = vmul.f32 %v1539, %v1537
      %v1541 = vxor.u32 %v1540, 2147483648
      %v1542 = vsel %vm1459, %v1541, %v1540
      %v1543 = vsub.s32 4, %v1519
      %v1544 = vsel %vm1459, %v1543, %v1519
      %v1545 = vsel %vm1458, %v617, %v1542
      %v1546 = vsel %vm1458, 0, %v1544
      %v1547 = vcosq.f32.pop %v1545
      %v1548 = vsinq.f32.pop %v1545
      %vm1549 = vweird.f32 %v617
      %v1550 = vadd.s32 %v1546, 3
      %v1551 = vand.u32 %v1550, 3
      %vm1552 = vcmp.lt.s32.totalorder %v1551, 2
      %vm1553 = vcmp.eq.s32.totalorder %v1551, 0
      %v1554 = vxor.u32 %v1548, 2147483648
      %v1555 = vsel %vm1553, %v1547, %v1554
      %vm1556 = vcmp.eq.s32.totalorder %v1551, 2
      %v1557 = vxor.u32 %v1547, 2147483648
      %v1558 = vsel %vm1556, %v1557, %v1548
      %v1559 = vsel %vm1552, %v1555, %v1558
      %v1560 = vsel %vm1549, nan, %v1559
      %v1561 = vand.u32 2147483647, %v618
      %vm1562 = vcmp.le.f32.partialorder %v1561, 0.7853982
      %vm1563 = vcmp.lt.s32.totalorder %v618, 0
      %v1564 = vand.u32 %v618, 2139095040
      %v1565 = vshrl.u32 %v1564, 23
      %v1566 = vsub.s32 %v1565, 127
      %v1567 = vand.u32 2147483647, %v618
      %v1568 = vand.u32 %v1567, 8388607
      %v1569 = vor.u32 %v1568, 8388608
      %v1570 = vsub.s32 0, %v1569
      %v1571 = vadd.s32 %v1566, 1
      %vm1572 = vcmp.gt.s32.totalorder %v1571, 0
      %v1573 = vsel %vm1572, %v1571, 0
      %v1574 = vshrl.u32 %v1573, 5
      %v1575 = vand.u32 %v1573, 31
      %v1576 = vsub.s32 32, %v1575
      %v1577 = vshrl.u32 683565275, %v1576
      %v1578 = vshll.u32 683565275, %v1575
      %v1579 = vshrl.u32 2475754826, %v1576
      %v1580 = vor.u32 %v1578, %v1579
      %v1581 = vshll.u32 2475754826, %v1575
      %v1582 = vshrl.u32 2131351028, %v1576
      %v1583 = vor.u32 %v1581, %v1582
      %v1584 = vshll.u32 2131351028, %v1575
      %v1585 = vshrl.u32 2102212464, %v1576
      %v1586 = vor.u32 %v1584, %v1585
      %v1587 = vshll.u32 2102212464, %v1575
      %v1588 = vshrl.u32 920167782, %v1576
      %v1589 = vor.u32 %v1587, %v1588
      %v1590 = vshll.u32 920167782, %v1575
      %v1591 = vshrl.u32 1326507024, %v1576
      %v1592 = vor.u32 %v1590, %v1591
      %vm1593 = vcmp.lt.s32.totalorder %v1574, 1
      %vm1594 = vcmp.lt.s32.totalorder %v1574, 2
      %vm1595 = vcmp.lt.s32.totalorder %v1574, 3
      %vm1596 = vcmp.lt.s32.totalorder %v1574, 4
      %v1597 = vsel %vm1593, %v1577, %v1580
      %v1598 = vsel %vm1596, %v1586, 2102212464
      %v1599 = vsel %vm1595, %v1583, %v1598
      %v1600 = vsel %vm1594, %v1597, %v1599
      %v1601 = vsel %vm1593, %v1580, %v1583
      %v1602 = vsel %vm1596, %v1589, 920167782
      %v1603 = vsel %vm1595, %v1586, %v1602
      %v1604 = vsel %vm1594, %v1601, %v1603
      %v1605 = vsel %vm1593, %v1583, %v1586
      %v1606 = vsel %vm1596, %v1592, 1326507024
      %v1607 = vsel %vm1595, %v1589, %v1606
      %v1608 = vsel %vm1594, %v1605, %v1607
      %v1609 = vshll.u32 %v1569, 8
      %v1610 = vmul.u32.u64.compose %v1609, %v1608
      %v1611 = vextract.low.u32 %v1610
      %v1612 = vextract.high.u32 %v1610
      %v1613 = vmul.u32.u64.compose %v1609, %v1604
      %v1614 = vextract.low.u32 %v1613
      %v1615 = vextract.high.u32 %v1613
      %v1616 = vmul.u32 %v1609, %v1600
      %v1617 = vadd.s32 %v1612, %v1614
      %vm1618 = vc.u32 %v1612, %v1614
      %v1619 = vadd.s32 %v1615, 1
      %v1620 = vsel %vm1618, %v1619, %v1615
      %v1621 = vadd.s32 %v1616, %v1620
      %v1622 = vadd.s32 %v1621, 536870912
      %v1623 = vshrl.u32 %v1622, 30
      %v1624 = vshll.u32 %v1623, 30
      %v1625 = vsub.s32 %v1621, %v1624
      %vm1626 = vcmp.lt.s32.totalorder %v1625, 0
      %v1627 = vsub.s32 0, %v1625
      %v1628 = vsel %vm1626, %v1627, %v1625
      %v1629 = vclz %v1628
      %v1630 = vsub.s32 %v1629, 2
      %vm1631 = vcmp.gt.s32.totalorder 0, %v1630
      %v1632 = vsel %vm1631, 0, %v1630
      %v1633 = vsub.s32 32, %v1632
      %v1634 = vshll.u32 %v1625, %v1632
      %v1635 = vshrl.u32 %v1617, %v1633
      %v1636 = vor.u32 %v1634, %v1635
      %v1637 = vsub.s32 4294967266, %v1632
      %v1638 = vadd.s32 %v1637, 127
      %v1639 = vshll.u32 %v1638, 23
      %v1640 = vor.u32 4788187, %v1639
      %v1641 = vand.u32 2147483647, %v1640
      %v1643 = vcvt.s32.f32 %v1636
      %v1644 = vmul.f32 %v1643, %v1641
      %v1645 = vxor.u32 %v1644, 2147483648
      %v1646 = vsel %vm1563, %v1645, %v1644
      %v1647 = vsub.s32 4, %v1623
      %v1648 = vsel %vm1563, %v1647, %v1623
      %v1649 = vsel %vm1562, %v618, %v1646
      %v1650 = vsel %vm1562, 0, %v1648
      %v1651 = vcosq.f32.pop %v1649
      %v1652 = vsinq.f32.pop %v1649
      %vm1653 = vweird.f32 %v618
      %v1654 = vadd.s32 %v1650, 3
      %v1655 = vand.u32 %v1654, 3
      %vm1656 = vcmp.lt.s32.totalorder %v1655, 2
      %vm1657 = vcmp.eq.s32.totalorder %v1655, 0
      %v1658 = vxor.u32 %v1652, 2147483648
      %v1659 = vsel %vm1657, %v1651, %v1658
      %vm1660 = vcmp.eq.s32.totalorder %v1655, 2
      %v1661 = vxor.u32 %v1651, 2147483648
      %v1662 = vsel %vm1660, %v1661, %v1652
      %v1663 = vsel %vm1656, %v1659, %v1662
      %v1664 = vsel %vm1653, nan, %v1663
      %v1665 = vand.u32 2147483647, %v619
      %vm1666 = vcmp.le.f32.partialorder %v1665, 0.7853982
      %vm1667 = vcmp.lt.s32.totalorder %v619, 0
      %v1668 = vand.u32 %v619, 2139095040
      %v1669 = vshrl.u32 %v1668, 23
      %v1670 = vsub.s32 %v1669, 127
      %v1671 = vand.u32 2147483647, %v619
      %v1672 = vand.u32 %v1671, 8388607
      %v1673 = vor.u32 %v1672, 8388608
      %v1674 = vsub.s32 0, %v1673
      %v1675 = vadd.s32 %v1670, 1
      %vm1676 = vcmp.gt.s32.totalorder %v1675, 0
      %v1677 = vsel %vm1676, %v1675, 0
      %v1678 = vshrl.u32 %v1677, 5
      %v1679 = vand.u32 %v1677, 31
      %v1680 = vsub.s32 32, %v1679
      %v1681 = vshrl.u32 683565275, %v1680
      %v1682 = vshll.u32 683565275, %v1679
      %v1683 = vshrl.u32 2475754826, %v1680
      %v1684 = vor.u32 %v1682, %v1683
      %v1685 = vshll.u32 2475754826, %v1679
      %v1686 = vshrl.u32 2131351028, %v1680
      %v1687 = vor.u32 %v1685, %v1686
      %v1688 = vshll.u32 2131351028, %v1679
      %v1689 = vshrl.u32 2102212464, %v1680
      %v1690 = vor.u32 %v1688, %v1689
      %v1691 = vshll.u32 2102212464, %v1679
      %v1692 = vshrl.u32 920167782, %v1680
      %v1693 = vor.u32 %v1691, %v1692
      %v1694 = vshll.u32 920167782, %v1679
      %v1695 = vshrl.u32 1326507024, %v1680
      %v1696 = vor.u32 %v1694, %v1695
      %vm1697 = vcmp.lt.s32.totalorder %v1678, 1
      %vm1698 = vcmp.lt.s32.totalorder %v1678, 2
      %vm1699 = vcmp.lt.s32.totalorder %v1678, 3
      %vm1700 = vcmp.lt.s32.totalorder %v1678, 4
      %v1701 = vsel %vm1697, %v1681, %v1684
      %v1702 = vsel %vm1700, %v1690, 2102212464
      %v1703 = vsel %vm1699, %v1687, %v1702
      %v1704 = vsel %vm1698, %v1701, %v1703
      %v1705 = vsel %vm1697, %v1684, %v1687
      %v1706 = vsel %vm1700, %v1693, 920167782
      %v1707 = vsel %vm1699, %v1690, %v1706
      %v1708 = vsel %vm1698, %v1705, %v1707
      %v1709 = vsel %vm1697, %v1687, %v1690
      %v1710 = vsel %vm1700, %v1696, 1326507024
      %v1711 = vsel %vm1699, %v1693, %v1710
      %v1712 = vsel %vm1698, %v1709, %v1711
      %v1713 = vshll.u32 %v1673, 8
      %v1714 = vmul.u32.u64.compose %v1713, %v1712
      %v1715 = vextract.low.u32 %v1714
      %v1716 = vextract.high.u32 %v1714
      %v1717 = vmul.u32.u64.compose %v1713, %v1708
      %v1718 = vextract.low.u32 %v1717
      %v1719 = vextract.high.u32 %v1717
      %v1720 = vmul.u32 %v1713, %v1704
      %v1721 = vadd.s32 %v1716, %v1718
      %vm1722 = vc.u32 %v1716, %v1718
      %v1723 = vadd.s32 %v1719, 1
      %v1724 = vsel %vm1722, %v1723, %v1719
      %v1725 = vadd.s32 %v1720, %v1724
      %v1726 = vadd.s32 %v1725, 536870912
      %v1727 = vshrl.u32 %v1726, 30
      %v1728 = vshll.u32 %v1727, 30
      %v1729 = vsub.s32 %v1725, %v1728
      %vm1730 = vcmp.lt.s32.totalorder %v1729, 0
      %v1731 = vsub.s32 0, %v1729
      %v1732 = vsel %vm1730, %v1731, %v1729
      %v1733 = vclz %v1732
      %v1734 = vsub.s32 %v1733, 2
      %vm1735 = vcmp.gt.s32.totalorder 0, %v1734
      %v1736 = vsel %vm1735, 0, %v1734
      %v1737 = vsub.s32 32, %v1736
      %v1738 = vshll.u32 %v1729, %v1736
      %v1739 = vshrl.u32 %v1721, %v1737
      %v1740 = vor.u32 %v1738, %v1739
      %v1741 = vsub.s32 4294967266, %v1736
      %v1742 = vadd.s32 %v1741, 127
      %v1743 = vshll.u32 %v1742, 23
      %v1744 = vor.u32 4788187, %v1743
      %v1745 = vand.u32 2147483647, %v1744
      %v1747 = vcvt.s32.f32 %v1740
      %v1748 = vmul.f32 %v1747, %v1745
      %v1749 = vxor.u32 %v1748, 2147483648
      %v1750 = vsel %vm1667, %v1749, %v1748
      %v1751 = vsub.s32 4, %v1727
      %v1752 = vsel %vm1667, %v1751, %v1727
      %v1753 = vsel %vm1666, %v619, %v1750
      %v1754 = vsel %vm1666, 0, %v1752
      %v1755 = vcosq.f32.pop %v1753
      %v1756 = vsinq.f32.pop %v1753
      %vm1757 = vweird.f32 %v619
      %v1758 = vadd.s32 %v1754, 3
      %v1759 = vand.u32 %v1758, 3
      %vm1760 = vcmp.lt.s32.totalorder %v1759, 2
      %vm1761 = vcmp.eq.s32.totalorder %v1759, 0
      %v1762 = vxor.u32 %v1756, 2147483648
      %v1763 = vsel %vm1761, %v1755, %v1762
      %vm1764 = vcmp.eq.s32.totalorder %v1759, 2
      %v1765 = vxor.u32 %v1755, 2147483648
      %v1766 = vsel %vm1764, %v1765, %v1756
      %v1767 = vsel %vm1760, %v1763, %v1766
      %v1768 = vsel %vm1757, nan, %v1767
      %v1769 = vand.u32 2147483647, %v620
      %vm1770 = vcmp.le.f32.partialorder %v1769, 0.7853982
      %vm1771 = vcmp.lt.s32.totalorder %v620, 0
      %v1772 = vand.u32 %v620, 2139095040
      %v1773 = vshrl.u32 %v1772, 23
      %v1774 = vsub.s32 %v1773, 127
      %v1775 = vand.u32 2147483647, %v620
      %v1776 = vand.u32 %v1775, 8388607
      %v1777 = vor.u32 %v1776, 8388608
      %v1778 = vsub.s32 0, %v1777
      %v1779 = vadd.s32 %v1774, 1
      %vm1780 = vcmp.gt.s32.totalorder %v1779, 0
      %v1781 = vsel %vm1780, %v1779, 0
      %v1782 = vshrl.u32 %v1781, 5
      %v1783 = vand.u32 %v1781, 31
      %v1784 = vsub.s32 32, %v1783
      %v1785 = vshrl.u32 683565275, %v1784
      %v1786 = vshll.u32 683565275, %v1783
      %v1787 = vshrl.u32 2475754826, %v1784
      %v1788 = vor.u32 %v1786, %v1787
      %v1789 = vshll.u32 2475754826, %v1783
      %v1790 = vshrl.u32 2131351028, %v1784
      %v1791 = vor.u32 %v1789, %v1790
      %v1792 = vshll.u32 2131351028, %v1783
      %v1793 = vshrl.u32 2102212464, %v1784
      %v1794 = vor.u32 %v1792, %v1793
      %v1795 = vshll.u32 2102212464, %v1783
      %v1796 = vshrl.u32 920167782, %v1784
      %v1797 = vor.u32 %v1795, %v1796
      %v1798 = vshll.u32 920167782, %v1783
      %v1799 = vshrl.u32 1326507024, %v1784
      %v1800 = vor.u32 %v1798, %v1799
      %vm1801 = vcmp.lt.s32.totalorder %v1782, 1
      %vm1802 = vcmp.lt.s32.totalorder %v1782, 2
      %vm1803 = vcmp.lt.s32.totalorder %v1782, 3
      %vm1804 = vcmp.lt.s32.totalorder %v1782, 4
      %v1805 = vsel %vm1801, %v1785, %v1788
      %v1806 = vsel %vm1804, %v1794, 2102212464
      %v1807 = vsel %vm1803, %v1791, %v1806
      %v1808 = vsel %vm1802, %v1805, %v1807
      %v1809 = vsel %vm1801, %v1788, %v1791
      %v1810 = vsel %vm1804, %v1797, 920167782
      %v1811 = vsel %vm1803, %v1794, %v1810
      %v1812 = vsel %vm1802, %v1809, %v1811
      %v1813 = vsel %vm1801, %v1791, %v1794
      %v1814 = vsel %vm1804, %v1800, 1326507024
      %v1815 = vsel %vm1803, %v1797, %v1814
      %v1816 = vsel %vm1802, %v1813, %v1815
      %v1817 = vshll.u32 %v1777, 8
      %v1818 = vmul.u32.u64.compose %v1817, %v1816
      %v1819 = vextract.low.u32 %v1818
      %v1820 = vextract.high.u32 %v1818
      %v1821 = vmul.u32.u64.compose %v1817, %v1812
      %v1822 = vextract.low.u32 %v1821
      %v1823 = vextract.high.u32 %v1821
      %v1824 = vmul.u32 %v1817, %v1808
      %v1825 = vadd.s32 %v1820, %v1822
      %vm1826 = vc.u32 %v1820, %v1822
      %v1827 = vadd.s32 %v1823, 1
      %v1828 = vsel %vm1826, %v1827, %v1823
      %v1829 = vadd.s32 %v1824, %v1828
      %v1830 = vadd.s32 %v1829, 536870912
      %v1831 = vshrl.u32 %v1830, 30
      %v1832 = vshll.u32 %v1831, 30
      %v1833 = vsub.s32 %v1829, %v1832
      %vm1834 = vcmp.lt.s32.totalorder %v1833, 0
      %v1835 = vsub.s32 0, %v1833
      %v1836 = vsel %vm1834, %v1835, %v1833
      %v1837 = vclz %v1836
      %v1838 = vsub.s32 %v1837, 2
      %vm1839 = vcmp.gt.s32.totalorder 0, %v1838
      %v1840 = vsel %vm1839, 0, %v1838
      %v1841 = vsub.s32 32, %v1840
      %v1842 = vshll.u32 %v1833, %v1840
      %v1843 = vshrl.u32 %v1825, %v1841
      %v1844 = vor.u32 %v1842, %v1843
      %v1845 = vsub.s32 4294967266, %v1840
      %v1846 = vadd.s32 %v1845, 127
      %v1847 = vshll.u32 %v1846, 23
      %v1848 = vor.u32 4788187, %v1847
      %v1849 = vand.u32 2147483647, %v1848
      %v1851 = vcvt.s32.f32 %v1844
      %v1852 = vmul.f32 %v1851, %v1849
      %v1853 = vxor.u32 %v1852, 2147483648
      %v1854 = vsel %vm1771, %v1853, %v1852
      %v1855 = vsub.s32 4, %v1831
      %v1856 = vsel %vm1771, %v1855, %v1831
      %v1857 = vsel %vm1770, %v620, %v1854
      %v1858 = vsel %vm1770, 0, %v1856
      %v1859 = vcosq.f32.pop %v1857
      %v1860 = vsinq.f32.pop %v1857
      %vm1861 = vweird.f32 %v620
      %v1862 = vadd.s32 %v1858, 3
      %v1863 = vand.u32 %v1862, 3
      %vm1864 = vcmp.lt.s32.totalorder %v1863, 2
      %vm1865 = vcmp.eq.s32.totalorder %v1863, 0
      %v1866 = vxor.u32 %v1860, 2147483648
      %v1867 = vsel %vm1865, %v1859, %v1866
      %vm1868 = vcmp.eq.s32.totalorder %v1863, 2
      %v1869 = vxor.u32 %v1859, 2147483648
      %v1870 = vsel %vm1868, %v1869, %v1860
      %v1871 = vsel %vm1864, %v1867, %v1870
      %v1872 = vsel %vm1861, nan, %v1871
      %v1873 = vand.u32 2147483647, %v621
      %vm1874 = vcmp.le.f32.partialorder %v1873, 0.7853982
      %vm1875 = vcmp.lt.s32.totalorder %v621, 0
      %v1876 = vand.u32 %v621, 2139095040
      %v1877 = vshrl.u32 %v1876, 23
      %v1878 = vsub.s32 %v1877, 127
      %v1879 = vand.u32 2147483647, %v621
      %v1880 = vand.u32 %v1879, 8388607
      %v1881 = vor.u32 %v1880, 8388608
      %v1882 = vsub.s32 0, %v1881
      %v1883 = vadd.s32 %v1878, 1
      %vm1884 = vcmp.gt.s32.totalorder %v1883, 0
      %v1885 = vsel %vm1884, %v1883, 0
      %v1886 = vshrl.u32 %v1885, 5
      %v1887 = vand.u32 %v1885, 31
      %v1888 = vsub.s32 32, %v1887
      %v1889 = vshrl.u32 683565275, %v1888
      %v1890 = vshll.u32 683565275, %v1887
      %v1891 = vshrl.u32 2475754826, %v1888
      %v1892 = vor.u32 %v1890, %v1891
      %v1893 = vshll.u32 2475754826, %v1887
      %v1894 = vshrl.u32 2131351028, %v1888
      %v1895 = vor.u32 %v1893, %v1894
      %v1896 = vshll.u32 2131351028, %v1887
      %v1897 = vshrl.u32 2102212464, %v1888
      %v1898 = vor.u32 %v1896, %v1897
      %v1899 = vshll.u32 2102212464, %v1887
      %v1900 = vshrl.u32 920167782, %v1888
      %v1901 = vor.u32 %v1899, %v1900
      %v1902 = vshll.u32 920167782, %v1887
      %v1903 = vshrl.u32 1326507024, %v1888
      %v1904 = vor.u32 %v1902, %v1903
      %vm1905 = vcmp.lt.s32.totalorder %v1886, 1
      %vm1906 = vcmp.lt.s32.totalorder %v1886, 2
      %vm1907 = vcmp.lt.s32.totalorder %v1886, 3
      %vm1908 = vcmp.lt.s32.totalorder %v1886, 4
      %v1909 = vsel %vm1905, %v1889, %v1892
      %v1910 = vsel %vm1908, %v1898, 2102212464
      %v1911 = vsel %vm1907, %v1895, %v1910
      %v1912 = vsel %vm1906, %v1909, %v1911
      %v1913 = vsel %vm1905, %v1892, %v1895
      %v1914 = vsel %vm1908, %v1901, 920167782
      %v1915 = vsel %vm1907, %v1898, %v1914
      %v1916 = vsel %vm1906, %v1913, %v1915
      %v1917 = vsel %vm1905, %v1895, %v1898
      %v1918 = vsel %vm1908, %v1904, 1326507024
      %v1919 = vsel %vm1907, %v1901, %v1918
      %v1920 = vsel %vm1906, %v1917, %v1919
      %v1921 = vshll.u32 %v1881, 8
      %v1922 = vmul.u32.u64.compose %v1921, %v1920
      %v1923 = vextract.low.u32 %v1922
      %v1924 = vextract.high.u32 %v1922
      %v1925 = vmul.u32.u64.compose %v1921, %v1916
      %v1926 = vextract.low.u32 %v1925
      %v1927 = vextract.high.u32 %v1925
      %v1928 = vmul.u32 %v1921, %v1912
      %v1929 = vadd.s32 %v1924, %v1926
      %vm1930 = vc.u32 %v1924, %v1926
      %v1931 = vadd.s32 %v1927, 1
      %v1932 = vsel %vm1930, %v1931, %v1927
      %v1933 = vadd.s32 %v1928, %v1932
      %v1934 = vadd.s32 %v1933, 536870912
      %v1935 = vshrl.u32 %v1934, 30
      %v1936 = vshll.u32 %v1935, 30
      %v1937 = vsub.s32 %v1933, %v1936
      %vm1938 = vcmp.lt.s32.totalorder %v1937, 0
      %v1939 = vsub.s32 0, %v1937
      %v1940 = vsel %vm1938, %v1939, %v1937
      %v1941 = vclz %v1940
      %v1942 = vsub.s32 %v1941, 2
      %vm1943 = vcmp.gt.s32.totalorder 0, %v1942
      %v1944 = vsel %vm1943, 0, %v1942
      %v1945 = vsub.s32 32, %v1944
      %v1946 = vshll.u32 %v1937, %v1944
      %v1947 = vshrl.u32 %v1929, %v1945
      %v1948 = vor.u32 %v1946, %v1947
      %v1949 = vsub.s32 4294967266, %v1944
      %v1950 = vadd.s32 %v1949, 127
      %v1951 = vshll.u32 %v1950, 23
      %v1952 = vor.u32 4788187, %v1951
      %v1953 = vand.u32 2147483647, %v1952
      %v1955 = vcvt.s32.f32 %v1948
      %v1956 = vmul.f32 %v1955, %v1953
      %v1957 = vxor.u32 %v1956, 2147483648
      %v1958 = vsel %vm1875, %v1957, %v1956
      %v1959 = vsub.s32 4, %v1935
      %v1960 = vsel %vm1875, %v1959, %v1935
      %v1961 = vsel %vm1874, %v621, %v1958
      %v1962 = vsel %vm1874, 0, %v1960
      %v1963 = vcosq.f32.pop %v1961
      %v1964 = vsinq.f32.pop %v1961
      %vm1965 = vweird.f32 %v621
      %v1966 = vadd.s32 %v1962, 3
      %v1967 = vand.u32 %v1966, 3
      %vm1968 = vcmp.lt.s32.totalorder %v1967, 2
      %vm1969 = vcmp.eq.s32.totalorder %v1967, 0
      %v1970 = vxor.u32 %v1964, 2147483648
      %v1971 = vsel %vm1969, %v1963, %v1970
      %vm1972 = vcmp.eq.s32.totalorder %v1967, 2
      %v1973 = vxor.u32 %v1963, 2147483648
      %v1974 = vsel %vm1972, %v1973, %v1964
      %v1975 = vsel %vm1968, %v1971, %v1974
      %v1976 = vsel %vm1965, nan, %v1975
      %v1977 = vand.u32 2147483647, %v622
      %vm1978 = vcmp.le.f32.partialorder %v1977, 0.7853982
      %vm1979 = vcmp.lt.s32.totalorder %v622, 0
      %v1980 = vand.u32 %v622, 2139095040
      %v1981 = vshrl.u32 %v1980, 23
      %v1982 = vsub.s32 %v1981, 127
      %v1983 = vand.u32 2147483647, %v622
      %v1984 = vand.u32 %v1983, 8388607
      %v1985 = vor.u32 %v1984, 8388608
      %v1986 = vsub.s32 0, %v1985
      %v1987 = vadd.s32 %v1982, 1
      %vm1988 = vcmp.gt.s32.totalorder %v1987, 0
      %v1989 = vsel %vm1988, %v1987, 0
      %v1990 = vshrl.u32 %v1989, 5
      %v1991 = vand.u32 %v1989, 31
      %v1992 = vsub.s32 32, %v1991
      %v1993 = vshrl.u32 683565275, %v1992
      %v1994 = vshll.u32 683565275, %v1991
      %v1995 = vshrl.u32 2475754826, %v1992
      %v1996 = vor.u32 %v1994, %v1995
      %v1997 = vshll.u32 2475754826, %v1991
      %v1998 = vshrl.u32 2131351028, %v1992
      %v1999 = vor.u32 %v1997, %v1998
      %v2000 = vshll.u32 2131351028, %v1991
      %v2001 = vshrl.u32 2102212464, %v1992
      %v2002 = vor.u32 %v2000, %v2001
      %v2003 = vshll.u32 2102212464, %v1991
      %v2004 = vshrl.u32 920167782, %v1992
      %v2005 = vor.u32 %v2003, %v2004
      %v2006 = vshll.u32 920167782, %v1991
      %v2007 = vshrl.u32 1326507024, %v1992
      %v2008 = vor.u32 %v2006, %v2007
      %vm2009 = vcmp.lt.s32.totalorder %v1990, 1
      %vm2010 = vcmp.lt.s32.totalorder %v1990, 2
      %vm2011 = vcmp.lt.s32.totalorder %v1990, 3
      %vm2012 = vcmp.lt.s32.totalorder %v1990, 4
      %v2013 = vsel %vm2009, %v1993, %v1996
      %v2014 = vsel %vm2012, %v2002, 2102212464
      %v2015 = vsel %vm2011, %v1999, %v2014
      %v2016 = vsel %vm2010, %v2013, %v2015
      %v2017 = vsel %vm2009, %v1996, %v1999
      %v2018 = vsel %vm2012, %v2005, 920167782
      %v2019 = vsel %vm2011, %v2002, %v2018
      %v2020 = vsel %vm2010, %v2017, %v2019
      %v2021 = vsel %vm2009, %v1999, %v2002
      %v2022 = vsel %vm2012, %v2008, 1326507024
      %v2023 = vsel %vm2011, %v2005, %v2022
      %v2024 = vsel %vm2010, %v2021, %v2023
      %v2025 = vshll.u32 %v1985, 8
      %v2026 = vmul.u32.u64.compose %v2025, %v2024
      %v2027 = vextract.low.u32 %v2026
      %v2028 = vextract.high.u32 %v2026
      %v2029 = vmul.u32.u64.compose %v2025, %v2020
      %v2030 = vextract.low.u32 %v2029
      %v2031 = vextract.high.u32 %v2029
      %v2032 = vmul.u32 %v2025, %v2016
      %v2033 = vadd.s32 %v2028, %v2030
      %vm2034 = vc.u32 %v2028, %v2030
      %v2035 = vadd.s32 %v2031, 1
      %v2036 = vsel %vm2034, %v2035, %v2031
      %v2037 = vadd.s32 %v2032, %v2036
      %v2038 = vadd.s32 %v2037, 536870912
      %v2039 = vshrl.u32 %v2038, 30
      %v2040 = vshll.u32 %v2039, 30
      %v2041 = vsub.s32 %v2037, %v2040
      %vm2042 = vcmp.lt.s32.totalorder %v2041, 0
      %v2043 = vsub.s32 0, %v2041
      %v2044 = vsel %vm2042, %v2043, %v2041
      %v2045 = vclz %v2044
      %v2046 = vsub.s32 %v2045, 2
      %vm2047 = vcmp.gt.s32.totalorder 0, %v2046
      %v2048 = vsel %vm2047, 0, %v2046
      %v2049 = vsub.s32 32, %v2048
      %v2050 = vshll.u32 %v2041, %v2048
      %v2051 = vshrl.u32 %v2033, %v2049
      %v2052 = vor.u32 %v2050, %v2051
      %v2053 = vsub.s32 4294967266, %v2048
      %v2054 = vadd.s32 %v2053, 127
      %v2055 = vshll.u32 %v2054, 23
      %v2056 = vor.u32 4788187, %v2055
      %v2057 = vand.u32 2147483647, %v2056
      %v2059 = vcvt.s32.f32 %v2052
      %v2060 = vmul.f32 %v2059, %v2057
      %v2061 = vxor.u32 %v2060, 2147483648
      %v2062 = vsel %vm1979, %v2061, %v2060
      %v2063 = vsub.s32 4, %v2039
      %v2064 = vsel %vm1979, %v2063, %v2039
      %v2065 = vsel %vm1978, %v622, %v2062
      %v2066 = vsel %vm1978, 0, %v2064
      %v2067 = vcosq.f32.pop %v2065
      %v2068 = vsinq.f32.pop %v2065
      %vm2069 = vweird.f32 %v622
      %v2070 = vadd.s32 %v2066, 3
      %v2071 = vand.u32 %v2070, 3
      %vm2072 = vcmp.lt.s32.totalorder %v2071, 2
      %vm2073 = vcmp.eq.s32.totalorder %v2071, 0
      %v2074 = vxor.u32 %v2068, 2147483648
      %v2075 = vsel %vm2073, %v2067, %v2074
      %vm2076 = vcmp.eq.s32.totalorder %v2071, 2
      %v2077 = vxor.u32 %v2067, 2147483648
      %v2078 = vsel %vm2076, %v2077, %v2068
      %v2079 = vsel %vm2072, %v2075, %v2078
      %v2080 = vsel %vm2069, nan, %v2079
      %v2081 = vand.u32 2147483647, %v623
      %vm2082 = vcmp.le.f32.partialorder %v2081, 0.7853982
      %vm2083 = vcmp.lt.s32.totalorder %v623, 0
      %v2084 = vand.u32 %v623, 2139095040
      %v2085 = vshrl.u32 %v2084, 23
      %v2086 = vsub.s32 %v2085, 127
      %v2087 = vand.u32 2147483647, %v623
      %v2088 = vand.u32 %v2087, 8388607
      %v2089 = vor.u32 %v2088, 8388608
      %v2090 = vsub.s32 0, %v2089
      %v2091 = vadd.s32 %v2086, 1
      %vm2092 = vcmp.gt.s32.totalorder %v2091, 0
      %v2093 = vsel %vm2092, %v2091, 0
      %v2094 = vshrl.u32 %v2093, 5
      %v2095 = vand.u32 %v2093, 31
      %v2096 = vsub.s32 32, %v2095
      %v2097 = vshrl.u32 683565275, %v2096
      %v2098 = vshll.u32 683565275, %v2095
      %v2099 = vshrl.u32 2475754826, %v2096
      %v2100 = vor.u32 %v2098, %v2099
      %v2101 = vshll.u32 2475754826, %v2095
      %v2102 = vshrl.u32 2131351028, %v2096
      %v2103 = vor.u32 %v2101, %v2102
      %v2104 = vshll.u32 2131351028, %v2095
      %v2105 = vshrl.u32 2102212464, %v2096
      %v2106 = vor.u32 %v2104, %v2105
      %v2107 = vshll.u32 2102212464, %v2095
      %v2108 = vshrl.u32 920167782, %v2096
      %v2109 = vor.u32 %v2107, %v2108
      %v2110 = vshll.u32 920167782, %v2095
      %v2111 = vshrl.u32 1326507024, %v2096
      %v2112 = vor.u32 %v2110, %v2111
      %vm2113 = vcmp.lt.s32.totalorder %v2094, 1
      %vm2114 = vcmp.lt.s32.totalorder %v2094, 2
      %vm2115 = vcmp.lt.s32.totalorder %v2094, 3
      %vm2116 = vcmp.lt.s32.totalorder %v2094, 4
      %v2117 = vsel %vm2113, %v2097, %v2100
      %v2118 = vsel %vm2116, %v2106, 2102212464
      %v2119 = vsel %vm2115, %v2103, %v2118
      %v2120 = vsel %vm2114, %v2117, %v2119
      %v2121 = vsel %vm2113, %v2100, %v2103
      %v2122 = vsel %vm2116, %v2109, 920167782
      %v2123 = vsel %vm2115, %v2106, %v2122
      %v2124 = vsel %vm2114, %v2121, %v2123
      %v2125 = vsel %vm2113, %v2103, %v2106
      %v2126 = vsel %vm2116, %v2112, 1326507024
      %v2127 = vsel %vm2115, %v2109, %v2126
      %v2128 = vsel %vm2114, %v2125, %v2127
      %v2129 = vshll.u32 %v2089, 8
      %v2130 = vmul.u32.u64.compose %v2129, %v2128
      %v2131 = vextract.low.u32 %v2130
      %v2132 = vextract.high.u32 %v2130
      %v2133 = vmul.u32.u64.compose %v2129, %v2124
      %v2134 = vextract.low.u32 %v2133
      %v2135 = vextract.high.u32 %v2133
      %v2136 = vmul.u32 %v2129, %v2120
      %v2137 = vadd.s32 %v2132, %v2134
      %vm2138 = vc.u32 %v2132, %v2134
      %v2139 = vadd.s32 %v2135, 1
      %v2140 = vsel %vm2138, %v2139, %v2135
      %v2141 = vadd.s32 %v2136, %v2140
      %v2142 = vadd.s32 %v2141, 536870912
      %v2143 = vshrl.u32 %v2142, 30
      %v2144 = vshll.u32 %v2143, 30
      %v2145 = vsub.s32 %v2141, %v2144
      %vm2146 = vcmp.lt.s32.totalorder %v2145, 0
      %v2147 = vsub.s32 0, %v2145
      %v2148 = vsel %vm2146, %v2147, %v2145
      %v2149 = vclz %v2148
      %v2150 = vsub.s32 %v2149, 2
      %vm2151 = vcmp.gt.s32.totalorder 0, %v2150
      %v2152 = vsel %vm2151, 0, %v2150
      %v2153 = vsub.s32 32, %v2152
      %v2154 = vshll.u32 %v2145, %v2152
      %v2155 = vshrl.u32 %v2137, %v2153
      %v2156 = vor.u32 %v2154, %v2155
      %v2157 = vsub.s32 4294967266, %v2152
      %v2158 = vadd.s32 %v2157, 127
      %v2159 = vshll.u32 %v2158, 23
      %v2160 = vor.u32 4788187, %v2159
      %v2161 = vand.u32 2147483647, %v2160
      %v2163 = vcvt.s32.f32 %v2156
      %v2164 = vmul.f32 %v2163, %v2161
      %v2165 = vxor.u32 %v2164, 2147483648
      %v2166 = vsel %vm2083, %v2165, %v2164
      %v2167 = vsub.s32 4, %v2143
      %v2168 = vsel %vm2083, %v2167, %v2143
      %v2169 = vsel %vm2082, %v623, %v2166
      %v2170 = vsel %vm2082, 0, %v2168
      %v2171 = vcosq.f32.pop %v2169
      %v2172 = vsinq.f32.pop %v2169
      %vm2173 = vweird.f32 %v623
      %v2174 = vadd.s32 %v2170, 3
      %v2175 = vand.u32 %v2174, 3
      %vm2176 = vcmp.lt.s32.totalorder %v2175, 2
      %vm2177 = vcmp.eq.s32.totalorder %v2175, 0
      %v2178 = vxor.u32 %v2172, 2147483648
      %v2179 = vsel %vm2177, %v2171, %v2178
      %vm2180 = vcmp.eq.s32.totalorder %v2175, 2
      %v2181 = vxor.u32 %v2171, 2147483648
      %v2182 = vsel %vm2180, %v2181, %v2172
      %v2183 = vsel %vm2176, %v2179, %v2182
      %v2184 = vsel %vm2173, nan, %v2183
      %v2185 = vand.u32 2147483647, %v624
      %vm2186 = vcmp.le.f32.partialorder %v2185, 0.7853982
      %vm2187 = vcmp.lt.s32.totalorder %v624, 0
      %v2188 = vand.u32 %v624, 2139095040
      %v2189 = vshrl.u32 %v2188, 23
      %v2190 = vsub.s32 %v2189, 127
      %v2191 = vand.u32 2147483647, %v624
      %v2192 = vand.u32 %v2191, 8388607
      %v2193 = vor.u32 %v2192, 8388608
      %v2194 = vsub.s32 0, %v2193
      %v2195 = vadd.s32 %v2190, 1
      %vm2196 = vcmp.gt.s32.totalorder %v2195, 0
      %v2197 = vsel %vm2196, %v2195, 0
      %v2198 = vshrl.u32 %v2197, 5
      %v2199 = vand.u32 %v2197, 31
      %v2200 = vsub.s32 32, %v2199
      %v2201 = vshrl.u32 683565275, %v2200
      %v2202 = vshll.u32 683565275, %v2199
      %v2203 = vshrl.u32 2475754826, %v2200
      %v2204 = vor.u32 %v2202, %v2203
      %v2205 = vshll.u32 2475754826, %v2199
      %v2206 = vshrl.u32 2131351028, %v2200
      %v2207 = vor.u32 %v2205, %v2206
      %v2208 = vshll.u32 2131351028, %v2199
      %v2209 = vshrl.u32 2102212464, %v2200
      %v2210 = vor.u32 %v2208, %v2209
      %v2211 = vshll.u32 2102212464, %v2199
      %v2212 = vshrl.u32 920167782, %v2200
      %v2213 = vor.u32 %v2211, %v2212
      %v2214 = vshll.u32 920167782, %v2199
      %v2215 = vshrl.u32 1326507024, %v2200
      %v2216 = vor.u32 %v2214, %v2215
      %vm2217 = vcmp.lt.s32.totalorder %v2198, 1
      %vm2218 = vcmp.lt.s32.totalorder %v2198, 2
      %vm2219 = vcmp.lt.s32.totalorder %v2198, 3
      %vm2220 = vcmp.lt.s32.totalorder %v2198, 4
      %v2221 = vsel %vm2217, %v2201, %v2204
      %v2222 = vsel %vm2220, %v2210, 2102212464
      %v2223 = vsel %vm2219, %v2207, %v2222
      %v2224 = vsel %vm2218, %v2221, %v2223
      %v2225 = vsel %vm2217, %v2204, %v2207
      %v2226 = vsel %vm2220, %v2213, 920167782
      %v2227 = vsel %vm2219, %v2210, %v2226
      %v2228 = vsel %vm2218, %v2225, %v2227
      %v2229 = vsel %vm2217, %v2207, %v2210
      %v2230 = vsel %vm2220, %v2216, 1326507024
      %v2231 = vsel %vm2219, %v2213, %v2230
      %v2232 = vsel %vm2218, %v2229, %v2231
      %v2233 = vshll.u32 %v2193, 8
      %v2234 = vmul.u32.u64.compose %v2233, %v2232
      %v2235 = vextract.low.u32 %v2234
      %v2236 = vextract.high.u32 %v2234
      %v2237 = vmul.u32.u64.compose %v2233, %v2228
      %v2238 = vextract.low.u32 %v2237
      %v2239 = vextract.high.u32 %v2237
      %v2240 = vmul.u32 %v2233, %v2224
      %v2241 = vadd.s32 %v2236, %v2238
      %vm2242 = vc.u32 %v2236, %v2238
      %v2243 = vadd.s32 %v2239, 1
      %v2244 = vsel %vm2242, %v2243, %v2239
      %v2245 = vadd.s32 %v2240, %v2244
      %v2246 = vadd.s32 %v2245, 536870912
      %v2247 = vshrl.u32 %v2246, 30
      %v2248 = vshll.u32 %v2247, 30
      %v2249 = vsub.s32 %v2245, %v2248
      %vm2250 = vcmp.lt.s32.totalorder %v2249, 0
      %v2251 = vsub.s32 0, %v2249
      %v2252 = vsel %vm2250, %v2251, %v2249
      %v2253 = vclz %v2252
      %v2254 = vsub.s32 %v2253, 2
      %vm2255 = vcmp.gt.s32.totalorder 0, %v2254
      %v2256 = vsel %vm2255, 0, %v2254
      %v2257 = vsub.s32 32, %v2256
      %v2258 = vshll.u32 %v2249, %v2256
      %v2259 = vshrl.u32 %v2241, %v2257
      %v2260 = vor.u32 %v2258, %v2259
      %v2261 = vsub.s32 4294967266, %v2256
      %v2262 = vadd.s32 %v2261, 127
      %v2263 = vshll.u32 %v2262, 23
      %v2264 = vor.u32 4788187, %v2263
      %v2265 = vand.u32 2147483647, %v2264
      %v2267 = vcvt.s32.f32 %v2260
      %v2268 = vmul.f32 %v2267, %v2265
      %v2269 = vxor.u32 %v2268, 2147483648
      %v2270 = vsel %vm2187, %v2269, %v2268
      %v2271 = vsub.s32 4, %v2247
      %v2272 = vsel %vm2187, %v2271, %v2247
      %v2273 = vsel %vm2186, %v624, %v2270
      %v2274 = vsel %vm2186, 0, %v2272
      %v2275 = vcosq.f32.pop %v2273
      %v2276 = vsinq.f32.pop %v2273
      %vm2277 = vweird.f32 %v624
      %v2278 = vadd.s32 %v2274, 3
      %v2279 = vand.u32 %v2278, 3
      %vm2280 = vcmp.lt.s32.totalorder %v2279, 2
      %vm2281 = vcmp.eq.s32.totalorder %v2279, 0
      %v2282 = vxor.u32 %v2276, 2147483648
      %v2283 = vsel %vm2281, %v2275, %v2282
      %vm2284 = vcmp.eq.s32.totalorder %v2279, 2
      %v2285 = vxor.u32 %v2275, 2147483648
      %v2286 = vsel %vm2284, %v2285, %v2276
      %v2287 = vsel %vm2280, %v2283, %v2286
      %v2288 = vsel %vm2277, nan, %v2287
      %v2289 = vpack.c.bf16 %v832, %v728
      %v2290 = vpack.c.bf16 %v1040, %v936
      %v2291 = vpack.c.bf16 %v1248, %v1144
      %v2292 = vpack.c.bf16 %v1456, %v1352
      %v2293 = vpack.c.bf16 %v1664, %v1560
      %v2294 = vpack.c.bf16 %v1872, %v1768
      %v2295 = vpack.c.bf16 %v2080, %v1976
      %v2296 = vpack.c.bf16 %v2288, %v2184
      %v2297 = vld [vmem:[%s3] sm:$0xf]
      %v2298 = vld [vmem:[%s3 + $0x4] sm:$0xf]
      %v2299 = vld [vmem:[%s3 + $0x8] sm:$0xf]
      %v2300 = vld [vmem:[%s3 + $0xc] sm:$0xf]
      %v2301 = vld [vmem:[%s3 + $0x10] sm:$0xf]
      %v2302 = vld [vmem:[%s3 + $0x14] sm:$0xf]
      %v2303 = vld [vmem:[%s3 + $0x18] sm:$0xf]
      %v2304 = vld [vmem:[%s3 + $0x1c] sm:$0xf]
      %v2305 = vld [vmem:[%s3 + $0x20] sm:$0xf]
      %v2306 = vld [vmem:[%s3 + $0x24] sm:$0xf]
      %v2307 = vld [vmem:[%s3 + $0x28] sm:$0xf]
      %v2308 = vld [vmem:[%s3 + $0x2c] sm:$0xf]
      %v2309 = vld [vmem:[%s3 + $0x30] sm:$0xf]
      %v2310 = vld [vmem:[%s3 + $0x34] sm:$0xf]
      %v2311 = vld [vmem:[%s3 + $0x38] sm:$0xf]
      %v2312 = vld [vmem:[%s3 + $0x3c] sm:$0xf]
      %v2313 = vld [vmem:[%s4] sm:$0x1]
      %v2314 = vlaneseq
      %v2315 = vshrl.u32 %v2314, 7
      %v2316 = vsub.s32 0, %v2315
      %v2317 = vrot.slane %v2313, %v2316
      %v2334 = vunpack.c.l.b16 %v2297
      %v2335 = vunpack.c.l.b16 %v2298
      %v2336 = vunpack.c.l.b16 %v2299
      %v2337 = vunpack.c.l.b16 %v2300
      %v2338 = vunpack.c.l.b16 %v2301
      %v2339 = vunpack.c.l.b16 %v2302
      %v2340 = vunpack.c.l.b16 %v2303
      %v2341 = vunpack.c.l.b16 %v2304
      %v2342 = vunpack.c.l.b16 %v2305
      %v2343 = vunpack.c.l.b16 %v2306
      %v2344 = vunpack.c.l.b16 %v2307
      %v2345 = vunpack.c.l.b16 %v2308
      %v2346 = vunpack.c.l.b16 %v2309
      %v2347 = vunpack.c.l.b16 %v2310
      %v2348 = vunpack.c.l.b16 %v2311
      %v2349 = vunpack.c.l.b16 %v2312
      %v2350 = vpack.c.b16 %v2335, %v2334
      %v2351 = vpack.c.b16 %v2337, %v2336
      %v2352 = vpack.c.b16 %v2339, %v2338
      %v2353 = vpack.c.b16 %v2341, %v2340
      %v2354 = vpack.c.b16 %v2343, %v2342
      %v2355 = vpack.c.b16 %v2345, %v2344
      %v2356 = vpack.c.b16 %v2347, %v2346
      %v2357 = vpack.c.b16 %v2349, %v2348
      %2366 = vmatprep.subr.bf16.mxu0 0
      %2367 = vmatpush1.bf16.msra.mxu0 %v2350
      %2368 = vmatprep.subr.bf16.mxu0 0
      %2369 = vmatpush1.bf16.msra.mxu0 %v2351
      %2370 = vmatprep.subr.bf16.mxu0 0
      %2371 = vmatpush1.bf16.msra.mxu0 %v2352
      %2372 = vmatprep.subr.bf16.mxu0 0
      %2373 = vmatpush1.bf16.msra.mxu0 %v2353
      %2374 = vmatprep.subr.bf16.mxu0 0
      %2375 = vmatpush1.bf16.msra.mxu0 %v2354
      %2376 = vmatprep.subr.bf16.mxu0 0
      %2377 = vmatpush1.bf16.msra.mxu0 %v2355
      %2378 = vmatprep.subr.bf16.mxu0 0
      %2379 = vmatpush1.bf16.msra.mxu0 %v2356
      %2380 = vmatprep.subr.bf16.mxu0 0
      %2381 = vmatpush1.bf16.msra.mxu0 %v2357
      %2382 = vmatprep.subr.bf16.mxu0 0
      %2383 = vmatpush1.bf16.msra.mxu0 0
      %2384 = vmatprep.subr.bf16.mxu0 0
      %2385 = vmatpush1.bf16.msra.mxu0 0
      %2386 = vmatprep.subr.bf16.mxu0 0
      %2387 = vmatpush1.bf16.msra.mxu0 0
      %2388 = vmatprep.subr.bf16.mxu0 0
      %2389 = vmatpush1.bf16.msra.mxu0 0
      %2390 = vmatprep.subr.bf16.mxu0 0
      %2391 = vmatpush1.bf16.msra.mxu0 0
      %2392 = vmatprep.subr.bf16.mxu0 0
      %2393 = vmatpush1.bf16.msra.mxu0 0
      %2394 = vmatprep.subr.bf16.mxu0 0
      %2395 = vmatpush1.bf16.msra.mxu0 0
      %2396 = vmatprep.subr.bf16.mxu0 0
      %2397 = vmatpush1.bf16.msra.mxu0 0
      %2398 = vmatprep.mubr.bf16.mxu0 0
      %2399 = vmatmul.mubr.bf16.gmra.mrb[0].mxu0 %v2289
      %v2400 = vpop.f32.mrb[0].mxu0
      %v2401 = vadd.f32 %v2317, %v2400
      %v2402 = vpop.f32.mrb[0].mxu0
      %v2403 = vpop.f32.mrb[0].mxu0
      %v2404 = vadd.f32 %v2317, %v2403
      %v2405 = vpop.f32.mrb[0].mxu0
      %2406 = vmatprep.mubr.bf16.mxu0 0
      %2407 = vmatmul.mubr.bf16.gmra.mrb[0].mxu0 %v2290
      %v2408 = vpop.f32.mrb[0].mxu0
      %v2409 = vadd.f32 %v2317, %v2408
      %v2410 = vpop.f32.mrb[0].mxu0
      %v2411 = vpop.f32.mrb[0].mxu0
      %v2412 = vadd.f32 %v2317, %v2411
      %v2413 = vpop.f32.mrb[0].mxu0
      %2414 = vmatprep.mubr.bf16.mxu0 0
      %2415 = vmatmul.mubr.bf16.gmra.mrb[0].mxu0 %v2291
      %v2416 = vpop.f32.mrb[0].mxu0
      %v2417 = vadd.f32 %v2317, %v2416
      %v2418 = vpop.f32.mrb[0].mxu0
      %v2419 = vpop.f32.mrb[0].mxu0
      %v2420 = vadd.f32 %v2317, %v2419
      %v2421 = vpop.f32.mrb[0].mxu0
      %2422 = vmatprep.mubr.bf16.mxu0 0
      %2423 = vmatmul.mubr.bf16.gmra.mrb[0].mxu0 %v2292
      %v2424 = vpop.f32.mrb[0].mxu0
      %v2425 = vadd.f32 %v2317, %v2424
      %v2426 = vpop.f32.mrb[0].mxu0
      %v2427 = vpop.f32.mrb[0].mxu0
      %v2428 = vadd.f32 %v2317, %v2427
      %v2429 = vpop.f32.mrb[0].mxu0
      %2430 = vmatprep.mubr.bf16.mxu0 0
      %2431 = vmatmul.mubr.bf16.gmra.mrb[0].mxu0 %v2293
      %v2432 = vpop.f32.mrb[0].mxu0
      %v2433 = vadd.f32 %v2317, %v2432
      %v2434 = vpop.f32.mrb[0].mxu0
      %v2435 = vpop.f32.mrb[0].mxu0
      %v2436 = vadd.f32 %v2317, %v2435
      %v2437 = vpop.f32.mrb[0].mxu0
      %2438 = vmatprep.mubr.bf16.mxu0 0
      %2439 = vmatmul.mubr.bf16.gmra.mrb[0].mxu0 %v2294
      %v2440 = vpop.f32.mrb[0].mxu0
      %v2441 = vadd.f32 %v2317, %v2440
      %v2442 = vpop.f32.mrb[0].mxu0
      %v2443 = vpop.f32.mrb[0].mxu0
      %v2444 = vadd.f32 %v2317, %v2443
      %v2445 = vpop.f32.mrb[0].mxu0
      %2446 = vmatprep.mubr.bf16.mxu0 0
      %2447 = vmatmul.mubr.bf16.gmra.mrb[0].mxu0 %v2295
      %v2448 = vpop.f32.mrb[0].mxu0
      %v2449 = vadd.f32 %v2317, %v2448
      %v2450 = vpop.f32.mrb[0].mxu0
      %v2451 = vpop.f32.mrb[0].mxu0
      %v2452 = vadd.f32 %v2317, %v2451
      %v2453 = vpop.f32.mrb[0].mxu0
      %2454 = vmatprep.mubr.bf16.mxu0 0
      %2455 = vmatmul.mubr.bf16.gmra.mrb[0].mxu0 %v2296
      %v2456 = vpop.f32.mrb[0].mxu0
      %v2457 = vadd.f32 %v2317, %v2456
      %v2458 = vpop.f32.mrb[0].mxu0
      %v2459 = vpop.f32.mrb[0].mxu0
      %v2460 = vadd.f32 %v2317, %v2459
      %v2461 = vpop.f32.mrb[0].mxu0
      %2462 = vdwg.mxu0
      %v2463 = vand.u32 2147483647, %v2401
      %vm2464 = vcmp.le.f32.partialorder %v2463, 0.7853982
      %vm2465 = vcmp.lt.s32.totalorder %v2401, 0
      %v2466 = vand.u32 %v2401, 2139095040
      %v2467 = vshrl.u32 %v2466, 23
      %v2468 = vsub.s32 %v2467, 127
      %v2469 = vand.u32 2147483647, %v2401
      %v2470 = vand.u32 %v2469, 8388607
      %v2471 = vor.u32 %v2470, 8388608
      %v2472 = vsub.s32 0, %v2471
      %v2473 = vadd.s32 %v2468, 1
      %vm2474 = vcmp.gt.s32.totalorder %v2473, 0
      %v2475 = vsel %vm2474, %v2473, 0
      %v2476 = vshrl.u32 %v2475, 5
      %v2477 = vand.u32 %v2475, 31
      %v2478 = vsub.s32 32, %v2477
      %v2479 = vshrl.u32 683565275, %v2478
      %v2480 = vshll.u32 683565275, %v2477
      %v2481 = vshrl.u32 2475754826, %v2478
      %v2482 = vor.u32 %v2480, %v2481
      %v2483 = vshll.u32 2475754826, %v2477
      %v2484 = vshrl.u32 2131351028, %v2478
      %v2485 = vor.u32 %v2483, %v2484
      %v2486 = vshll.u32 2131351028, %v2477
      %v2487 = vshrl.u32 2102212464, %v2478
      %v2488 = vor.u32 %v2486, %v2487
      %v2489 = vshll.u32 2102212464, %v2477
      %v2490 = vshrl.u32 920167782, %v2478
      %v2491 = vor.u32 %v2489, %v2490
      %v2492 = vshll.u32 920167782, %v2477
      %v2493 = vshrl.u32 1326507024, %v2478
      %v2494 = vor.u32 %v2492, %v2493
      %vm2495 = vcmp.lt.s32.totalorder %v2476, 1
      %vm2496 = vcmp.lt.s32.totalorder %v2476, 2
      %vm2497 = vcmp.lt.s32.totalorder %v2476, 3
      %vm2498 = vcmp.lt.s32.totalorder %v2476, 4
      %v2499 = vsel %vm2495, %v2479, %v2482
      %v2500 = vsel %vm2498, %v2488, 2102212464
      %v2501 = vsel %vm2497, %v2485, %v2500
      %v2502 = vsel %vm2496, %v2499, %v2501
      %v2503 = vsel %vm2495, %v2482, %v2485
      %v2504 = vsel %vm2498, %v2491, 920167782
      %v2505 = vsel %vm2497, %v2488, %v2504
      %v2506 = vsel %vm2496, %v2503, %v2505
      %v2507 = vsel %vm2495, %v2485, %v2488
      %v2508 = vsel %vm2498, %v2494, 1326507024
      %v2509 = vsel %vm2497, %v2491, %v2508
      %v2510 = vsel %vm2496, %v2507, %v2509
      %v2511 = vshll.u32 %v2471, 8
      %v2512 = vmul.u32.u64.compose %v2511, %v2510
      %v2513 = vextract.low.u32 %v2512
      %v2514 = vextract.high.u32 %v2512
      %v2515 = vmul.u32.u64.compose %v2511, %v2506
      %v2516 = vextract.low.u32 %v2515
      %v2517 = vextract.high.u32 %v2515
      %v2518 = vmul.u32 %v2511, %v2502
      %v2519 = vadd.s32 %v2514, %v2516
      %vm2520 = vc.u32 %v2514, %v2516
      %v2521 = vadd.s32 %v2517, 1
      %v2522 = vsel %vm2520, %v2521, %v2517
      %v2523 = vadd.s32 %v2518, %v2522
      %v2524 = vadd.s32 %v2523, 536870912
      %v2525 = vshrl.u32 %v2524, 30
      %v2526 = vshll.u32 %v2525, 30
      %v2527 = vsub.s32 %v2523, %v2526
      %vm2528 = vcmp.lt.s32.totalorder %v2527, 0
      %v2529 = vsub.s32 0, %v2527
      %v2530 = vsel %vm2528, %v2529, %v2527
      %v2531 = vclz %v2530
      %v2532 = vsub.s32 %v2531, 2
      %vm2533 = vcmp.gt.s32.totalorder 0, %v2532
      %v2534 = vsel %vm2533, 0, %v2532
      %v2535 = vsub.s32 32, %v2534
      %v2536 = vshll.u32 %v2527, %v2534
      %v2537 = vshrl.u32 %v2519, %v2535
      %v2538 = vor.u32 %v2536, %v2537
      %v2539 = vsub.s32 4294967266, %v2534
      %v2540 = vadd.s32 %v2539, 127
      %v2541 = vshll.u32 %v2540, 23
      %v2542 = vor.u32 4788187, %v2541
      %v2543 = vand.u32 2147483647, %v2542
      %v2545 = vcvt.s32.f32 %v2538
      %v2546 = vmul.f32 %v2545, %v2543
      %v2547 = vxor.u32 %v2546, 2147483648
      %v2548 = vsel %vm2465, %v2547, %v2546
      %v2549 = vsub.s32 4, %v2525
      %v2550 = vsel %vm2465, %v2549, %v2525
      %v2551 = vsel %vm2464, %v2401, %v2548
      %v2552 = vsel %vm2464, 0, %v2550
      %v2553 = vcosq.f32.pop %v2551
      %v2554 = vsinq.f32.pop %v2551
      %vm2555 = vweird.f32 %v2401
      %v2556 = vadd.s32 %v2552, 3
      %v2557 = vand.u32 %v2556, 3
      %vm2558 = vcmp.lt.s32.totalorder %v2557, 2
      %vm2559 = vcmp.eq.s32.totalorder %v2557, 0
      %v2560 = vxor.u32 %v2554, 2147483648
      %v2561 = vsel %vm2559, %v2553, %v2560
      %vm2562 = vcmp.eq.s32.totalorder %v2557, 2
      %v2563 = vxor.u32 %v2553, 2147483648
      %v2564 = vsel %vm2562, %v2563, %v2554
      %v2565 = vsel %vm2558, %v2561, %v2564
      %v2566 = vsel %vm2555, nan, %v2565
      %v2567 = vand.u32 2147483647, %v2404
      %vm2568 = vcmp.le.f32.partialorder %v2567, 0.7853982
      %vm2569 = vcmp.lt.s32.totalorder %v2404, 0
      %v2570 = vand.u32 %v2404, 2139095040
      %v2571 = vshrl.u32 %v2570, 23
      %v2572 = vsub.s32 %v2571, 127
      %v2573 = vand.u32 2147483647, %v2404
      %v2574 = vand.u32 %v2573, 8388607
      %v2575 = vor.u32 %v2574, 8388608
      %v2576 = vsub.s32 0, %v2575
      %v2577 = vadd.s32 %v2572, 1
      %vm2578 = vcmp.gt.s32.totalorder %v2577, 0
      %v2579 = vsel %vm2578, %v2577, 0
      %v2580 = vshrl.u32 %v2579, 5
      %v2581 = vand.u32 %v2579, 31
      %v2582 = vsub.s32 32, %v2581
      %v2583 = vshrl.u32 683565275, %v2582
      %v2584 = vshll.u32 683565275, %v2581
      %v2585 = vshrl.u32 2475754826, %v2582
      %v2586 = vor.u32 %v2584, %v2585
      %v2587 = vshll.u32 2475754826, %v2581
      %v2588 = vshrl.u32 2131351028, %v2582
      %v2589 = vor.u32 %v2587, %v2588
      %v2590 = vshll.u32 2131351028, %v2581
      %v2591 = vshrl.u32 2102212464, %v2582
      %v2592 = vor.u32 %v2590, %v2591
      %v2593 = vshll.u32 2102212464, %v2581
      %v2594 = vshrl.u32 920167782, %v2582
      %v2595 = vor.u32 %v2593, %v2594
      %v2596 = vshll.u32 920167782, %v2581
      %v2597 = vshrl.u32 1326507024, %v2582
      %v2598 = vor.u32 %v2596, %v2597
      %vm2599 = vcmp.lt.s32.totalorder %v2580, 1
      %vm2600 = vcmp.lt.s32.totalorder %v2580, 2
      %vm2601 = vcmp.lt.s32.totalorder %v2580, 3
      %vm2602 = vcmp.lt.s32.totalorder %v2580, 4
      %v2603 = vsel %vm2599, %v2583, %v2586
      %v2604 = vsel %vm2602, %v2592, 2102212464
      %v2605 = vsel %vm2601, %v2589, %v2604
      %v2606 = vsel %vm2600, %v2603, %v2605
      %v2607 = vsel %vm2599, %v2586, %v2589
      %v2608 = vsel %vm2602, %v2595, 920167782
      %v2609 = vsel %vm2601, %v2592, %v2608
      %v2610 = vsel %vm2600, %v2607, %v2609
      %v2611 = vsel %vm2599, %v2589, %v2592
      %v2612 = vsel %vm2602, %v2598, 1326507024
      %v2613 = vsel %vm2601, %v2595, %v2612
      %v2614 = vsel %vm2600, %v2611, %v2613
      %v2615 = vshll.u32 %v2575, 8
      %v2616 = vmul.u32.u64.compose %v2615, %v2614
      %v2617 = vextract.low.u32 %v2616
      %v2618 = vextract.high.u32 %v2616
      %v2619 = vmul.u32.u64.compose %v2615, %v2610
      %v2620 = vextract.low.u32 %v2619
      %v2621 = vextract.high.u32 %v2619
      %v2622 = vmul.u32 %v2615, %v2606
      %v2623 = vadd.s32 %v2618, %v2620
      %vm2624 = vc.u32 %v2618, %v2620
      %v2625 = vadd.s32 %v2621, 1
      %v2626 = vsel %vm2624, %v2625, %v2621
      %v2627 = vadd.s32 %v2622, %v2626
      %v2628 = vadd.s32 %v2627, 536870912
      %v2629 = vshrl.u32 %v2628, 30
      %v2630 = vshll.u32 %v2629, 30
      %v2631 = vsub.s32 %v2627, %v2630
      %vm2632 = vcmp.lt.s32.totalorder %v2631, 0
      %v2633 = vsub.s32 0, %v2631
      %v2634 = vsel %vm2632, %v2633, %v2631
      %v2635 = vclz %v2634
      %v2636 = vsub.s32 %v2635, 2
      %vm2637 = vcmp.gt.s32.totalorder 0, %v2636
      %v2638 = vsel %vm2637, 0, %v2636
      %v2639 = vsub.s32 32, %v2638
      %v2640 = vshll.u32 %v2631, %v2638
      %v2641 = vshrl.u32 %v2623, %v2639
      %v2642 = vor.u32 %v2640, %v2641
      %v2643 = vsub.s32 4294967266, %v2638
      %v2644 = vadd.s32 %v2643, 127
      %v2645 = vshll.u32 %v2644, 23
      %v2646 = vor.u32 4788187, %v2645
      %v2647 = vand.u32 2147483647, %v2646
      %v2649 = vcvt.s32.f32 %v2642
      %v2650 = vmul.f32 %v2649, %v2647
      %v2651 = vxor.u32 %v2650, 2147483648
      %v2652 = vsel %vm2569, %v2651, %v2650
      %v2653 = vsub.s32 4, %v2629
      %v2654 = vsel %vm2569, %v2653, %v2629
      %v2655 = vsel %vm2568, %v2404, %v2652
      %v2656 = vsel %vm2568, 0, %v2654
      %v2657 = vcosq.f32.pop %v2655
      %v2658 = vsinq.f32.pop %v2655
      %vm2659 = vweird.f32 %v2404
      %v2660 = vadd.s32 %v2656, 3
      %v2661 = vand.u32 %v2660, 3
      %vm2662 = vcmp.lt.s32.totalorder %v2661, 2
      %vm2663 = vcmp.eq.s32.totalorder %v2661, 0
      %v2664 = vxor.u32 %v2658, 2147483648
      %v2665 = vsel %vm2663, %v2657, %v2664
      %vm2666 = vcmp.eq.s32.totalorder %v2661, 2
      %v2667 = vxor.u32 %v2657, 2147483648
      %v2668 = vsel %vm2666, %v2667, %v2658
      %v2669 = vsel %vm2662, %v2665, %v2668
      %v2670 = vsel %vm2659, nan, %v2669
      %v2671 = vand.u32 2147483647, %v2409
      %vm2672 = vcmp.le.f32.partialorder %v2671, 0.7853982
      %vm2673 = vcmp.lt.s32.totalorder %v2409, 0
      %v2674 = vand.u32 %v2409, 2139095040
      %v2675 = vshrl.u32 %v2674, 23
      %v2676 = vsub.s32 %v2675, 127
      %v2677 = vand.u32 2147483647, %v2409
      %v2678 = vand.u32 %v2677, 8388607
      %v2679 = vor.u32 %v2678, 8388608
      %v2680 = vsub.s32 0, %v2679
      %v2681 = vadd.s32 %v2676, 1
      %vm2682 = vcmp.gt.s32.totalorder %v2681, 0
      %v2683 = vsel %vm2682, %v2681, 0
      %v2684 = vshrl.u32 %v2683, 5
      %v2685 = vand.u32 %v2683, 31
      %v2686 = vsub.s32 32, %v2685
      %v2687 = vshrl.u32 683565275, %v2686
      %v2688 = vshll.u32 683565275, %v2685
      %v2689 = vshrl.u32 2475754826, %v2686
      %v2690 = vor.u32 %v2688, %v2689
      %v2691 = vshll.u32 2475754826, %v2685
      %v2692 = vshrl.u32 2131351028, %v2686
      %v2693 = vor.u32 %v2691, %v2692
      %v2694 = vshll.u32 2131351028, %v2685
      %v2695 = vshrl.u32 2102212464, %v2686
      %v2696 = vor.u32 %v2694, %v2695
      %v2697 = vshll.u32 2102212464, %v2685
      %v2698 = vshrl.u32 920167782, %v2686
      %v2699 = vor.u32 %v2697, %v2698
      %v2700 = vshll.u32 920167782, %v2685
      %v2701 = vshrl.u32 1326507024, %v2686
      %v2702 = vor.u32 %v2700, %v2701
      %vm2703 = vcmp.lt.s32.totalorder %v2684, 1
      %vm2704 = vcmp.lt.s32.totalorder %v2684, 2
      %vm2705 = vcmp.lt.s32.totalorder %v2684, 3
      %vm2706 = vcmp.lt.s32.totalorder %v2684, 4
      %v2707 = vsel %vm2703, %v2687, %v2690
      %v2708 = vsel %vm2706, %v2696, 2102212464
      %v2709 = vsel %vm2705, %v2693, %v2708
      %v2710 = vsel %vm2704, %v2707, %v2709
      %v2711 = vsel %vm2703, %v2690, %v2693
      %v2712 = vsel %vm2706, %v2699, 920167782
      %v2713 = vsel %vm2705, %v2696, %v2712
      %v2714 = vsel %vm2704, %v2711, %v2713
      %v2715 = vsel %vm2703, %v2693, %v2696
      %v2716 = vsel %vm2706, %v2702, 1326507024
      %v2717 = vsel %vm2705, %v2699, %v2716
      %v2718 = vsel %vm2704, %v2715, %v2717
      %v2719 = vshll.u32 %v2679, 8
      %v2720 = vmul.u32.u64.compose %v2719, %v2718
      %v2721 = vextract.low.u32 %v2720
      %v2722 = vextract.high.u32 %v2720
      %v2723 = vmul.u32.u64.compose %v2719, %v2714
      %v2724 = vextract.low.u32 %v2723
      %v2725 = vextract.high.u32 %v2723
      %v2726 = vmul.u32 %v2719, %v2710
      %v2727 = vadd.s32 %v2722, %v2724
      %vm2728 = vc.u32 %v2722, %v2724
      %v2729 = vadd.s32 %v2725, 1
      %v2730 = vsel %vm2728, %v2729, %v2725
      %v2731 = vadd.s32 %v2726, %v2730
      %v2732 = vadd.s32 %v2731, 536870912
      %v2733 = vshrl.u32 %v2732, 30
      %v2734 = vshll.u32 %v2733, 30
      %v2735 = vsub.s32 %v2731, %v2734
      %vm2736 = vcmp.lt.s32.totalorder %v2735, 0
      %v2737 = vsub.s32 0, %v2735
      %v2738 = vsel %vm2736, %v2737, %v2735
      %v2739 = vclz %v2738
      %v2740 = vsub.s32 %v2739, 2
      %vm2741 = vcmp.gt.s32.totalorder 0, %v2740
      %v2742 = vsel %vm2741, 0, %v2740
      %v2743 = vsub.s32 32, %v2742
      %v2744 = vshll.u32 %v2735, %v2742
      %v2745 = vshrl.u32 %v2727, %v2743
      %v2746 = vor.u32 %v2744, %v2745
      %v2747 = vsub.s32 4294967266, %v2742
      %v2748 = vadd.s32 %v2747, 127
      %v2749 = vshll.u32 %v2748, 23
      %v2750 = vor.u32 4788187, %v2749
      %v2751 = vand.u32 2147483647, %v2750
      %v2753 = vcvt.s32.f32 %v2746
      %v2754 = vmul.f32 %v2753, %v2751
      %v2755 = vxor.u32 %v2754, 2147483648
      %v2756 = vsel %vm2673, %v2755, %v2754
      %v2757 = vsub.s32 4, %v2733
      %v2758 = vsel %vm2673, %v2757, %v2733
      %v2759 = vsel %vm2672, %v2409, %v2756
      %v2760 = vsel %vm2672, 0, %v2758
      %v2761 = vcosq.f32.pop %v2759
      %v2762 = vsinq.f32.pop %v2759
      %vm2763 = vweird.f32 %v2409
      %v2764 = vadd.s32 %v2760, 3
      %v2765 = vand.u32 %v2764, 3
      %vm2766 = vcmp.lt.s32.totalorder %v2765, 2
      %vm2767 = vcmp.eq.s32.totalorder %v2765, 0
      %v2768 = vxor.u32 %v2762, 2147483648
      %v2769 = vsel %vm2767, %v2761, %v2768
      %vm2770 = vcmp.eq.s32.totalorder %v2765, 2
      %v2771 = vxor.u32 %v2761, 2147483648
      %v2772 = vsel %vm2770, %v2771, %v2762
      %v2773 = vsel %vm2766, %v2769, %v2772
      %v2774 = vsel %vm2763, nan, %v2773
      %v2775 = vand.u32 2147483647, %v2412
      %vm2776 = vcmp.le.f32.partialorder %v2775, 0.7853982
      %vm2777 = vcmp.lt.s32.totalorder %v2412, 0
      %v2778 = vand.u32 %v2412, 2139095040
      %v2779 = vshrl.u32 %v2778, 23
      %v2780 = vsub.s32 %v2779, 127
      %v2781 = vand.u32 2147483647, %v2412
      %v2782 = vand.u32 %v2781, 8388607
      %v2783 = vor.u32 %v2782, 8388608
      %v2784 = vsub.s32 0, %v2783
      %v2785 = vadd.s32 %v2780, 1
      %vm2786 = vcmp.gt.s32.totalorder %v2785, 0
      %v2787 = vsel %vm2786, %v2785, 0
      %v2788 = vshrl.u32 %v2787, 5
      %v2789 = vand.u32 %v2787, 31
      %v2790 = vsub.s32 32, %v2789
      %v2791 = vshrl.u32 683565275, %v2790
      %v2792 = vshll.u32 683565275, %v2789
      %v2793 = vshrl.u32 2475754826, %v2790
      %v2794 = vor.u32 %v2792, %v2793
      %v2795 = vshll.u32 2475754826, %v2789
      %v2796 = vshrl.u32 2131351028, %v2790
      %v2797 = vor.u32 %v2795, %v2796
      %v2798 = vshll.u32 2131351028, %v2789
      %v2799 = vshrl.u32 2102212464, %v2790
      %v2800 = vor.u32 %v2798, %v2799
      %v2801 = vshll.u32 2102212464, %v2789
      %v2802 = vshrl.u32 920167782, %v2790
      %v2803 = vor.u32 %v2801, %v2802
      %v2804 = vshll.u32 920167782, %v2789
      %v2805 = vshrl.u32 1326507024, %v2790
      %v2806 = vor.u32 %v2804, %v2805
      %vm2807 = vcmp.lt.s32.totalorder %v2788, 1
      %vm2808 = vcmp.lt.s32.totalorder %v2788, 2
      %vm2809 = vcmp.lt.s32.totalorder %v2788, 3
      %vm2810 = vcmp.lt.s32.totalorder %v2788, 4
      %v2811 = vsel %vm2807, %v2791, %v2794
      %v2812 = vsel %vm2810, %v2800, 2102212464
      %v2813 = vsel %vm2809, %v2797, %v2812
      %v2814 = vsel %vm2808, %v2811, %v2813
      %v2815 = vsel %vm2807, %v2794, %v2797
      %v2816 = vsel %vm2810, %v2803, 920167782
      %v2817 = vsel %vm2809, %v2800, %v2816
      %v2818 = vsel %vm2808, %v2815, %v2817
      %v2819 = vsel %vm2807, %v2797, %v2800
      %v2820 = vsel %vm2810, %v2806, 1326507024
      %v2821 = vsel %vm2809, %v2803, %v2820
      %v2822 = vsel %vm2808, %v2819, %v2821
      %v2823 = vshll.u32 %v2783, 8
      %v2824 = vmul.u32.u64.compose %v2823, %v2822
      %v2825 = vextract.low.u32 %v2824
      %v2826 = vextract.high.u32 %v2824
      %v2827 = vmul.u32.u64.compose %v2823, %v2818
      %v2828 = vextract.low.u32 %v2827
      %v2829 = vextract.high.u32 %v2827
      %v2830 = vmul.u32 %v2823, %v2814
      %v2831 = vadd.s32 %v2826, %v2828
      %vm2832 = vc.u32 %v2826, %v2828
      %v2833 = vadd.s32 %v2829, 1
      %v2834 = vsel %vm2832, %v2833, %v2829
      %v2835 = vadd.s32 %v2830, %v2834
      %v2836 = vadd.s32 %v2835, 536870912
      %v2837 = vshrl.u32 %v2836, 30
      %v2838 = vshll.u32 %v2837, 30
      %v2839 = vsub.s32 %v2835, %v2838
      %vm2840 = vcmp.lt.s32.totalorder %v2839, 0
      %v2841 = vsub.s32 0, %v2839
      %v2842 = vsel %vm2840, %v2841, %v2839
      %v2843 = vclz %v2842
      %v2844 = vsub.s32 %v2843, 2
      %vm2845 = vcmp.gt.s32.totalorder 0, %v2844
      %v2846 = vsel %vm2845, 0, %v2844
      %v2847 = vsub.s32 32, %v2846
      %v2848 = vshll.u32 %v2839, %v2846
      %v2849 = vshrl.u32 %v2831, %v2847
      %v2850 = vor.u32 %v2848, %v2849
      %v2851 = vsub.s32 4294967266, %v2846
      %v2852 = vadd.s32 %v2851, 127
      %v2853 = vshll.u32 %v2852, 23
      %v2854 = vor.u32 4788187, %v2853
      %v2855 = vand.u32 2147483647, %v2854
      %v2857 = vcvt.s32.f32 %v2850
      %v2858 = vmul.f32 %v2857, %v2855
      %v2859 = vxor.u32 %v2858, 2147483648
      %v2860 = vsel %vm2777, %v2859, %v2858
      %v2861 = vsub.s32 4, %v2837
      %v2862 = vsel %vm2777, %v2861, %v2837
      %v2863 = vsel %vm2776, %v2412, %v2860
      %v2864 = vsel %vm2776, 0, %v2862
      %v2865 = vcosq.f32.pop %v2863
      %v2866 = vsinq.f32.pop %v2863
      %vm2867 = vweird.f32 %v2412
      %v2868 = vadd.s32 %v2864, 3
      %v2869 = vand.u32 %v2868, 3
      %vm2870 = vcmp.lt.s32.totalorder %v2869, 2
      %vm2871 = vcmp.eq.s32.totalorder %v2869, 0
      %v2872 = vxor.u32 %v2866, 2147483648
      %v2873 = vsel %vm2871, %v2865, %v2872
      %vm2874 = vcmp.eq.s32.totalorder %v2869, 2
      %v2875 = vxor.u32 %v2865, 2147483648
      %v2876 = vsel %vm2874, %v2875, %v2866
      %v2877 = vsel %vm2870, %v2873, %v2876
      %v2878 = vsel %vm2867, nan, %v2877
      %v2879 = vand.u32 2147483647, %v2417
      %vm2880 = vcmp.le.f32.partialorder %v2879, 0.7853982
      %vm2881 = vcmp.lt.s32.totalorder %v2417, 0
      %v2882 = vand.u32 %v2417, 2139095040
      %v2883 = vshrl.u32 %v2882, 23
      %v2884 = vsub.s32 %v2883, 127
      %v2885 = vand.u32 2147483647, %v2417
      %v2886 = vand.u32 %v2885, 8388607
      %v2887 = vor.u32 %v2886, 8388608
      %v2888 = vsub.s32 0, %v2887
      %v2889 = vadd.s32 %v2884, 1
      %vm2890 = vcmp.gt.s32.totalorder %v2889, 0
      %v2891 = vsel %vm2890, %v2889, 0
      %v2892 = vshrl.u32 %v2891, 5
      %v2893 = vand.u32 %v2891, 31
      %v2894 = vsub.s32 32, %v2893
      %v2895 = vshrl.u32 683565275, %v2894
      %v2896 = vshll.u32 683565275, %v2893
      %v2897 = vshrl.u32 2475754826, %v2894
      %v2898 = vor.u32 %v2896, %v2897
      %v2899 = vshll.u32 2475754826, %v2893
      %v2900 = vshrl.u32 2131351028, %v2894
      %v2901 = vor.u32 %v2899, %v2900
      %v2902 = vshll.u32 2131351028, %v2893
      %v2903 = vshrl.u32 2102212464, %v2894
      %v2904 = vor.u32 %v2902, %v2903
      %v2905 = vshll.u32 2102212464, %v2893
      %v2906 = vshrl.u32 920167782, %v2894
      %v2907 = vor.u32 %v2905, %v2906
      %v2908 = vshll.u32 920167782, %v2893
      %v2909 = vshrl.u32 1326507024, %v2894
      %v2910 = vor.u32 %v2908, %v2909
      %vm2911 = vcmp.lt.s32.totalorder %v2892, 1
      %vm2912 = vcmp.lt.s32.totalorder %v2892, 2
      %vm2913 = vcmp.lt.s32.totalorder %v2892, 3
      %vm2914 = vcmp.lt.s32.totalorder %v2892, 4
      %v2915 = vsel %vm2911, %v2895, %v2898
      %v2916 = vsel %vm2914, %v2904, 2102212464
      %v2917 = vsel %vm2913, %v2901, %v2916
      %v2918 = vsel %vm2912, %v2915, %v2917
      %v2919 = vsel %vm2911, %v2898, %v2901
      %v2920 = vsel %vm2914, %v2907, 920167782
      %v2921 = vsel %vm2913, %v2904, %v2920
      %v2922 = vsel %vm2912, %v2919, %v2921
      %v2923 = vsel %vm2911, %v2901, %v2904
      %v2924 = vsel %vm2914, %v2910, 1326507024
      %v2925 = vsel %vm2913, %v2907, %v2924
      %v2926 = vsel %vm2912, %v2923, %v2925
      %v2927 = vshll.u32 %v2887, 8
      %v2928 = vmul.u32.u64.compose %v2927, %v2926
      %v2929 = vextract.low.u32 %v2928
      %v2930 = vextract.high.u32 %v2928
      %v2931 = vmul.u32.u64.compose %v2927, %v2922
      %v2932 = vextract.low.u32 %v2931
      %v2933 = vextract.high.u32 %v2931
      %v2934 = vmul.u32 %v2927, %v2918
      %v2935 = vadd.s32 %v2930, %v2932
      %vm2936 = vc.u32 %v2930, %v2932
      %v2937 = vadd.s32 %v2933, 1
      %v2938 = vsel %vm2936, %v2937, %v2933
      %v2939 = vadd.s32 %v2934, %v2938
      %v2940 = vadd.s32 %v2939, 536870912
      %v2941 = vshrl.u32 %v2940, 30
      %v2942 = vshll.u32 %v2941, 30
      %v2943 = vsub.s32 %v2939, %v2942
      %vm2944 = vcmp.lt.s32.totalorder %v2943, 0
      %v2945 = vsub.s32 0, %v2943
      %v2946 = vsel %vm2944, %v2945, %v2943
      %v2947 = vclz %v2946
      %v2948 = vsub.s32 %v2947, 2
      %vm2949 = vcmp.gt.s32.totalorder 0, %v2948
      %v2950 = vsel %vm2949, 0, %v2948
      %v2951 = vsub.s32 32, %v2950
      %v2952 = vshll.u32 %v2943, %v2950
      %v2953 = vshrl.u32 %v2935, %v2951
      %v2954 = vor.u32 %v2952, %v2953
      %v2955 = vsub.s32 4294967266, %v2950
      %v2956 = vadd.s32 %v2955, 127
      %v2957 = vshll.u32 %v2956, 23
      %v2958 = vor.u32 4788187, %v2957
      %v2959 = vand.u32 2147483647, %v2958
      %v2961 = vcvt.s32.f32 %v2954
      %v2962 = vmul.f32 %v2961, %v2959
      %v2963 = vxor.u32 %v2962, 2147483648
      %v2964 = vsel %vm2881, %v2963, %v2962
      %v2965 = vsub.s32 4, %v2941
      %v2966 = vsel %vm2881, %v2965, %v2941
      %v2967 = vsel %vm2880, %v2417, %v2964
      %v2968 = vsel %vm2880, 0, %v2966
      %v2969 = vcosq.f32.pop %v2967
      %v2970 = vsinq.f32.pop %v2967
      %vm2971 = vweird.f32 %v2417
      %v2972 = vadd.s32 %v2968, 3
      %v2973 = vand.u32 %v2972, 3
      %vm2974 = vcmp.lt.s32.totalorder %v2973, 2
      %vm2975 = vcmp.eq.s32.totalorder %v2973, 0
      %v2976 = vxor.u32 %v2970, 2147483648
      %v2977 = vsel %vm2975, %v2969, %v2976
      %vm2978 = vcmp.eq.s32.totalorder %v2973, 2
      %v2979 = vxor.u32 %v2969, 2147483648
      %v2980 = vsel %vm2978, %v2979, %v2970
      %v2981 = vsel %vm2974, %v2977, %v2980
      %v2982 = vsel %vm2971, nan, %v2981
      %v2983 = vand.u32 2147483647, %v2420
      %vm2984 = vcmp.le.f32.partialorder %v2983, 0.7853982
      %vm2985 = vcmp.lt.s32.totalorder %v2420, 0
      %v2986 = vand.u32 %v2420, 2139095040
      %v2987 = vshrl.u32 %v2986, 23
      %v2988 = vsub.s32 %v2987, 127
      %v2989 = vand.u32 2147483647, %v2420
      %v2990 = vand.u32 %v2989, 8388607
      %v2991 = vor.u32 %v2990, 8388608
      %v2992 = vsub.s32 0, %v2991
      %v2993 = vadd.s32 %v2988, 1
      %vm2994 = vcmp.gt.s32.totalorder %v2993, 0
      %v2995 = vsel %vm2994, %v2993, 0
      %v2996 = vshrl.u32 %v2995, 5
      %v2997 = vand.u32 %v2995, 31
      %v2998 = vsub.s32 32, %v2997
      %v2999 = vshrl.u32 683565275, %v2998
      %v3000 = vshll.u32 683565275, %v2997
      %v3001 = vshrl.u32 2475754826, %v2998
      %v3002 = vor.u32 %v3000, %v3001
      %v3003 = vshll.u32 2475754826, %v2997
      %v3004 = vshrl.u32 2131351028, %v2998
      %v3005 = vor.u32 %v3003, %v3004
      %v3006 = vshll.u32 2131351028, %v2997
      %v3007 = vshrl.u32 2102212464, %v2998
      %v3008 = vor.u32 %v3006, %v3007
      %v3009 = vshll.u32 2102212464, %v2997
      %v3010 = vshrl.u32 920167782, %v2998
      %v3011 = vor.u32 %v3009, %v3010
      %v3012 = vshll.u32 920167782, %v2997
      %v3013 = vshrl.u32 1326507024, %v2998
      %v3014 = vor.u32 %v3012, %v3013
      %vm3015 = vcmp.lt.s32.totalorder %v2996, 1
      %vm3016 = vcmp.lt.s32.totalorder %v2996, 2
      %vm3017 = vcmp.lt.s32.totalorder %v2996, 3
      %vm3018 = vcmp.lt.s32.totalorder %v2996, 4
      %v3019 = vsel %vm3015, %v2999, %v3002
      %v3020 = vsel %vm3018, %v3008, 2102212464
      %v3021 = vsel %vm3017, %v3005, %v3020
      %v3022 = vsel %vm3016, %v3019, %v3021
      %v3023 = vsel %vm3015, %v3002, %v3005
      %v3024 = vsel %vm3018, %v3011, 920167782
      %v3025 = vsel %vm3017, %v3008, %v3024
      %v3026 = vsel %vm3016, %v3023, %v3025
      %v3027 = vsel %vm3015, %v3005, %v3008
      %v3028 = vsel %vm3018, %v3014, 1326507024
      %v3029 = vsel %vm3017, %v3011, %v3028
      %v3030 = vsel %vm3016, %v3027, %v3029
      %v3031 = vshll.u32 %v2991, 8
      %v3032 = vmul.u32.u64.compose %v3031, %v3030
      %v3033 = vextract.low.u32 %v3032
      %v3034 = vextract.high.u32 %v3032
      %v3035 = vmul.u32.u64.compose %v3031, %v3026
      %v3036 = vextract.low.u32 %v3035
      %v3037 = vextract.high.u32 %v3035
      %v3038 = vmul.u32 %v3031, %v3022
      %v3039 = vadd.s32 %v3034, %v3036
      %vm3040 = vc.u32 %v3034, %v3036
      %v3041 = vadd.s32 %v3037, 1
      %v3042 = vsel %vm3040, %v3041, %v3037
      %v3043 = vadd.s32 %v3038, %v3042
      %v3044 = vadd.s32 %v3043, 536870912
      %v3045 = vshrl.u32 %v3044, 30
      %v3046 = vshll.u32 %v3045, 30
      %v3047 = vsub.s32 %v3043, %v3046
      %vm3048 = vcmp.lt.s32.totalorder %v3047, 0
      %v3049 = vsub.s32 0, %v3047
      %v3050 = vsel %vm3048, %v3049, %v3047
      %v3051 = vclz %v3050
      %v3052 = vsub.s32 %v3051, 2
      %vm3053 = vcmp.gt.s32.totalorder 0, %v3052
      %v3054 = vsel %vm3053, 0, %v3052
      %v3055 = vsub.s32 32, %v3054
      %v3056 = vshll.u32 %v3047, %v3054
      %v3057 = vshrl.u32 %v3039, %v3055
      %v3058 = vor.u32 %v3056, %v3057
      %v3059 = vsub.s32 4294967266, %v3054
      %v3060 = vadd.s32 %v3059, 127
      %v3061 = vshll.u32 %v3060, 23
      %v3062 = vor.u32 4788187, %v3061
      %v3063 = vand.u32 2147483647, %v3062
      %v3065 = vcvt.s32.f32 %v3058
      %v3066 = vmul.f32 %v3065, %v3063
      %v3067 = vxor.u32 %v3066, 2147483648
      %v3068 = vsel %vm2985, %v3067, %v3066
      %v3069 = vsub.s32 4, %v3045
      %v3070 = vsel %vm2985, %v3069, %v3045
      %v3071 = vsel %vm2984, %v2420, %v3068
      %v3072 = vsel %vm2984, 0, %v3070
      %v3073 = vcosq.f32.pop %v3071
      %v3074 = vsinq.f32.pop %v3071
      %vm3075 = vweird.f32 %v2420
      %v3076 = vadd.s32 %v3072, 3
      %v3077 = vand.u32 %v3076, 3
      %vm3078 = vcmp.lt.s32.totalorder %v3077, 2
      %vm3079 = vcmp.eq.s32.totalorder %v3077, 0
      %v3080 = vxor.u32 %v3074, 2147483648
      %v3081 = vsel %vm3079, %v3073, %v3080
      %vm3082 = vcmp.eq.s32.totalorder %v3077, 2
      %v3083 = vxor.u32 %v3073, 2147483648
      %v3084 = vsel %vm3082, %v3083, %v3074
      %v3085 = vsel %vm3078, %v3081, %v3084
      %v3086 = vsel %vm3075, nan, %v3085
      %v3087 = vand.u32 2147483647, %v2425
      %vm3088 = vcmp.le.f32.partialorder %v3087, 0.7853982
      %vm3089 = vcmp.lt.s32.totalorder %v2425, 0
      %v3090 = vand.u32 %v2425, 2139095040
      %v3091 = vshrl.u32 %v3090, 23
      %v3092 = vsub.s32 %v3091, 127
      %v3093 = vand.u32 2147483647, %v2425
      %v3094 = vand.u32 %v3093, 8388607
      %v3095 = vor.u32 %v3094, 8388608
      %v3096 = vsub.s32 0, %v3095
      %v3097 = vadd.s32 %v3092, 1
      %vm3098 = vcmp.gt.s32.totalorder %v3097, 0
      %v3099 = vsel %vm3098, %v3097, 0
      %v3100 = vshrl.u32 %v3099, 5
      %v3101 = vand.u32 %v3099, 31
      %v3102 = vsub.s32 32, %v3101
      %v3103 = vshrl.u32 683565275, %v3102
      %v3104 = vshll.u32 683565275, %v3101
      %v3105 = vshrl.u32 2475754826, %v3102
      %v3106 = vor.u32 %v3104, %v3105
      %v3107 = vshll.u32 2475754826, %v3101
      %v3108 = vshrl.u32 2131351028, %v3102
      %v3109 = vor.u32 %v3107, %v3108
      %v3110 = vshll.u32 2131351028, %v3101
      %v3111 = vshrl.u32 2102212464, %v3102
      %v3112 = vor.u32 %v3110, %v3111
      %v3113 = vshll.u32 2102212464, %v3101
      %v3114 = vshrl.u32 920167782, %v3102
      %v3115 = vor.u32 %v3113, %v3114
      %v3116 = vshll.u32 920167782, %v3101
      %v3117 = vshrl.u32 1326507024, %v3102
      %v3118 = vor.u32 %v3116, %v3117
      %vm3119 = vcmp.lt.s32.totalorder %v3100, 1
      %vm3120 = vcmp.lt.s32.totalorder %v3100, 2
      %vm3121 = vcmp.lt.s32.totalorder %v3100, 3
      %vm3122 = vcmp.lt.s32.totalorder %v3100, 4
      %v3123 = vsel %vm3119, %v3103, %v3106
      %v3124 = vsel %vm3122, %v3112, 2102212464
      %v3125 = vsel %vm3121, %v3109, %v3124
      %v3126 = vsel %vm3120, %v3123, %v3125
      %v3127 = vsel %vm3119, %v3106, %v3109
      %v3128 = vsel %vm3122, %v3115, 920167782
      %v3129 = vsel %vm3121, %v3112, %v3128
      %v3130 = vsel %vm3120, %v3127, %v3129
      %v3131 = vsel %vm3119, %v3109, %v3112
      %v3132 = vsel %vm3122, %v3118, 1326507024
      %v3133 = vsel %vm3121, %v3115, %v3132
      %v3134 = vsel %vm3120, %v3131, %v3133
      %v3135 = vshll.u32 %v3095, 8
      %v3136 = vmul.u32.u64.compose %v3135, %v3134
      %v3137 = vextract.low.u32 %v3136
      %v3138 = vextract.high.u32 %v3136
      %v3139 = vmul.u32.u64.compose %v3135, %v3130
      %v3140 = vextract.low.u32 %v3139
      %v3141 = vextract.high.u32 %v3139
      %v3142 = vmul.u32 %v3135, %v3126
      %v3143 = vadd.s32 %v3138, %v3140
      %vm3144 = vc.u32 %v3138, %v3140
      %v3145 = vadd.s32 %v3141, 1
      %v3146 = vsel %vm3144, %v3145, %v3141
      %v3147 = vadd.s32 %v3142, %v3146
      %v3148 = vadd.s32 %v3147, 536870912
      %v3149 = vshrl.u32 %v3148, 30
      %v3150 = vshll.u32 %v3149, 30
      %v3151 = vsub.s32 %v3147, %v3150
      %vm3152 = vcmp.lt.s32.totalorder %v3151, 0
      %v3153 = vsub.s32 0, %v3151
      %v3154 = vsel %vm3152, %v3153, %v3151
      %v3155 = vclz %v3154
      %v3156 = vsub.s32 %v3155, 2
      %vm3157 = vcmp.gt.s32.totalorder 0, %v3156
      %v3158 = vsel %vm3157, 0, %v3156
      %v3159 = vsub.s32 32, %v3158
      %v3160 = vshll.u32 %v3151, %v3158
      %v3161 = vshrl.u32 %v3143, %v3159
      %v3162 = vor.u32 %v3160, %v3161
      %v3163 = vsub.s32 4294967266, %v3158
      %v3164 = vadd.s32 %v3163, 127
      %v3165 = vshll.u32 %v3164, 23
      %v3166 = vor.u32 4788187, %v3165
      %v3167 = vand.u32 2147483647, %v3166
      %v3169 = vcvt.s32.f32 %v3162
      %v3170 = vmul.f32 %v3169, %v3167
      %v3171 = vxor.u32 %v3170, 2147483648
      %v3172 = vsel %vm3089, %v3171, %v3170
      %v3173 = vsub.s32 4, %v3149
      %v3174 = vsel %vm3089, %v3173, %v3149
      %v3175 = vsel %vm3088, %v2425, %v3172
      %v3176 = vsel %vm3088, 0, %v3174
      %v3177 = vcosq.f32.pop %v3175
      %v3178 = vsinq.f32.pop %v3175
      %vm3179 = vweird.f32 %v2425
      %v3180 = vadd.s32 %v3176, 3
      %v3181 = vand.u32 %v3180, 3
      %vm3182 = vcmp.lt.s32.totalorder %v3181, 2
      %vm3183 = vcmp.eq.s32.totalorder %v3181, 0
      %v3184 = vxor.u32 %v3178, 2147483648
      %v3185 = vsel %vm3183, %v3177, %v3184
      %vm3186 = vcmp.eq.s32.totalorder %v3181, 2
      %v3187 = vxor.u32 %v3177, 2147483648
      %v3188 = vsel %vm3186, %v3187, %v3178
      %v3189 = vsel %vm3182, %v3185, %v3188
      %v3190 = vsel %vm3179, nan, %v3189
      %v3191 = vand.u32 2147483647, %v2428
      %vm3192 = vcmp.le.f32.partialorder %v3191, 0.7853982
      %vm3193 = vcmp.lt.s32.totalorder %v2428, 0
      %v3194 = vand.u32 %v2428, 2139095040
      %v3195 = vshrl.u32 %v3194, 23
      %v3196 = vsub.s32 %v3195, 127
      %v3197 = vand.u32 2147483647, %v2428
      %v3198 = vand.u32 %v3197, 8388607
      %v3199 = vor.u32 %v3198, 8388608
      %v3200 = vsub.s32 0, %v3199
      %v3201 = vadd.s32 %v3196, 1
      %vm3202 = vcmp.gt.s32.totalorder %v3201, 0
      %v3203 = vsel %vm3202, %v3201, 0
      %v3204 = vshrl.u32 %v3203, 5
      %v3205 = vand.u32 %v3203, 31
      %v3206 = vsub.s32 32, %v3205
      %v3207 = vshrl.u32 683565275, %v3206
      %v3208 = vshll.u32 683565275, %v3205
      %v3209 = vshrl.u32 2475754826, %v3206
      %v3210 = vor.u32 %v3208, %v3209
      %v3211 = vshll.u32 2475754826, %v3205
      %v3212 = vshrl.u32 2131351028, %v3206
      %v3213 = vor.u32 %v3211, %v3212
      %v3214 = vshll.u32 2131351028, %v3205
      %v3215 = vshrl.u32 2102212464, %v3206
      %v3216 = vor.u32 %v3214, %v3215
      %v3217 = vshll.u32 2102212464, %v3205
      %v3218 = vshrl.u32 920167782, %v3206
      %v3219 = vor.u32 %v3217, %v3218
      %v3220 = vshll.u32 920167782, %v3205
      %v3221 = vshrl.u32 1326507024, %v3206
      %v3222 = vor.u32 %v3220, %v3221
      %vm3223 = vcmp.lt.s32.totalorder %v3204, 1
      %vm3224 = vcmp.lt.s32.totalorder %v3204, 2
      %vm3225 = vcmp.lt.s32.totalorder %v3204, 3
      %vm3226 = vcmp.lt.s32.totalorder %v3204, 4
      %v3227 = vsel %vm3223, %v3207, %v3210
      %v3228 = vsel %vm3226, %v3216, 2102212464
      %v3229 = vsel %vm3225, %v3213, %v3228
      %v3230 = vsel %vm3224, %v3227, %v3229
      %v3231 = vsel %vm3223, %v3210, %v3213
      %v3232 = vsel %vm3226, %v3219, 920167782
      %v3233 = vsel %vm3225, %v3216, %v3232
      %v3234 = vsel %vm3224, %v3231, %v3233
      %v3235 = vsel %vm3223, %v3213, %v3216
      %v3236 = vsel %vm3226, %v3222, 1326507024
      %v3237 = vsel %vm3225, %v3219, %v3236
      %v3238 = vsel %vm3224, %v3235, %v3237
      %v3239 = vshll.u32 %v3199, 8
      %v3240 = vmul.u32.u64.compose %v3239, %v3238
      %v3241 = vextract.low.u32 %v3240
      %v3242 = vextract.high.u32 %v3240
      %v3243 = vmul.u32.u64.compose %v3239, %v3234
      %v3244 = vextract.low.u32 %v3243
      %v3245 = vextract.high.u32 %v3243
      %v3246 = vmul.u32 %v3239, %v3230
      %v3247 = vadd.s32 %v3242, %v3244
      %vm3248 = vc.u32 %v3242, %v3244
      %v3249 = vadd.s32 %v3245, 1
      %v3250 = vsel %vm3248, %v3249, %v3245
      %v3251 = vadd.s32 %v3246, %v3250
      %v3252 = vadd.s32 %v3251, 536870912
      %v3253 = vshrl.u32 %v3252, 30
      %v3254 = vshll.u32 %v3253, 30
      %v3255 = vsub.s32 %v3251, %v3254
      %vm3256 = vcmp.lt.s32.totalorder %v3255, 0
      %v3257 = vsub.s32 0, %v3255
      %v3258 = vsel %vm3256, %v3257, %v3255
      %v3259 = vclz %v3258
      %v3260 = vsub.s32 %v3259, 2
      %vm3261 = vcmp.gt.s32.totalorder 0, %v3260
      %v3262 = vsel %vm3261, 0, %v3260
      %v3263 = vsub.s32 32, %v3262
      %v3264 = vshll.u32 %v3255, %v3262
      %v3265 = vshrl.u32 %v3247, %v3263
      %v3266 = vor.u32 %v3264, %v3265
      %v3267 = vsub.s32 4294967266, %v3262
      %v3268 = vadd.s32 %v3267, 127
      %v3269 = vshll.u32 %v3268, 23
      %v3270 = vor.u32 4788187, %v3269
      %v3271 = vand.u32 2147483647, %v3270
      %v3273 = vcvt.s32.f32 %v3266
      %v3274 = vmul.f32 %v3273, %v3271
      %v3275 = vxor.u32 %v3274, 2147483648
      %v3276 = vsel %vm3193, %v3275, %v3274
      %v3277 = vsub.s32 4, %v3253
      %v3278 = vsel %vm3193, %v3277, %v3253
      %v3279 = vsel %vm3192, %v2428, %v3276
      %v3280 = vsel %vm3192, 0, %v3278
      %v3281 = vcosq.f32.pop %v3279
      %v3282 = vsinq.f32.pop %v3279
      %vm3283 = vweird.f32 %v2428
      %v3284 = vadd.s32 %v3280, 3
      %v3285 = vand.u32 %v3284, 3
      %vm3286 = vcmp.lt.s32.totalorder %v3285, 2
      %vm3287 = vcmp.eq.s32.totalorder %v3285, 0
      %v3288 = vxor.u32 %v3282, 2147483648
      %v3289 = vsel %vm3287, %v3281, %v3288
      %vm3290 = vcmp.eq.s32.totalorder %v3285, 2
      %v3291 = vxor.u32 %v3281, 2147483648
      %v3292 = vsel %vm3290, %v3291, %v3282
      %v3293 = vsel %vm3286, %v3289, %v3292
      %v3294 = vsel %vm3283, nan, %v3293
      %v3295 = vand.u32 2147483647, %v2433
      %vm3296 = vcmp.le.f32.partialorder %v3295, 0.7853982
      %vm3297 = vcmp.lt.s32.totalorder %v2433, 0
      %v3298 = vand.u32 %v2433, 2139095040
      %v3299 = vshrl.u32 %v3298, 23
      %v3300 = vsub.s32 %v3299, 127
      %v3301 = vand.u32 2147483647, %v2433
      %v3302 = vand.u32 %v3301, 8388607
      %v3303 = vor.u32 %v3302, 8388608
      %v3304 = vsub.s32 0, %v3303
      %v3305 = vadd.s32 %v3300, 1
      %vm3306 = vcmp.gt.s32.totalorder %v3305, 0
      %v3307 = vsel %vm3306, %v3305, 0
      %v3308 = vshrl.u32 %v3307, 5
      %v3309 = vand.u32 %v3307, 31
      %v3310 = vsub.s32 32, %v3309
      %v3311 = vshrl.u32 683565275, %v3310
      %v3312 = vshll.u32 683565275, %v3309
      %v3313 = vshrl.u32 2475754826, %v3310
      %v3314 = vor.u32 %v3312, %v3313
      %v3315 = vshll.u32 2475754826, %v3309
      %v3316 = vshrl.u32 2131351028, %v3310
      %v3317 = vor.u32 %v3315, %v3316
      %v3318 = vshll.u32 2131351028, %v3309
      %v3319 = vshrl.u32 2102212464, %v3310
      %v3320 = vor.u32 %v3318, %v3319
      %v3321 = vshll.u32 2102212464, %v3309
      %v3322 = vshrl.u32 920167782, %v3310
      %v3323 = vor.u32 %v3321, %v3322
      %v3324 = vshll.u32 920167782, %v3309
      %v3325 = vshrl.u32 1326507024, %v3310
      %v3326 = vor.u32 %v3324, %v3325
      %vm3327 = vcmp.lt.s32.totalorder %v3308, 1
      %vm3328 = vcmp.lt.s32.totalorder %v3308, 2
      %vm3329 = vcmp.lt.s32.totalorder %v3308, 3
      %vm3330 = vcmp.lt.s32.totalorder %v3308, 4
      %v3331 = vsel %vm3327, %v3311, %v3314
      %v3332 = vsel %vm3330, %v3320, 2102212464
      %v3333 = vsel %vm3329, %v3317, %v3332
      %v3334 = vsel %vm3328, %v3331, %v3333
      %v3335 = vsel %vm3327, %v3314, %v3317
      %v3336 = vsel %vm3330, %v3323, 920167782
      %v3337 = vsel %vm3329, %v3320, %v3336
      %v3338 = vsel %vm3328, %v3335, %v3337
      %v3339 = vsel %vm3327, %v3317, %v3320
      %v3340 = vsel %vm3330, %v3326, 1326507024
      %v3341 = vsel %vm3329, %v3323, %v3340
      %v3342 = vsel %vm3328, %v3339, %v3341
      %v3343 = vshll.u32 %v3303, 8
      %v3344 = vmul.u32.u64.compose %v3343, %v3342
      %v3345 = vextract.low.u32 %v3344
      %v3346 = vextract.high.u32 %v3344
      %v3347 = vmul.u32.u64.compose %v3343, %v3338
      %v3348 = vextract.low.u32 %v3347
      %v3349 = vextract.high.u32 %v3347
      %v3350 = vmul.u32 %v3343, %v3334
      %v3351 = vadd.s32 %v3346, %v3348
      %vm3352 = vc.u32 %v3346, %v3348
      %v3353 = vadd.s32 %v3349, 1
      %v3354 = vsel %vm3352, %v3353, %v3349
      %v3355 = vadd.s32 %v3350, %v3354
      %v3356 = vadd.s32 %v3355, 536870912
      %v3357 = vshrl.u32 %v3356, 30
      %v3358 = vshll.u32 %v3357, 30
      %v3359 = vsub.s32 %v3355, %v3358
      %vm3360 = vcmp.lt.s32.totalorder %v3359, 0
      %v3361 = vsub.s32 0, %v3359
      %v3362 = vsel %vm3360, %v3361, %v3359
      %v3363 = vclz %v3362
      %v3364 = vsub.s32 %v3363, 2
      %vm3365 = vcmp.gt.s32.totalorder 0, %v3364
      %v3366 = vsel %vm3365, 0, %v3364
      %v3367 = vsub.s32 32, %v3366
      %v3368 = vshll.u32 %v3359, %v3366
      %v3369 = vshrl.u32 %v3351, %v3367
      %v3370 = vor.u32 %v3368, %v3369
      %v3371 = vsub.s32 4294967266, %v3366
      %v3372 = vadd.s32 %v3371, 127
      %v3373 = vshll.u32 %v3372, 23
      %v3374 = vor.u32 4788187, %v3373
      %v3375 = vand.u32 2147483647, %v3374
      %v3377 = vcvt.s32.f32 %v3370
      %v3378 = vmul.f32 %v3377, %v3375
      %v3379 = vxor.u32 %v3378, 2147483648
      %v3380 = vsel %vm3297, %v3379, %v3378
      %v3381 = vsub.s32 4, %v3357
      %v3382 = vsel %vm3297, %v3381, %v3357
      %v3383 = vsel %vm3296, %v2433, %v3380
      %v3384 = vsel %vm3296, 0, %v3382
      %v3385 = vcosq.f32.pop %v3383
      %v3386 = vsinq.f32.pop %v3383
      %vm3387 = vweird.f32 %v2433
      %v3388 = vadd.s32 %v3384, 3
      %v3389 = vand.u32 %v3388, 3
      %vm3390 = vcmp.lt.s32.totalorder %v3389, 2
      %vm3391 = vcmp.eq.s32.totalorder %v3389, 0
      %v3392 = vxor.u32 %v3386, 2147483648
      %v3393 = vsel %vm3391, %v3385, %v3392
      %vm3394 = vcmp.eq.s32.totalorder %v3389, 2
      %v3395 = vxor.u32 %v3385, 2147483648
      %v3396 = vsel %vm3394, %v3395, %v3386
      %v3397 = vsel %vm3390, %v3393, %v3396
      %v3398 = vsel %vm3387, nan, %v3397
      %v3399 = vand.u32 2147483647, %v2436
      %vm3400 = vcmp.le.f32.partialorder %v3399, 0.7853982
      %vm3401 = vcmp.lt.s32.totalorder %v2436, 0
      %v3402 = vand.u32 %v2436, 2139095040
      %v3403 = vshrl.u32 %v3402, 23
      %v3404 = vsub.s32 %v3403, 127
      %v3405 = vand.u32 2147483647, %v2436
      %v3406 = vand.u32 %v3405, 8388607
      %v3407 = vor.u32 %v3406, 8388608
      %v3408 = vsub.s32 0, %v3407
      %v3409 = vadd.s32 %v3404, 1
      %vm3410 = vcmp.gt.s32.totalorder %v3409, 0
      %v3411 = vsel %vm3410, %v3409, 0
      %v3412 = vshrl.u32 %v3411, 5
      %v3413 = vand.u32 %v3411, 31
      %v3414 = vsub.s32 32, %v3413
      %v3415 = vshrl.u32 683565275, %v3414
      %v3416 = vshll.u32 683565275, %v3413
      %v3417 = vshrl.u32 2475754826, %v3414
      %v3418 = vor.u32 %v3416, %v3417
      %v3419 = vshll.u32 2475754826, %v3413
      %v3420 = vshrl.u32 2131351028, %v3414
      %v3421 = vor.u32 %v3419, %v3420
      %v3422 = vshll.u32 2131351028, %v3413
      %v3423 = vshrl.u32 2102212464, %v3414
      %v3424 = vor.u32 %v3422, %v3423
      %v3425 = vshll.u32 2102212464, %v3413
      %v3426 = vshrl.u32 920167782, %v3414
      %v3427 = vor.u32 %v3425, %v3426
      %v3428 = vshll.u32 920167782, %v3413
      %v3429 = vshrl.u32 1326507024, %v3414
      %v3430 = vor.u32 %v3428, %v3429
      %vm3431 = vcmp.lt.s32.totalorder %v3412, 1
      %vm3432 = vcmp.lt.s32.totalorder %v3412, 2
      %vm3433 = vcmp.lt.s32.totalorder %v3412, 3
      %vm3434 = vcmp.lt.s32.totalorder %v3412, 4
      %v3435 = vsel %vm3431, %v3415, %v3418
      %v3436 = vsel %vm3434, %v3424, 2102212464
      %v3437 = vsel %vm3433, %v3421, %v3436
      %v3438 = vsel %vm3432, %v3435, %v3437
      %v3439 = vsel %vm3431, %v3418, %v3421
      %v3440 = vsel %vm3434, %v3427, 920167782
      %v3441 = vsel %vm3433, %v3424, %v3440
      %v3442 = vsel %vm3432, %v3439, %v3441
      %v3443 = vsel %vm3431, %v3421, %v3424
      %v3444 = vsel %vm3434, %v3430, 1326507024
      %v3445 = vsel %vm3433, %v3427, %v3444
      %v3446 = vsel %vm3432, %v3443, %v3445
      %v3447 = vshll.u32 %v3407, 8
      %v3448 = vmul.u32.u64.compose %v3447, %v3446
      %v3449 = vextract.low.u32 %v3448
      %v3450 = vextract.high.u32 %v3448
      %v3451 = vmul.u32.u64.compose %v3447, %v3442
      %v3452 = vextract.low.u32 %v3451
      %v3453 = vextract.high.u32 %v3451
      %v3454 = vmul.u32 %v3447, %v3438
      %v3455 = vadd.s32 %v3450, %v3452
      %vm3456 = vc.u32 %v3450, %v3452
      %v3457 = vadd.s32 %v3453, 1
      %v3458 = vsel %vm3456, %v3457, %v3453
      %v3459 = vadd.s32 %v3454, %v3458
      %v3460 = vadd.s32 %v3459, 536870912
      %v3461 = vshrl.u32 %v3460, 30
      %v3462 = vshll.u32 %v3461, 30
      %v3463 = vsub.s32 %v3459, %v3462
      %vm3464 = vcmp.lt.s32.totalorder %v3463, 0
      %v3465 = vsub.s32 0, %v3463
      %v3466 = vsel %vm3464, %v3465, %v3463
      %v3467 = vclz %v3466
      %v3468 = vsub.s32 %v3467, 2
      %vm3469 = vcmp.gt.s32.totalorder 0, %v3468
      %v3470 = vsel %vm3469, 0, %v3468
      %v3471 = vsub.s32 32, %v3470
      %v3472 = vshll.u32 %v3463, %v3470
      %v3473 = vshrl.u32 %v3455, %v3471
      %v3474 = vor.u32 %v3472, %v3473
      %v3475 = vsub.s32 4294967266, %v3470
      %v3476 = vadd.s32 %v3475, 127
      %v3477 = vshll.u32 %v3476, 23
      %v3478 = vor.u32 4788187, %v3477
      %v3479 = vand.u32 2147483647, %v3478
      %v3481 = vcvt.s32.f32 %v3474
      %v3482 = vmul.f32 %v3481, %v3479
      %v3483 = vxor.u32 %v3482, 2147483648
      %v3484 = vsel %vm3401, %v3483, %v3482
      %v3485 = vsub.s32 4, %v3461
      %v3486 = vsel %vm3401, %v3485, %v3461
      %v3487 = vsel %vm3400, %v2436, %v3484
      %v3488 = vsel %vm3400, 0, %v3486
      %v3489 = vcosq.f32.pop %v3487
      %v3490 = vsinq.f32.pop %v3487
      %vm3491 = vweird.f32 %v2436
      %v3492 = vadd.s32 %v3488, 3
      %v3493 = vand.u32 %v3492, 3
      %vm3494 = vcmp.lt.s32.totalorder %v3493, 2
      %vm3495 = vcmp.eq.s32.totalorder %v3493, 0
      %v3496 = vxor.u32 %v3490, 2147483648
      %v3497 = vsel %vm3495, %v3489, %v3496
      %vm3498 = vcmp.eq.s32.totalorder %v3493, 2
      %v3499 = vxor.u32 %v3489, 2147483648
      %v3500 = vsel %vm3498, %v3499, %v3490
      %v3501 = vsel %vm3494, %v3497, %v3500
      %v3502 = vsel %vm3491, nan, %v3501
      %v3503 = vand.u32 2147483647, %v2441
      %vm3504 = vcmp.le.f32.partialorder %v3503, 0.7853982
      %vm3505 = vcmp.lt.s32.totalorder %v2441, 0
      %v3506 = vand.u32 %v2441, 2139095040
      %v3507 = vshrl.u32 %v3506, 23
      %v3508 = vsub.s32 %v3507, 127
      %v3509 = vand.u32 2147483647, %v2441
      %v3510 = vand.u32 %v3509, 8388607
      %v3511 = vor.u32 %v3510, 8388608
      %v3512 = vsub.s32 0, %v3511
      %v3513 = vadd.s32 %v3508, 1
      %vm3514 = vcmp.gt.s32.totalorder %v3513, 0
      %v3515 = vsel %vm3514, %v3513, 0
      %v3516 = vshrl.u32 %v3515, 5
      %v3517 = vand.u32 %v3515, 31
      %v3518 = vsub.s32 32, %v3517
      %v3519 = vshrl.u32 683565275, %v3518
      %v3520 = vshll.u32 683565275, %v3517
      %v3521 = vshrl.u32 2475754826, %v3518
      %v3522 = vor.u32 %v3520, %v3521
      %v3523 = vshll.u32 2475754826, %v3517
      %v3524 = vshrl.u32 2131351028, %v3518
      %v3525 = vor.u32 %v3523, %v3524
      %v3526 = vshll.u32 2131351028, %v3517
      %v3527 = vshrl.u32 2102212464, %v3518
      %v3528 = vor.u32 %v3526, %v3527
      %v3529 = vshll.u32 2102212464, %v3517
      %v3530 = vshrl.u32 920167782, %v3518
      %v3531 = vor.u32 %v3529, %v3530
      %v3532 = vshll.u32 920167782, %v3517
      %v3533 = vshrl.u32 1326507024, %v3518
      %v3534 = vor.u32 %v3532, %v3533
      %vm3535 = vcmp.lt.s32.totalorder %v3516, 1
      %vm3536 = vcmp.lt.s32.totalorder %v3516, 2
      %vm3537 = vcmp.lt.s32.totalorder %v3516, 3
      %vm3538 = vcmp.lt.s32.totalorder %v3516, 4
      %v3539 = vsel %vm3535, %v3519, %v3522
      %v3540 = vsel %vm3538, %v3528, 2102212464
      %v3541 = vsel %vm3537, %v3525, %v3540
      %v3542 = vsel %vm3536, %v3539, %v3541
      %v3543 = vsel %vm3535, %v3522, %v3525
      %v3544 = vsel %vm3538, %v3531, 920167782
      %v3545 = vsel %vm3537, %v3528, %v3544
      %v3546 = vsel %vm3536, %v3543, %v3545
      %v3547 = vsel %vm3535, %v3525, %v3528
      %v3548 = vsel %vm3538, %v3534, 1326507024
      %v3549 = vsel %vm3537, %v3531, %v3548
      %v3550 = vsel %vm3536, %v3547, %v3549
      %v3551 = vshll.u32 %v3511, 8
      %v3552 = vmul.u32.u64.compose %v3551, %v3550
      %v3553 = vextract.low.u32 %v3552
      %v3554 = vextract.high.u32 %v3552
      %v3555 = vmul.u32.u64.compose %v3551, %v3546
      %v3556 = vextract.low.u32 %v3555
      %v3557 = vextract.high.u32 %v3555
      %v3558 = vmul.u32 %v3551, %v3542
      %v3559 = vadd.s32 %v3554, %v3556
      %vm3560 = vc.u32 %v3554, %v3556
      %v3561 = vadd.s32 %v3557, 1
      %v3562 = vsel %vm3560, %v3561, %v3557
      %v3563 = vadd.s32 %v3558, %v3562
      %v3564 = vadd.s32 %v3563, 536870912
      %v3565 = vshrl.u32 %v3564, 30
      %v3566 = vshll.u32 %v3565, 30
      %v3567 = vsub.s32 %v3563, %v3566
      %vm3568 = vcmp.lt.s32.totalorder %v3567, 0
      %v3569 = vsub.s32 0, %v3567
      %v3570 = vsel %vm3568, %v3569, %v3567
      %v3571 = vclz %v3570
      %v3572 = vsub.s32 %v3571, 2
      %vm3573 = vcmp.gt.s32.totalorder 0, %v3572
      %v3574 = vsel %vm3573, 0, %v3572
      %v3575 = vsub.s32 32, %v3574
      %v3576 = vshll.u32 %v3567, %v3574
      %v3577 = vshrl.u32 %v3559, %v3575
      %v3578 = vor.u32 %v3576, %v3577
      %v3579 = vsub.s32 4294967266, %v3574
      %v3580 = vadd.s32 %v3579, 127
      %v3581 = vshll.u32 %v3580, 23
      %v3582 = vor.u32 4788187, %v3581
      %v3583 = vand.u32 2147483647, %v3582
      %v3585 = vcvt.s32.f32 %v3578
      %v3586 = vmul.f32 %v3585, %v3583
      %v3587 = vxor.u32 %v3586, 2147483648
      %v3588 = vsel %vm3505, %v3587, %v3586
      %v3589 = vsub.s32 4, %v3565
      %v3590 = vsel %vm3505, %v3589, %v3565
      %v3591 = vsel %vm3504, %v2441, %v3588
      %v3592 = vsel %vm3504, 0, %v3590
      %v3593 = vcosq.f32.pop %v3591
      %v3594 = vsinq.f32.pop %v3591
      %vm3595 = vweird.f32 %v2441
      %v3596 = vadd.s32 %v3592, 3
      %v3597 = vand.u32 %v3596, 3
      %vm3598 = vcmp.lt.s32.totalorder %v3597, 2
      %vm3599 = vcmp.eq.s32.totalorder %v3597, 0
      %v3600 = vxor.u32 %v3594, 2147483648
      %v3601 = vsel %vm3599, %v3593, %v3600
      %vm3602 = vcmp.eq.s32.totalorder %v3597, 2
      %v3603 = vxor.u32 %v3593, 2147483648
      %v3604 = vsel %vm3602, %v3603, %v3594
      %v3605 = vsel %vm3598, %v3601, %v3604
      %v3606 = vsel %vm3595, nan, %v3605
      %v3607 = vand.u32 2147483647, %v2444
      %vm3608 = vcmp.le.f32.partialorder %v3607, 0.7853982
      %vm3609 = vcmp.lt.s32.totalorder %v2444, 0
      %v3610 = vand.u32 %v2444, 2139095040
      %v3611 = vshrl.u32 %v3610, 23
      %v3612 = vsub.s32 %v3611, 127
      %v3613 = vand.u32 2147483647, %v2444
      %v3614 = vand.u32 %v3613, 8388607
      %v3615 = vor.u32 %v3614, 8388608
      %v3616 = vsub.s32 0, %v3615
      %v3617 = vadd.s32 %v3612, 1
      %vm3618 = vcmp.gt.s32.totalorder %v3617, 0
      %v3619 = vsel %vm3618, %v3617, 0
      %v3620 = vshrl.u32 %v3619, 5
      %v3621 = vand.u32 %v3619, 31
      %v3622 = vsub.s32 32, %v3621
      %v3623 = vshrl.u32 683565275, %v3622
      %v3624 = vshll.u32 683565275, %v3621
      %v3625 = vshrl.u32 2475754826, %v3622
      %v3626 = vor.u32 %v3624, %v3625
      %v3627 = vshll.u32 2475754826, %v3621
      %v3628 = vshrl.u32 2131351028, %v3622
      %v3629 = vor.u32 %v3627, %v3628
      %v3630 = vshll.u32 2131351028, %v3621
      %v3631 = vshrl.u32 2102212464, %v3622
      %v3632 = vor.u32 %v3630, %v3631
      %v3633 = vshll.u32 2102212464, %v3621
      %v3634 = vshrl.u32 920167782, %v3622
      %v3635 = vor.u32 %v3633, %v3634
      %v3636 = vshll.u32 920167782, %v3621
      %v3637 = vshrl.u32 1326507024, %v3622
      %v3638 = vor.u32 %v3636, %v3637
      %vm3639 = vcmp.lt.s32.totalorder %v3620, 1
      %vm3640 = vcmp.lt.s32.totalorder %v3620, 2
      %vm3641 = vcmp.lt.s32.totalorder %v3620, 3
      %vm3642 = vcmp.lt.s32.totalorder %v3620, 4
      %v3643 = vsel %vm3639, %v3623, %v3626
      %v3644 = vsel %vm3642, %v3632, 2102212464
      %v3645 = vsel %vm3641, %v3629, %v3644
      %v3646 = vsel %vm3640, %v3643, %v3645
      %v3647 = vsel %vm3639, %v3626, %v3629
      %v3648 = vsel %vm3642, %v3635, 920167782
      %v3649 = vsel %vm3641, %v3632, %v3648
      %v3650 = vsel %vm3640, %v3647, %v3649
      %v3651 = vsel %vm3639, %v3629, %v3632
      %v3652 = vsel %vm3642, %v3638, 1326507024
      %v3653 = vsel %vm3641, %v3635, %v3652
      %v3654 = vsel %vm3640, %v3651, %v3653
      %v3655 = vshll.u32 %v3615, 8
      %v3656 = vmul.u32.u64.compose %v3655, %v3654
      %v3657 = vextract.low.u32 %v3656
      %v3658 = vextract.high.u32 %v3656
      %v3659 = vmul.u32.u64.compose %v3655, %v3650
      %v3660 = vextract.low.u32 %v3659
      %v3661 = vextract.high.u32 %v3659
      %v3662 = vmul.u32 %v3655, %v3646
      %v3663 = vadd.s32 %v3658, %v3660
      %vm3664 = vc.u32 %v3658, %v3660
      %v3665 = vadd.s32 %v3661, 1
      %v3666 = vsel %vm3664, %v3665, %v3661
      %v3667 = vadd.s32 %v3662, %v3666
      %v3668 = vadd.s32 %v3667, 536870912
      %v3669 = vshrl.u32 %v3668, 30
      %v3670 = vshll.u32 %v3669, 30
      %v3671 = vsub.s32 %v3667, %v3670
      %vm3672 = vcmp.lt.s32.totalorder %v3671, 0
      %v3673 = vsub.s32 0, %v3671
      %v3674 = vsel %vm3672, %v3673, %v3671
      %v3675 = vclz %v3674
      %v3676 = vsub.s32 %v3675, 2
      %vm3677 = vcmp.gt.s32.totalorder 0, %v3676
      %v3678 = vsel %vm3677, 0, %v3676
      %v3679 = vsub.s32 32, %v3678
      %v3680 = vshll.u32 %v3671, %v3678
      %v3681 = vshrl.u32 %v3663, %v3679
      %v3682 = vor.u32 %v3680, %v3681
      %v3683 = vsub.s32 4294967266, %v3678
      %v3684 = vadd.s32 %v3683, 127
      %v3685 = vshll.u32 %v3684, 23
      %v3686 = vor.u32 4788187, %v3685
      %v3687 = vand.u32 2147483647, %v3686
      %v3689 = vcvt.s32.f32 %v3682
      %v3690 = vmul.f32 %v3689, %v3687
      %v3691 = vxor.u32 %v3690, 2147483648
      %v3692 = vsel %vm3609, %v3691, %v3690
      %v3693 = vsub.s32 4, %v3669
      %v3694 = vsel %vm3609, %v3693, %v3669
      %v3695 = vsel %vm3608, %v2444, %v3692
      %v3696 = vsel %vm3608, 0, %v3694
      %v3697 = vcosq.f32.pop %v3695
      %v3698 = vsinq.f32.pop %v3695
      %vm3699 = vweird.f32 %v2444
      %v3700 = vadd.s32 %v3696, 3
      %v3701 = vand.u32 %v3700, 3
      %vm3702 = vcmp.lt.s32.totalorder %v3701, 2
      %vm3703 = vcmp.eq.s32.totalorder %v3701, 0
      %v3704 = vxor.u32 %v3698, 2147483648
      %v3705 = vsel %vm3703, %v3697, %v3704
      %vm3706 = vcmp.eq.s32.totalorder %v3701, 2
      %v3707 = vxor.u32 %v3697, 2147483648
      %v3708 = vsel %vm3706, %v3707, %v3698
      %v3709 = vsel %vm3702, %v3705, %v3708
      %v3710 = vsel %vm3699, nan, %v3709
      %v3711 = vand.u32 2147483647, %v2449
      %vm3712 = vcmp.le.f32.partialorder %v3711, 0.7853982
      %vm3713 = vcmp.lt.s32.totalorder %v2449, 0
      %v3714 = vand.u32 %v2449, 2139095040
      %v3715 = vshrl.u32 %v3714, 23
      %v3716 = vsub.s32 %v3715, 127
      %v3717 = vand.u32 2147483647, %v2449
      %v3718 = vand.u32 %v3717, 8388607
      %v3719 = vor.u32 %v3718, 8388608
      %v3720 = vsub.s32 0, %v3719
      %v3721 = vadd.s32 %v3716, 1
      %vm3722 = vcmp.gt.s32.totalorder %v3721, 0
      %v3723 = vsel %vm3722, %v3721, 0
      %v3724 = vshrl.u32 %v3723, 5
      %v3725 = vand.u32 %v3723, 31
      %v3726 = vsub.s32 32, %v3725
      %v3727 = vshrl.u32 683565275, %v3726
      %v3728 = vshll.u32 683565275, %v3725
      %v3729 = vshrl.u32 2475754826, %v3726
      %v3730 = vor.u32 %v3728, %v3729
      %v3731 = vshll.u32 2475754826, %v3725
      %v3732 = vshrl.u32 2131351028, %v3726
      %v3733 = vor.u32 %v3731, %v3732
      %v3734 = vshll.u32 2131351028, %v3725
      %v3735 = vshrl.u32 2102212464, %v3726
      %v3736 = vor.u32 %v3734, %v3735
      %v3737 = vshll.u32 2102212464, %v3725
      %v3738 = vshrl.u32 920167782, %v3726
      %v3739 = vor.u32 %v3737, %v3738
      %v3740 = vshll.u32 920167782, %v3725
      %v3741 = vshrl.u32 1326507024, %v3726
      %v3742 = vor.u32 %v3740, %v3741
      %vm3743 = vcmp.lt.s32.totalorder %v3724, 1
      %vm3744 = vcmp.lt.s32.totalorder %v3724, 2
      %vm3745 = vcmp.lt.s32.totalorder %v3724, 3
      %vm3746 = vcmp.lt.s32.totalorder %v3724, 4
      %v3747 = vsel %vm3743, %v3727, %v3730
      %v3748 = vsel %vm3746, %v3736, 2102212464
      %v3749 = vsel %vm3745, %v3733, %v3748
      %v3750 = vsel %vm3744, %v3747, %v3749
      %v3751 = vsel %vm3743, %v3730, %v3733
      %v3752 = vsel %vm3746, %v3739, 920167782
      %v3753 = vsel %vm3745, %v3736, %v3752
      %v3754 = vsel %vm3744, %v3751, %v3753
      %v3755 = vsel %vm3743, %v3733, %v3736
      %v3756 = vsel %vm3746, %v3742, 1326507024
      %v3757 = vsel %vm3745, %v3739, %v3756
      %v3758 = vsel %vm3744, %v3755, %v3757
      %v3759 = vshll.u32 %v3719, 8
      %v3760 = vmul.u32.u64.compose %v3759, %v3758
      %v3761 = vextract.low.u32 %v3760
      %v3762 = vextract.high.u32 %v3760
      %v3763 = vmul.u32.u64.compose %v3759, %v3754
      %v3764 = vextract.low.u32 %v3763
      %v3765 = vextract.high.u32 %v3763
      %v3766 = vmul.u32 %v3759, %v3750
      %v3767 = vadd.s32 %v3762, %v3764
      %vm3768 = vc.u32 %v3762, %v3764
      %v3769 = vadd.s32 %v3765, 1
      %v3770 = vsel %vm3768, %v3769, %v3765
      %v3771 = vadd.s32 %v3766, %v3770
      %v3772 = vadd.s32 %v3771, 536870912
      %v3773 = vshrl.u32 %v3772, 30
      %v3774 = vshll.u32 %v3773, 30
      %v3775 = vsub.s32 %v3771, %v3774
      %vm3776 = vcmp.lt.s32.totalorder %v3775, 0
      %v3777 = vsub.s32 0, %v3775
      %v3778 = vsel %vm3776, %v3777, %v3775
      %v3779 = vclz %v3778
      %v3780 = vsub.s32 %v3779, 2
      %vm3781 = vcmp.gt.s32.totalorder 0, %v3780
      %v3782 = vsel %vm3781, 0, %v3780
      %v3783 = vsub.s32 32, %v3782
      %v3784 = vshll.u32 %v3775, %v3782
      %v3785 = vshrl.u32 %v3767, %v3783
      %v3786 = vor.u32 %v3784, %v3785
      %v3787 = vsub.s32 4294967266, %v3782
      %v3788 = vadd.s32 %v3787, 127
      %v3789 = vshll.u32 %v3788, 23
      %v3790 = vor.u32 4788187, %v3789
      %v3791 = vand.u32 2147483647, %v3790
      %v3793 = vcvt.s32.f32 %v3786
      %v3794 = vmul.f32 %v3793, %v3791
      %v3795 = vxor.u32 %v3794, 2147483648
      %v3796 = vsel %vm3713, %v3795, %v3794
      %v3797 = vsub.s32 4, %v3773
      %v3798 = vsel %vm3713, %v3797, %v3773
      %v3799 = vsel %vm3712, %v2449, %v3796
      %v3800 = vsel %vm3712, 0, %v3798
      %v3801 = vcosq.f32.pop %v3799
      %v3802 = vsinq.f32.pop %v3799
      %vm3803 = vweird.f32 %v2449
      %v3804 = vadd.s32 %v3800, 3
      %v3805 = vand.u32 %v3804, 3
      %vm3806 = vcmp.lt.s32.totalorder %v3805, 2
      %vm3807 = vcmp.eq.s32.totalorder %v3805, 0
      %v3808 = vxor.u32 %v3802, 2147483648
      %v3809 = vsel %vm3807, %v3801, %v3808
      %vm3810 = vcmp.eq.s32.totalorder %v3805, 2
      %v3811 = vxor.u32 %v3801, 2147483648
      %v3812 = vsel %vm3810, %v3811, %v3802
      %v3813 = vsel %vm3806, %v3809, %v3812
      %v3814 = vsel %vm3803, nan, %v3813
      %v3815 = vand.u32 2147483647, %v2452
      %vm3816 = vcmp.le.f32.partialorder %v3815, 0.7853982
      %vm3817 = vcmp.lt.s32.totalorder %v2452, 0
      %v3818 = vand.u32 %v2452, 2139095040
      %v3819 = vshrl.u32 %v3818, 23
      %v3820 = vsub.s32 %v3819, 127
      %v3821 = vand.u32 2147483647, %v2452
      %v3822 = vand.u32 %v3821, 8388607
      %v3823 = vor.u32 %v3822, 8388608
      %v3824 = vsub.s32 0, %v3823
      %v3825 = vadd.s32 %v3820, 1
      %vm3826 = vcmp.gt.s32.totalorder %v3825, 0
      %v3827 = vsel %vm3826, %v3825, 0
      %v3828 = vshrl.u32 %v3827, 5
      %v3829 = vand.u32 %v3827, 31
      %v3830 = vsub.s32 32, %v3829
      %v3831 = vshrl.u32 683565275, %v3830
      %v3832 = vshll.u32 683565275, %v3829
      %v3833 = vshrl.u32 2475754826, %v3830
      %v3834 = vor.u32 %v3832, %v3833
      %v3835 = vshll.u32 2475754826, %v3829
      %v3836 = vshrl.u32 2131351028, %v3830
      %v3837 = vor.u32 %v3835, %v3836
      %v3838 = vshll.u32 2131351028, %v3829
      %v3839 = vshrl.u32 2102212464, %v3830
      %v3840 = vor.u32 %v3838, %v3839
      %v3841 = vshll.u32 2102212464, %v3829
      %v3842 = vshrl.u32 920167782, %v3830
      %v3843 = vor.u32 %v3841, %v3842
      %v3844 = vshll.u32 920167782, %v3829
      %v3845 = vshrl.u32 1326507024, %v3830
      %v3846 = vor.u32 %v3844, %v3845
      %vm3847 = vcmp.lt.s32.totalorder %v3828, 1
      %vm3848 = vcmp.lt.s32.totalorder %v3828, 2
      %vm3849 = vcmp.lt.s32.totalorder %v3828, 3
      %vm3850 = vcmp.lt.s32.totalorder %v3828, 4
      %v3851 = vsel %vm3847, %v3831, %v3834
      %v3852 = vsel %vm3850, %v3840, 2102212464
      %v3853 = vsel %vm3849, %v3837, %v3852
      %v3854 = vsel %vm3848, %v3851, %v3853
      %v3855 = vsel %vm3847, %v3834, %v3837
      %v3856 = vsel %vm3850, %v3843, 920167782
      %v3857 = vsel %vm3849, %v3840, %v3856
      %v3858 = vsel %vm3848, %v3855, %v3857
      %v3859 = vsel %vm3847, %v3837, %v3840
      %v3860 = vsel %vm3850, %v3846, 1326507024
      %v3861 = vsel %vm3849, %v3843, %v3860
      %v3862 = vsel %vm3848, %v3859, %v3861
      %v3863 = vshll.u32 %v3823, 8
      %v3864 = vmul.u32.u64.compose %v3863, %v3862
      %v3865 = vextract.low.u32 %v3864
      %v3866 = vextract.high.u32 %v3864
      %v3867 = vmul.u32.u64.compose %v3863, %v3858
      %v3868 = vextract.low.u32 %v3867
      %v3869 = vextract.high.u32 %v3867
      %v3870 = vmul.u32 %v3863, %v3854
      %v3871 = vadd.s32 %v3866, %v3868
      %vm3872 = vc.u32 %v3866, %v3868
      %v3873 = vadd.s32 %v3869, 1
      %v3874 = vsel %vm3872, %v3873, %v3869
      %v3875 = vadd.s32 %v3870, %v3874
      %v3876 = vadd.s32 %v3875, 536870912
      %v3877 = vshrl.u32 %v3876, 30
      %v3878 = vshll.u32 %v3877, 30
      %v3879 = vsub.s32 %v3875, %v3878
      %vm3880 = vcmp.lt.s32.totalorder %v3879, 0
      %v3881 = vsub.s32 0, %v3879
      %v3882 = vsel %vm3880, %v3881, %v3879
      %v3883 = vclz %v3882
      %v3884 = vsub.s32 %v3883, 2
      %vm3885 = vcmp.gt.s32.totalorder 0, %v3884
      %v3886 = vsel %vm3885, 0, %v3884
      %v3887 = vsub.s32 32, %v3886
      %v3888 = vshll.u32 %v3879, %v3886
      %v3889 = vshrl.u32 %v3871, %v3887
      %v3890 = vor.u32 %v3888, %v3889
      %v3891 = vsub.s32 4294967266, %v3886
      %v3892 = vadd.s32 %v3891, 127
      %v3893 = vshll.u32 %v3892, 23
      %v3894 = vor.u32 4788187, %v3893
      %v3895 = vand.u32 2147483647, %v3894
      %v3897 = vcvt.s32.f32 %v3890
      %v3898 = vmul.f32 %v3897, %v3895
      %v3899 = vxor.u32 %v3898, 2147483648
      %v3900 = vsel %vm3817, %v3899, %v3898
      %v3901 = vsub.s32 4, %v3877
      %v3902 = vsel %vm3817, %v3901, %v3877
      %v3903 = vsel %vm3816, %v2452, %v3900
      %v3904 = vsel %vm3816, 0, %v3902
      %v3905 = vcosq.f32.pop %v3903
      %v3906 = vsinq.f32.pop %v3903
      %vm3907 = vweird.f32 %v2452
      %v3908 = vadd.s32 %v3904, 3
      %v3909 = vand.u32 %v3908, 3
      %vm3910 = vcmp.lt.s32.totalorder %v3909, 2
      %vm3911 = vcmp.eq.s32.totalorder %v3909, 0
      %v3912 = vxor.u32 %v3906, 2147483648
      %v3913 = vsel %vm3911, %v3905, %v3912
      %vm3914 = vcmp.eq.s32.totalorder %v3909, 2
      %v3915 = vxor.u32 %v3905, 2147483648
      %v3916 = vsel %vm3914, %v3915, %v3906
      %v3917 = vsel %vm3910, %v3913, %v3916
      %v3918 = vsel %vm3907, nan, %v3917
      %v3919 = vand.u32 2147483647, %v2457
      %vm3920 = vcmp.le.f32.partialorder %v3919, 0.7853982
      %vm3921 = vcmp.lt.s32.totalorder %v2457, 0
      %v3922 = vand.u32 %v2457, 2139095040
      %v3923 = vshrl.u32 %v3922, 23
      %v3924 = vsub.s32 %v3923, 127
      %v3925 = vand.u32 2147483647, %v2457
      %v3926 = vand.u32 %v3925, 8388607
      %v3927 = vor.u32 %v3926, 8388608
      %v3928 = vsub.s32 0, %v3927
      %v3929 = vadd.s32 %v3924, 1
      %vm3930 = vcmp.gt.s32.totalorder %v3929, 0
      %v3931 = vsel %vm3930, %v3929, 0
      %v3932 = vshrl.u32 %v3931, 5
      %v3933 = vand.u32 %v3931, 31
      %v3934 = vsub.s32 32, %v3933
      %v3935 = vshrl.u32 683565275, %v3934
      %v3936 = vshll.u32 683565275, %v3933
      %v3937 = vshrl.u32 2475754826, %v3934
      %v3938 = vor.u32 %v3936, %v3937
      %v3939 = vshll.u32 2475754826, %v3933
      %v3940 = vshrl.u32 2131351028, %v3934
      %v3941 = vor.u32 %v3939, %v3940
      %v3942 = vshll.u32 2131351028, %v3933
      %v3943 = vshrl.u32 2102212464, %v3934
      %v3944 = vor.u32 %v3942, %v3943
      %v3945 = vshll.u32 2102212464, %v3933
      %v3946 = vshrl.u32 920167782, %v3934
      %v3947 = vor.u32 %v3945, %v3946
      %v3948 = vshll.u32 920167782, %v3933
      %v3949 = vshrl.u32 1326507024, %v3934
      %v3950 = vor.u32 %v3948, %v3949
      %vm3951 = vcmp.lt.s32.totalorder %v3932, 1
      %vm3952 = vcmp.lt.s32.totalorder %v3932, 2
      %vm3953 = vcmp.lt.s32.totalorder %v3932, 3
      %vm3954 = vcmp.lt.s32.totalorder %v3932, 4
      %v3955 = vsel %vm3951, %v3935, %v3938
      %v3956 = vsel %vm3954, %v3944, 2102212464
      %v3957 = vsel %vm3953, %v3941, %v3956
      %v3958 = vsel %vm3952, %v3955, %v3957
      %v3959 = vsel %vm3951, %v3938, %v3941
      %v3960 = vsel %vm3954, %v3947, 920167782
      %v3961 = vsel %vm3953, %v3944, %v3960
      %v3962 = vsel %vm3952, %v3959, %v3961
      %v3963 = vsel %vm3951, %v3941, %v3944
      %v3964 = vsel %vm3954, %v3950, 1326507024
      %v3965 = vsel %vm3953, %v3947, %v3964
      %v3966 = vsel %vm3952, %v3963, %v3965
      %v3967 = vshll.u32 %v3927, 8
      %v3968 = vmul.u32.u64.compose %v3967, %v3966
      %v3969 = vextract.low.u32 %v3968
      %v3970 = vextract.high.u32 %v3968
      %v3971 = vmul.u32.u64.compose %v3967, %v3962
      %v3972 = vextract.low.u32 %v3971
      %v3973 = vextract.high.u32 %v3971
      %v3974 = vmul.u32 %v3967, %v3958
      %v3975 = vadd.s32 %v3970, %v3972
      %vm3976 = vc.u32 %v3970, %v3972
      %v3977 = vadd.s32 %v3973, 1
      %v3978 = vsel %vm3976, %v3977, %v3973
      %v3979 = vadd.s32 %v3974, %v3978
      %v3980 = vadd.s32 %v3979, 536870912
      %v3981 = vshrl.u32 %v3980, 30
      %v3982 = vshll.u32 %v3981, 30
      %v3983 = vsub.s32 %v3979, %v3982
      %vm3984 = vcmp.lt.s32.totalorder %v3983, 0
      %v3985 = vsub.s32 0, %v3983
      %v3986 = vsel %vm3984, %v3985, %v3983
      %v3987 = vclz %v3986
      %v3988 = vsub.s32 %v3987, 2
      %vm3989 = vcmp.gt.s32.totalorder 0, %v3988
      %v3990 = vsel %vm3989, 0, %v3988
      %v3991 = vsub.s32 32, %v3990
      %v3992 = vshll.u32 %v3983, %v3990
      %v3993 = vshrl.u32 %v3975, %v3991
      %v3994 = vor.u32 %v3992, %v3993
      %v3995 = vsub.s32 4294967266, %v3990
      %v3996 = vadd.s32 %v3995, 127
      %v3997 = vshll.u32 %v3996, 23
      %v3998 = vor.u32 4788187, %v3997
      %v3999 = vand.u32 2147483647, %v3998
      %v4001 = vcvt.s32.f32 %v3994
      %v4002 = vmul.f32 %v4001, %v3999
      %v4003 = vxor.u32 %v4002, 2147483648
      %v4004 = vsel %vm3921, %v4003, %v4002
      %v4005 = vsub.s32 4, %v3981
      %v4006 = vsel %vm3921, %v4005, %v3981
      %v4007 = vsel %vm3920, %v2457, %v4004
      %v4008 = vsel %vm3920, 0, %v4006
      %v4009 = vcosq.f32.pop %v4007
      %v4010 = vsinq.f32.pop %v4007
      %vm4011 = vweird.f32 %v2457
      %v4012 = vadd.s32 %v4008, 3
      %v4013 = vand.u32 %v4012, 3
      %vm4014 = vcmp.lt.s32.totalorder %v4013, 2
      %vm4015 = vcmp.eq.s32.totalorder %v4013, 0
      %v4016 = vxor.u32 %v4010, 2147483648
      %v4017 = vsel %vm4015, %v4009, %v4016
      %vm4018 = vcmp.eq.s32.totalorder %v4013, 2
      %v4019 = vxor.u32 %v4009, 2147483648
      %v4020 = vsel %vm4018, %v4019, %v4010
      %v4021 = vsel %vm4014, %v4017, %v4020
      %v4022 = vsel %vm4011, nan, %v4021
      %v4023 = vand.u32 2147483647, %v2460
      %vm4024 = vcmp.le.f32.partialorder %v4023, 0.7853982
      %vm4025 = vcmp.lt.s32.totalorder %v2460, 0
      %v4026 = vand.u32 %v2460, 2139095040
      %v4027 = vshrl.u32 %v4026, 23
      %v4028 = vsub.s32 %v4027, 127
      %v4029 = vand.u32 2147483647, %v2460
      %v4030 = vand.u32 %v4029, 8388607
      %v4031 = vor.u32 %v4030, 8388608
      %v4032 = vsub.s32 0, %v4031
      %v4033 = vadd.s32 %v4028, 1
      %vm4034 = vcmp.gt.s32.totalorder %v4033, 0
      %v4035 = vsel %vm4034, %v4033, 0
      %v4036 = vshrl.u32 %v4035, 5
      %v4037 = vand.u32 %v4035, 31
      %v4038 = vsub.s32 32, %v4037
      %v4039 = vshrl.u32 683565275, %v4038
      %v4040 = vshll.u32 683565275, %v4037
      %v4041 = vshrl.u32 2475754826, %v4038
      %v4042 = vor.u32 %v4040, %v4041
      %v4043 = vshll.u32 2475754826, %v4037
      %v4044 = vshrl.u32 2131351028, %v4038
      %v4045 = vor.u32 %v4043, %v4044
      %v4046 = vshll.u32 2131351028, %v4037
      %v4047 = vshrl.u32 2102212464, %v4038
      %v4048 = vor.u32 %v4046, %v4047
      %v4049 = vshll.u32 2102212464, %v4037
      %v4050 = vshrl.u32 920167782, %v4038
      %v4051 = vor.u32 %v4049, %v4050
      %v4052 = vshll.u32 920167782, %v4037
      %v4053 = vshrl.u32 1326507024, %v4038
      %v4054 = vor.u32 %v4052, %v4053
      %vm4055 = vcmp.lt.s32.totalorder %v4036, 1
      %vm4056 = vcmp.lt.s32.totalorder %v4036, 2
      %vm4057 = vcmp.lt.s32.totalorder %v4036, 3
      %vm4058 = vcmp.lt.s32.totalorder %v4036, 4
      %v4059 = vsel %vm4055, %v4039, %v4042
      %v4060 = vsel %vm4058, %v4048, 2102212464
      %v4061 = vsel %vm4057, %v4045, %v4060
      %v4062 = vsel %vm4056, %v4059, %v4061
      %v4063 = vsel %vm4055, %v4042, %v4045
      %v4064 = vsel %vm4058, %v4051, 920167782
      %v4065 = vsel %vm4057, %v4048, %v4064
      %v4066 = vsel %vm4056, %v4063, %v4065
      %v4067 = vsel %vm4055, %v4045, %v4048
      %v4068 = vsel %vm4058, %v4054, 1326507024
      %v4069 = vsel %vm4057, %v4051, %v4068
      %v4070 = vsel %vm4056, %v4067, %v4069
      %v4071 = vshll.u32 %v4031, 8
      %v4072 = vmul.u32.u64.compose %v4071, %v4070
      %v4073 = vextract.low.u32 %v4072
      %v4074 = vextract.high.u32 %v4072
      %v4075 = vmul.u32.u64.compose %v4071, %v4066
      %v4076 = vextract.low.u32 %v4075
      %v4077 = vextract.high.u32 %v4075
      %v4078 = vmul.u32 %v4071, %v4062
      %v4079 = vadd.s32 %v4074, %v4076
      %vm4080 = vc.u32 %v4074, %v4076
      %v4081 = vadd.s32 %v4077, 1
      %v4082 = vsel %vm4080, %v4081, %v4077
      %v4083 = vadd.s32 %v4078, %v4082
      %v4084 = vadd.s32 %v4083, 536870912
      %v4085 = vshrl.u32 %v4084, 30
      %v4086 = vshll.u32 %v4085, 30
      %v4087 = vsub.s32 %v4083, %v4086
      %vm4088 = vcmp.lt.s32.totalorder %v4087, 0
      %v4089 = vsub.s32 0, %v4087
      %v4090 = vsel %vm4088, %v4089, %v4087
      %v4091 = vclz %v4090
      %v4092 = vsub.s32 %v4091, 2
      %vm4093 = vcmp.gt.s32.totalorder 0, %v4092
      %v4094 = vsel %vm4093, 0, %v4092
      %v4095 = vsub.s32 32, %v4094
      %v4096 = vshll.u32 %v4087, %v4094
      %v4097 = vshrl.u32 %v4079, %v4095
      %v4098 = vor.u32 %v4096, %v4097
      %v4099 = vsub.s32 4294967266, %v4094
      %v4100 = vadd.s32 %v4099, 127
      %v4101 = vshll.u32 %v4100, 23
      %v4102 = vor.u32 4788187, %v4101
      %v4103 = vand.u32 2147483647, %v4102
      %v4105 = vcvt.s32.f32 %v4098
      %v4106 = vmul.f32 %v4105, %v4103
      %v4107 = vxor.u32 %v4106, 2147483648
      %v4108 = vsel %vm4025, %v4107, %v4106
      %v4109 = vsub.s32 4, %v4085
      %v4110 = vsel %vm4025, %v4109, %v4085
      %v4111 = vsel %vm4024, %v2460, %v4108
      %v4112 = vsel %vm4024, 0, %v4110
      %v4113 = vcosq.f32.pop %v4111
      %v4114 = vsinq.f32.pop %v4111
      %vm4115 = vweird.f32 %v2460
      %v4116 = vadd.s32 %v4112, 3
      %v4117 = vand.u32 %v4116, 3
      %vm4118 = vcmp.lt.s32.totalorder %v4117, 2
      %vm4119 = vcmp.eq.s32.totalorder %v4117, 0
      %v4120 = vxor.u32 %v4114, 2147483648
      %v4121 = vsel %vm4119, %v4113, %v4120
      %vm4122 = vcmp.eq.s32.totalorder %v4117, 2
      %v4123 = vxor.u32 %v4113, 2147483648
      %v4124 = vsel %vm4122, %v4123, %v4114
      %v4125 = vsel %vm4118, %v4121, %v4124
      %v4126 = vsel %vm4115, nan, %v4125
      %v4127 = vpack.c.bf16 %v2670, %v2566
      %v4128 = vpack.c.bf16 %v2878, %v2774
      %v4129 = vpack.c.bf16 %v3086, %v2982
      %v4130 = vpack.c.bf16 %v3294, %v3190
      %v4131 = vpack.c.bf16 %v3502, %v3398
      %v4132 = vpack.c.bf16 %v3710, %v3606
      %v4133 = vpack.c.bf16 %v3918, %v3814
      %v4134 = vpack.c.bf16 %v4126, %v4022
      %s4135 = scalar_lea.vmem %s3, 64
      %v4136 = vld [vmem:[%s4135] sm:$0xf]
      %v4137 = vld [vmem:[%s4135 + $0x4] sm:$0xf]
      %v4138 = vld [vmem:[%s4135 + $0x8] sm:$0xf]
      %v4139 = vld [vmem:[%s4135 + $0xc] sm:$0xf]
      %v4140 = vld [vmem:[%s4135 + $0x10] sm:$0xf]
      %v4141 = vld [vmem:[%s4135 + $0x14] sm:$0xf]
      %v4142 = vld [vmem:[%s4135 + $0x18] sm:$0xf]
      %v4143 = vld [vmem:[%s4135 + $0x1c] sm:$0xf]
      %v4144 = vld [vmem:[%s4135 + $0x20] sm:$0xf]
      %v4145 = vld [vmem:[%s4135 + $0x24] sm:$0xf]
      %v4146 = vld [vmem:[%s4135 + $0x28] sm:$0xf]
      %v4147 = vld [vmem:[%s4135 + $0x2c] sm:$0xf]
      %v4148 = vld [vmem:[%s4135 + $0x30] sm:$0xf]
      %v4149 = vld [vmem:[%s4135 + $0x34] sm:$0xf]
      %v4150 = vld [vmem:[%s4135 + $0x38] sm:$0xf]
      %v4151 = vld [vmem:[%s4135 + $0x3c] sm:$0xf]
      %v4152 = vld [vmem:[%s4 + $0x1] sm:$0x1]
      %v4153 = vlaneseq
      %v4154 = vshrl.u32 %v4153, 7
      %v4155 = vsub.s32 0, %v4154
      %v4156 = vrot.slane %v4152, %v4155
      %v4173 = vunpack.c.l.b16 %v4136
      %v4174 = vunpack.c.l.b16 %v4137
      %v4175 = vunpack.c.l.b16 %v4138
      %v4176 = vunpack.c.l.b16 %v4139
      %v4177 = vunpack.c.l.b16 %v4140
      %v4178 = vunpack.c.l.b16 %v4141
      %v4179 = vunpack.c.l.b16 %v4142
      %v4180 = vunpack.c.l.b16 %v4143
      %v4181 = vunpack.c.l.b16 %v4144
      %v4182 = vunpack.c.l.b16 %v4145
      %v4183 = vunpack.c.l.b16 %v4146
      %v4184 = vunpack.c.l.b16 %v4147
      %v4185 = vunpack.c.l.b16 %v4148
      %v4186 = vunpack.c.l.b16 %v4149
      %v4187 = vunpack.c.l.b16 %v4150
      %v4188 = vunpack.c.l.b16 %v4151
      %v4189 = vpack.c.b16 %v4174, %v4173
      %v4190 = vpack.c.b16 %v4176, %v4175
      %v4191 = vpack.c.b16 %v4178, %v4177
      %v4192 = vpack.c.b16 %v4180, %v4179
      %v4193 = vpack.c.b16 %v4182, %v4181
      %v4194 = vpack.c.b16 %v4184, %v4183
      %v4195 = vpack.c.b16 %v4186, %v4185
      %v4196 = vpack.c.b16 %v4188, %v4187
      %4205 = vmatprep.subr.bf16.mxu0 0
      %4206 = vmatpush1.bf16.msra.mxu0 %v4189
      %4207 = vmatprep.subr.bf16.mxu0 0
      %4208 = vmatpush1.bf16.msra.mxu0 %v4190
      %4209 = vmatprep.subr.bf16.mxu0 0
      %4210 = vmatpush1.bf16.msra.mxu0 %v4191
      %4211 = vmatprep.subr.bf16.mxu0 0
      %4212 = vmatpush1.bf16.msra.mxu0 %v4192
      %4213 = vmatprep.subr.bf16.mxu0 0
      %4214 = vmatpush1.bf16.msra.mxu0 %v4193
      %4215 = vmatprep.subr.bf16.mxu0 0
      %4216 = vmatpush1.bf16.msra.mxu0 %v4194
      %4217 = vmatprep.subr.bf16.mxu0 0
      %4218 = vmatpush1.bf16.msra.mxu0 %v4195
      %4219 = vmatprep.subr.bf16.mxu0 0
      %4220 = vmatpush1.bf16.msra.mxu0 %v4196
      %4221 = vmatprep.subr.bf16.mxu0 0
      %4222 = vmatpush1.bf16.msra.mxu0 0
      %4223 = vmatprep.subr.bf16.mxu0 0
      %4224 = vmatpush1.bf16.msra.mxu0 0
      %4225 = vmatprep.subr.bf16.mxu0 0
      %4226 = vmatpush1.bf16.msra.mxu0 0
      %4227 = vmatprep.subr.bf16.mxu0 0
      %4228 = vmatpush1.bf16.msra.mxu0 0
      %4229 = vmatprep.subr.bf16.mxu0 0
      %4230 = vmatpush1.bf16.msra.mxu0 0
      %4231 = vmatprep.subr.bf16.mxu0 0
      %4232 = vmatpush1.bf16.msra.mxu0 0
      %4233 = vmatprep.subr.bf16.mxu0 0
      %4234 = vmatpush1.bf16.msra.mxu0 0
      %4235 = vmatprep.subr.bf16.mxu0 0
      %4236 = vmatpush1.bf16.msra.mxu0 0
      %4237 = vmatprep.mubr.bf16.mxu0 0
      %4238 = vmatmul.mubr.bf16.gmra.mrb[0].mxu0 %v4127
      %v4239 = vpop.f32.mrb[0].mxu0
      %v4240 = vadd.f32 %v4156, %v4239
      %v4241 = vpop.f32.mrb[0].mxu0
      %v4242 = vpop.f32.mrb[0].mxu0
      %v4243 = vadd.f32 %v4156, %v4242
      %v4244 = vpop.f32.mrb[0].mxu0
      %4245 = vmatprep.mubr.bf16.mxu0 0
      %4246 = vmatmul.mubr.bf16.gmra.mrb[0].mxu0 %v4128
      %v4247 = vpop.f32.mrb[0].mxu0
      %v4248 = vadd.f32 %v4156, %v4247
      %v4249 = vpop.f32.mrb[0].mxu0
      %v4250 = vpop.f32.mrb[0].mxu0
      %v4251 = vadd.f32 %v4156, %v4250
      %v4252 = vpop.f32.mrb[0].mxu0
      %4253 = vmatprep.mubr.bf16.mxu0 0
      %4254 = vmatmul.mubr.bf16.gmra.mrb[0].mxu0 %v4129
      %v4255 = vpop.f32.mrb[0].mxu0
      %v4256 = vadd.f32 %v4156, %v4255
      %v4257 = vpop.f32.mrb[0].mxu0
      %v4258 = vpop.f32.mrb[0].mxu0
      %v4259 = vadd.f32 %v4156, %v4258
      %v4260 = vpop.f32.mrb[0].mxu0
      %4261 = vmatprep.mubr.bf16.mxu0 0
      %4262 = vmatmul.mubr.bf16.gmra.mrb[0].mxu0 %v4130
      %v4263 = vpop.f32.mrb[0].mxu0
      %v4264 = vadd.f32 %v4156, %v4263
      %v4265 = vpop.f32.mrb[0].mxu0
      %v4266 = vpop.f32.mrb[0].mxu0
      %v4267 = vadd.f32 %v4156, %v4266
      %v4268 = vpop.f32.mrb[0].mxu0
      %4269 = vmatprep.mubr.bf16.mxu0 0
      %4270 = vmatmul.mubr.bf16.gmra.mrb[0].mxu0 %v4131
      %v4271 = vpop.f32.mrb[0].mxu0
      %v4272 = vadd.f32 %v4156, %v4271
      %v4273 = vpop.f32.mrb[0].mxu0
      %v4274 = vpop.f32.mrb[0].mxu0
      %v4275 = vadd.f32 %v4156, %v4274
      %v4276 = vpop.f32.mrb[0].mxu0
      %4277 = vmatprep.mubr.bf16.mxu0 0
      %4278 = vmatmul.mubr.bf16.gmra.mrb[0].mxu0 %v4132
      %v4279 = vpop.f32.mrb[0].mxu0
      %v4280 = vadd.f32 %v4156, %v4279
      %v4281 = vpop.f32.mrb[0].mxu0
      %v4282 = vpop.f32.mrb[0].mxu0
      %v4283 = vadd.f32 %v4156, %v4282
      %v4284 = vpop.f32.mrb[0].mxu0
      %4285 = vmatprep.mubr.bf16.mxu0 0
      %4286 = vmatmul.mubr.bf16.gmra.mrb[0].mxu0 %v4133
      %v4287 = vpop.f32.mrb[0].mxu0
      %v4288 = vadd.f32 %v4156, %v4287
      %v4289 = vpop.f32.mrb[0].mxu0
      %v4290 = vpop.f32.mrb[0].mxu0
      %v4291 = vadd.f32 %v4156, %v4290
      %v4292 = vpop.f32.mrb[0].mxu0
      %4293 = vmatprep.mubr.bf16.mxu0 0
      %4294 = vmatmul.mubr.bf16.gmra.mrb[0].mxu0 %v4134
      %v4295 = vpop.f32.mrb[0].mxu0
      %v4296 = vadd.f32 %v4156, %v4295
      %v4297 = vpop.f32.mrb[0].mxu0
      %v4298 = vpop.f32.mrb[0].mxu0
      %v4299 = vadd.f32 %v4156, %v4298
      %v4300 = vpop.f32.mrb[0].mxu0
      %4301 = vdwg.mxu0
      %v4302 = vand.u32 2147483647, %v4240
      %vm4303 = vcmp.le.f32.partialorder %v4302, 0.7853982
      %vm4304 = vcmp.lt.s32.totalorder %v4240, 0
      %v4305 = vand.u32 %v4240, 2139095040
      %v4306 = vshrl.u32 %v4305, 23
      %v4307 = vsub.s32 %v4306, 127
      %v4308 = vand.u32 2147483647, %v4240
      %v4309 = vand.u32 %v4308, 8388607
      %v4310 = vor.u32 %v4309, 8388608
      %v4311 = vsub.s32 0, %v4310
      %v4312 = vadd.s32 %v4307, 1
      %vm4313 = vcmp.gt.s32.totalorder %v4312, 0
      %v4314 = vsel %vm4313, %v4312, 0
      %v4315 = vshrl.u32 %v4314, 5
      %v4316 = vand.u32 %v4314, 31
      %v4317 = vsub.s32 32, %v4316
      %v4318 = vshrl.u32 683565275, %v4317
      %v4319 = vshll.u32 683565275, %v4316
      %v4320 = vshrl.u32 2475754826, %v4317
      %v4321 = vor.u32 %v4319, %v4320
      %v4322 = vshll.u32 2475754826, %v4316
      %v4323 = vshrl.u32 2131351028, %v4317
      %v4324 = vor.u32 %v4322, %v4323
      %v4325 = vshll.u32 2131351028, %v4316
      %v4326 = vshrl.u32 2102212464, %v4317
      %v4327 = vor.u32 %v4325, %v4326
      %v4328 = vshll.u32 2102212464, %v4316
      %v4329 = vshrl.u32 920167782, %v4317
      %v4330 = vor.u32 %v4328, %v4329
      %v4331 = vshll.u32 920167782, %v4316
      %v4332 = vshrl.u32 1326507024, %v4317
      %v4333 = vor.u32 %v4331, %v4332
      %vm4334 = vcmp.lt.s32.totalorder %v4315, 1
      %vm4335 = vcmp.lt.s32.totalorder %v4315, 2
      %vm4336 = vcmp.lt.s32.totalorder %v4315, 3
      %vm4337 = vcmp.lt.s32.totalorder %v4315, 4
      %v4338 = vsel %vm4334, %v4318, %v4321
      %v4339 = vsel %vm4337, %v4327, 2102212464
      %v4340 = vsel %vm4336, %v4324, %v4339
      %v4341 = vsel %vm4335, %v4338, %v4340
      %v4342 = vsel %vm4334, %v4321, %v4324
      %v4343 = vsel %vm4337, %v4330, 920167782
      %v4344 = vsel %vm4336, %v4327, %v4343
      %v4345 = vsel %vm4335, %v4342, %v4344
      %v4346 = vsel %vm4334, %v4324, %v4327
      %v4347 = vsel %vm4337, %v4333, 1326507024
      %v4348 = vsel %vm4336, %v4330, %v4347
      %v4349 = vsel %vm4335, %v4346, %v4348
      %v4350 = vshll.u32 %v4310, 8
      %v4351 = vmul.u32.u64.compose %v4350, %v4349
      %v4352 = vextract.low.u32 %v4351
      %v4353 = vextract.high.u32 %v4351
      %v4354 = vmul.u32.u64.compose %v4350, %v4345
      %v4355 = vextract.low.u32 %v4354
      %v4356 = vextract.high.u32 %v4354
      %v4357 = vmul.u32 %v4350, %v4341
      %v4358 = vadd.s32 %v4353, %v4355
      %vm4359 = vc.u32 %v4353, %v4355
      %v4360 = vadd.s32 %v4356, 1
      %v4361 = vsel %vm4359, %v4360, %v4356
      %v4362 = vadd.s32 %v4357, %v4361
      %v4363 = vadd.s32 %v4362, 536870912
      %v4364 = vshrl.u32 %v4363, 30
      %v4365 = vshll.u32 %v4364, 30
      %v4366 = vsub.s32 %v4362, %v4365
      %vm4367 = vcmp.lt.s32.totalorder %v4366, 0
      %v4368 = vsub.s32 0, %v4366
      %v4369 = vsel %vm4367, %v4368, %v4366
      %v4370 = vclz %v4369
      %v4371 = vsub.s32 %v4370, 2
      %vm4372 = vcmp.gt.s32.totalorder 0, %v4371
      %v4373 = vsel %vm4372, 0, %v4371
      %v4374 = vsub.s32 32, %v4373
      %v4375 = vshll.u32 %v4366, %v4373
      %v4376 = vshrl.u32 %v4358, %v4374
      %v4377 = vor.u32 %v4375, %v4376
      %v4378 = vsub.s32 4294967266, %v4373
      %v4379 = vadd.s32 %v4378, 127
      %v4380 = vshll.u32 %v4379, 23
      %v4381 = vor.u32 4788187, %v4380
      %v4382 = vand.u32 2147483647, %v4381
      %v4384 = vcvt.s32.f32 %v4377
      %v4385 = vmul.f32 %v4384, %v4382
      %v4386 = vxor.u32 %v4385, 2147483648
      %v4387 = vsel %vm4304, %v4386, %v4385
      %v4388 = vsub.s32 4, %v4364
      %v4389 = vsel %vm4304, %v4388, %v4364
      %v4390 = vsel %vm4303, %v4240, %v4387
      %v4391 = vsel %vm4303, 0, %v4389
      %v4392 = vcosq.f32.pop %v4390
      %v4393 = vsinq.f32.pop %v4390
      %vm4394 = vweird.f32 %v4240
      %v4395 = vadd.s32 %v4391, 3
      %v4396 = vand.u32 %v4395, 3
      %vm4397 = vcmp.lt.s32.totalorder %v4396, 2
      %vm4398 = vcmp.eq.s32.totalorder %v4396, 0
      %v4399 = vxor.u32 %v4393, 2147483648
      %v4400 = vsel %vm4398, %v4392, %v4399
      %vm4401 = vcmp.eq.s32.totalorder %v4396, 2
      %v4402 = vxor.u32 %v4392, 2147483648
      %v4403 = vsel %vm4401, %v4402, %v4393
      %v4404 = vsel %vm4397, %v4400, %v4403
      %v4405 = vsel %vm4394, nan, %v4404
      %v4406 = vand.u32 2147483647, %v4243
      %vm4407 = vcmp.le.f32.partialorder %v4406, 0.7853982
      %vm4408 = vcmp.lt.s32.totalorder %v4243, 0
      %v4409 = vand.u32 %v4243, 2139095040
      %v4410 = vshrl.u32 %v4409, 23
      %v4411 = vsub.s32 %v4410, 127
      %v4412 = vand.u32 2147483647, %v4243
      %v4413 = vand.u32 %v4412, 8388607
      %v4414 = vor.u32 %v4413, 8388608
      %v4415 = vsub.s32 0, %v4414
      %v4416 = vadd.s32 %v4411, 1
      %vm4417 = vcmp.gt.s32.totalorder %v4416, 0
      %v4418 = vsel %vm4417, %v4416, 0
      %v4419 = vshrl.u32 %v4418, 5
      %v4420 = vand.u32 %v4418, 31
      %v4421 = vsub.s32 32, %v4420
      %v4422 = vshrl.u32 683565275, %v4421
      %v4423 = vshll.u32 683565275, %v4420
      %v4424 = vshrl.u32 2475754826, %v4421
      %v4425 = vor.u32 %v4423, %v4424
      %v4426 = vshll.u32 2475754826, %v4420
      %v4427 = vshrl.u32 2131351028, %v4421
      %v4428 = vor.u32 %v4426, %v4427
      %v4429 = vshll.u32 2131351028, %v4420
      %v4430 = vshrl.u32 2102212464, %v4421
      %v4431 = vor.u32 %v4429, %v4430
      %v4432 = vshll.u32 2102212464, %v4420
      %v4433 = vshrl.u32 920167782, %v4421
      %v4434 = vor.u32 %v4432, %v4433
      %v4435 = vshll.u32 920167782, %v4420
      %v4436 = vshrl.u32 1326507024, %v4421
      %v4437 = vor.u32 %v4435, %v4436
      %vm4438 = vcmp.lt.s32.totalorder %v4419, 1
      %vm4439 = vcmp.lt.s32.totalorder %v4419, 2
      %vm4440 = vcmp.lt.s32.totalorder %v4419, 3
      %vm4441 = vcmp.lt.s32.totalorder %v4419, 4
      %v4442 = vsel %vm4438, %v4422, %v4425
      %v4443 = vsel %vm4441, %v4431, 2102212464
      %v4444 = vsel %vm4440, %v4428, %v4443
      %v4445 = vsel %vm4439, %v4442, %v4444
      %v4446 = vsel %vm4438, %v4425, %v4428
      %v4447 = vsel %vm4441, %v4434, 920167782
      %v4448 = vsel %vm4440, %v4431, %v4447
      %v4449 = vsel %vm4439, %v4446, %v4448
      %v4450 = vsel %vm4438, %v4428, %v4431
      %v4451 = vsel %vm4441, %v4437, 1326507024
      %v4452 = vsel %vm4440, %v4434, %v4451
      %v4453 = vsel %vm4439, %v4450, %v4452
      %v4454 = vshll.u32 %v4414, 8
      %v4455 = vmul.u32.u64.compose %v4454, %v4453
      %v4456 = vextract.low.u32 %v4455
      %v4457 = vextract.high.u32 %v4455
      %v4458 = vmul.u32.u64.compose %v4454, %v4449
      %v4459 = vextract.low.u32 %v4458
      %v4460 = vextract.high.u32 %v4458
      %v4461 = vmul.u32 %v4454, %v4445
      %v4462 = vadd.s32 %v4457, %v4459
      %vm4463 = vc.u32 %v4457, %v4459
      %v4464 = vadd.s32 %v4460, 1
      %v4465 = vsel %vm4463, %v4464, %v4460
      %v4466 = vadd.s32 %v4461, %v4465
      %v4467 = vadd.s32 %v4466, 536870912
      %v4468 = vshrl.u32 %v4467, 30
      %v4469 = vshll.u32 %v4468, 30
      %v4470 = vsub.s32 %v4466, %v4469
      %vm4471 = vcmp.lt.s32.totalorder %v4470, 0
      %v4472 = vsub.s32 0, %v4470
      %v4473 = vsel %vm4471, %v4472, %v4470
      %v4474 = vclz %v4473
      %v4475 = vsub.s32 %v4474, 2
      %vm4476 = vcmp.gt.s32.totalorder 0, %v4475
      %v4477 = vsel %vm4476, 0, %v4475
      %v4478 = vsub.s32 32, %v4477
      %v4479 = vshll.u32 %v4470, %v4477
      %v4480 = vshrl.u32 %v4462, %v4478
      %v4481 = vor.u32 %v4479, %v4480
      %v4482 = vsub.s32 4294967266, %v4477
      %v4483 = vadd.s32 %v4482, 127
      %v4484 = vshll.u32 %v4483, 23
      %v4485 = vor.u32 4788187, %v4484
      %v4486 = vand.u32 2147483647, %v4485
      %v4488 = vcvt.s32.f32 %v4481
      %v4489 = vmul.f32 %v4488, %v4486
      %v4490 = vxor.u32 %v4489, 2147483648
      %v4491 = vsel %vm4408, %v4490, %v4489
      %v4492 = vsub.s32 4, %v4468
      %v4493 = vsel %vm4408, %v4492, %v4468
      %v4494 = vsel %vm4407, %v4243, %v4491
      %v4495 = vsel %vm4407, 0, %v4493
      %v4496 = vcosq.f32.pop %v4494
      %v4497 = vsinq.f32.pop %v4494
      %vm4498 = vweird.f32 %v4243
      %v4499 = vadd.s32 %v4495, 3
      %v4500 = vand.u32 %v4499, 3
      %vm4501 = vcmp.lt.s32.totalorder %v4500, 2
      %vm4502 = vcmp.eq.s32.totalorder %v4500, 0
      %v4503 = vxor.u32 %v4497, 2147483648
      %v4504 = vsel %vm4502, %v4496, %v4503
      %vm4505 = vcmp.eq.s32.totalorder %v4500, 2
      %v4506 = vxor.u32 %v4496, 2147483648
      %v4507 = vsel %vm4505, %v4506, %v4497
      %v4508 = vsel %vm4501, %v4504, %v4507
      %v4509 = vsel %vm4498, nan, %v4508
      %v4510 = vand.u32 2147483647, %v4248
      %vm4511 = vcmp.le.f32.partialorder %v4510, 0.7853982
      %vm4512 = vcmp.lt.s32.totalorder %v4248, 0
      %v4513 = vand.u32 %v4248, 2139095040
      %v4514 = vshrl.u32 %v4513, 23
      %v4515 = vsub.s32 %v4514, 127
      %v4516 = vand.u32 2147483647, %v4248
      %v4517 = vand.u32 %v4516, 8388607
      %v4518 = vor.u32 %v4517, 8388608
      %v4519 = vsub.s32 0, %v4518
      %v4520 = vadd.s32 %v4515, 1
      %vm4521 = vcmp.gt.s32.totalorder %v4520, 0
      %v4522 = vsel %vm4521, %v4520, 0
      %v4523 = vshrl.u32 %v4522, 5
      %v4524 = vand.u32 %v4522, 31
      %v4525 = vsub.s32 32, %v4524
      %v4526 = vshrl.u32 683565275, %v4525
      %v4527 = vshll.u32 683565275, %v4524
      %v4528 = vshrl.u32 2475754826, %v4525
      %v4529 = vor.u32 %v4527, %v4528
      %v4530 = vshll.u32 2475754826, %v4524
      %v4531 = vshrl.u32 2131351028, %v4525
      %v4532 = vor.u32 %v4530, %v4531
      %v4533 = vshll.u32 2131351028, %v4524
      %v4534 = vshrl.u32 2102212464, %v4525
      %v4535 = vor.u32 %v4533, %v4534
      %v4536 = vshll.u32 2102212464, %v4524
      %v4537 = vshrl.u32 920167782, %v4525
      %v4538 = vor.u32 %v4536, %v4537
      %v4539 = vshll.u32 920167782, %v4524
      %v4540 = vshrl.u32 1326507024, %v4525
      %v4541 = vor.u32 %v4539, %v4540
      %vm4542 = vcmp.lt.s32.totalorder %v4523, 1
      %vm4543 = vcmp.lt.s32.totalorder %v4523, 2
      %vm4544 = vcmp.lt.s32.totalorder %v4523, 3
      %vm4545 = vcmp.lt.s32.totalorder %v4523, 4
      %v4546 = vsel %vm4542, %v4526, %v4529
      %v4547 = vsel %vm4545, %v4535, 2102212464
      %v4548 = vsel %vm4544, %v4532, %v4547
      %v4549 = vsel %vm4543, %v4546, %v4548
      %v4550 = vsel %vm4542, %v4529, %v4532
      %v4551 = vsel %vm4545, %v4538, 920167782
      %v4552 = vsel %vm4544, %v4535, %v4551
      %v4553 = vsel %vm4543, %v4550, %v4552
      %v4554 = vsel %vm4542, %v4532, %v4535
      %v4555 = vsel %vm4545, %v4541, 1326507024
      %v4556 = vsel %vm4544, %v4538, %v4555
      %v4557 = vsel %vm4543, %v4554, %v4556
      %v4558 = vshll.u32 %v4518, 8
      %v4559 = vmul.u32.u64.compose %v4558, %v4557
      %v4560 = vextract.low.u32 %v4559
      %v4561 = vextract.high.u32 %v4559
      %v4562 = vmul.u32.u64.compose %v4558, %v4553
      %v4563 = vextract.low.u32 %v4562
      %v4564 = vextract.high.u32 %v4562
      %v4565 = vmul.u32 %v4558, %v4549
      %v4566 = vadd.s32 %v4561, %v4563
      %vm4567 = vc.u32 %v4561, %v4563
      %v4568 = vadd.s32 %v4564, 1
      %v4569 = vsel %vm4567, %v4568, %v4564
      %v4570 = vadd.s32 %v4565, %v4569
      %v4571 = vadd.s32 %v4570, 536870912
      %v4572 = vshrl.u32 %v4571, 30
      %v4573 = vshll.u32 %v4572, 30
      %v4574 = vsub.s32 %v4570, %v4573
      %vm4575 = vcmp.lt.s32.totalorder %v4574, 0
      %v4576 = vsub.s32 0, %v4574
      %v4577 = vsel %vm4575, %v4576, %v4574
      %v4578 = vclz %v4577
      %v4579 = vsub.s32 %v4578, 2
      %vm4580 = vcmp.gt.s32.totalorder 0, %v4579
      %v4581 = vsel %vm4580, 0, %v4579
      %v4582 = vsub.s32 32, %v4581
      %v4583 = vshll.u32 %v4574, %v4581
      %v4584 = vshrl.u32 %v4566, %v4582
      %v4585 = vor.u32 %v4583, %v4584
      %v4586 = vsub.s32 4294967266, %v4581
      %v4587 = vadd.s32 %v4586, 127
      %v4588 = vshll.u32 %v4587, 23
      %v4589 = vor.u32 4788187, %v4588
      %v4590 = vand.u32 2147483647, %v4589
      %v4592 = vcvt.s32.f32 %v4585
      %v4593 = vmul.f32 %v4592, %v4590
      %v4594 = vxor.u32 %v4593, 2147483648
      %v4595 = vsel %vm4512, %v4594, %v4593
      %v4596 = vsub.s32 4, %v4572
      %v4597 = vsel %vm4512, %v4596, %v4572
      %v4598 = vsel %vm4511, %v4248, %v4595
      %v4599 = vsel %vm4511, 0, %v4597
      %v4600 = vcosq.f32.pop %v4598
      %v4601 = vsinq.f32.pop %v4598
      %vm4602 = vweird.f32 %v4248
      %v4603 = vadd.s32 %v4599, 3
      %v4604 = vand.u32 %v4603, 3
      %vm4605 = vcmp.lt.s32.totalorder %v4604, 2
      %vm4606 = vcmp.eq.s32.totalorder %v4604, 0
      %v4607 = vxor.u32 %v4601, 2147483648
      %v4608 = vsel %vm4606, %v4600, %v4607
      %vm4609 = vcmp.eq.s32.totalorder %v4604, 2
      %v4610 = vxor.u32 %v4600, 2147483648
      %v4611 = vsel %vm4609, %v4610, %v4601
      %v4612 = vsel %vm4605, %v4608, %v4611
      %v4613 = vsel %vm4602, nan, %v4612
      %v4614 = vand.u32 2147483647, %v4251
      %vm4615 = vcmp.le.f32.partialorder %v4614, 0.7853982
      %vm4616 = vcmp.lt.s32.totalorder %v4251, 0
      %v4617 = vand.u32 %v4251, 2139095040
      %v4618 = vshrl.u32 %v4617, 23
      %v4619 = vsub.s32 %v4618, 127
      %v4620 = vand.u32 2147483647, %v4251
      %v4621 = vand.u32 %v4620, 8388607
      %v4622 = vor.u32 %v4621, 8388608
      %v4623 = vsub.s32 0, %v4622
      %v4624 = vadd.s32 %v4619, 1
      %vm4625 = vcmp.gt.s32.totalorder %v4624, 0
      %v4626 = vsel %vm4625, %v4624, 0
      %v4627 = vshrl.u32 %v4626, 5
      %v4628 = vand.u32 %v4626, 31
      %v4629 = vsub.s32 32, %v4628
      %v4630 = vshrl.u32 683565275, %v4629
      %v4631 = vshll.u32 683565275, %v4628
      %v4632 = vshrl.u32 2475754826, %v4629
      %v4633 = vor.u32 %v4631, %v4632
      %v4634 = vshll.u32 2475754826, %v4628
      %v4635 = vshrl.u32 2131351028, %v4629
      %v4636 = vor.u32 %v4634, %v4635
      %v4637 = vshll.u32 2131351028, %v4628
      %v4638 = vshrl.u32 2102212464, %v4629
      %v4639 = vor.u32 %v4637, %v4638
      %v4640 = vshll.u32 2102212464, %v4628
      %v4641 = vshrl.u32 920167782, %v4629
      %v4642 = vor.u32 %v4640, %v4641
      %v4643 = vshll.u32 920167782, %v4628
      %v4644 = vshrl.u32 1326507024, %v4629
      %v4645 = vor.u32 %v4643, %v4644
      %vm4646 = vcmp.lt.s32.totalorder %v4627, 1
      %vm4647 = vcmp.lt.s32.totalorder %v4627, 2
      %vm4648 = vcmp.lt.s32.totalorder %v4627, 3
      %vm4649 = vcmp.lt.s32.totalorder %v4627, 4
      %v4650 = vsel %vm4646, %v4630, %v4633
      %v4651 = vsel %vm4649, %v4639, 2102212464
      %v4652 = vsel %vm4648, %v4636, %v4651
      %v4653 = vsel %vm4647, %v4650, %v4652
      %v4654 = vsel %vm4646, %v4633, %v4636
      %v4655 = vsel %vm4649, %v4642, 920167782
      %v4656 = vsel %vm4648, %v4639, %v4655
      %v4657 = vsel %vm4647, %v4654, %v4656
      %v4658 = vsel %vm4646, %v4636, %v4639
      %v4659 = vsel %vm4649, %v4645, 1326507024
      %v4660 = vsel %vm4648, %v4642, %v4659
      %v4661 = vsel %vm4647, %v4658, %v4660
      %v4662 = vshll.u32 %v4622, 8
      %v4663 = vmul.u32.u64.compose %v4662, %v4661
      %v4664 = vextract.low.u32 %v4663
      %v4665 = vextract.high.u32 %v4663
      %v4666 = vmul.u32.u64.compose %v4662, %v4657
      %v4667 = vextract.low.u32 %v4666
      %v4668 = vextract.high.u32 %v4666
      %v4669 = vmul.u32 %v4662, %v4653
      %v4670 = vadd.s32 %v4665, %v4667
      %vm4671 = vc.u32 %v4665, %v4667
      %v4672 = vadd.s32 %v4668, 1
      %v4673 = vsel %vm4671, %v4672, %v4668
      %v4674 = vadd.s32 %v4669, %v4673
      %v4675 = vadd.s32 %v4674, 536870912
      %v4676 = vshrl.u32 %v4675, 30
      %v4677 = vshll.u32 %v4676, 30
      %v4678 = vsub.s32 %v4674, %v4677
      %vm4679 = vcmp.lt.s32.totalorder %v4678, 0
      %v4680 = vsub.s32 0, %v4678
      %v4681 = vsel %vm4679, %v4680, %v4678
      %v4682 = vclz %v4681
      %v4683 = vsub.s32 %v4682, 2
      %vm4684 = vcmp.gt.s32.totalorder 0, %v4683
      %v4685 = vsel %vm4684, 0, %v4683
      %v4686 = vsub.s32 32, %v4685
      %v4687 = vshll.u32 %v4678, %v4685
      %v4688 = vshrl.u32 %v4670, %v4686
      %v4689 = vor.u32 %v4687, %v4688
      %v4690 = vsub.s32 4294967266, %v4685
      %v4691 = vadd.s32 %v4690, 127
      %v4692 = vshll.u32 %v4691, 23
      %v4693 = vor.u32 4788187, %v4692
      %v4694 = vand.u32 2147483647, %v4693
      %v4696 = vcvt.s32.f32 %v4689
      %v4697 = vmul.f32 %v4696, %v4694
      %v4698 = vxor.u32 %v4697, 2147483648
      %v4699 = vsel %vm4616, %v4698, %v4697
      %v4700 = vsub.s32 4, %v4676
      %v4701 = vsel %vm4616, %v4700, %v4676
      %v4702 = vsel %vm4615, %v4251, %v4699
      %v4703 = vsel %vm4615, 0, %v4701
      %v4704 = vcosq.f32.pop %v4702
      %v4705 = vsinq.f32.pop %v4702
      %vm4706 = vweird.f32 %v4251
      %v4707 = vadd.s32 %v4703, 3
      %v4708 = vand.u32 %v4707, 3
      %vm4709 = vcmp.lt.s32.totalorder %v4708, 2
      %vm4710 = vcmp.eq.s32.totalorder %v4708, 0
      %v4711 = vxor.u32 %v4705, 2147483648
      %v4712 = vsel %vm4710, %v4704, %v4711
      %vm4713 = vcmp.eq.s32.totalorder %v4708, 2
      %v4714 = vxor.u32 %v4704, 2147483648
      %v4715 = vsel %vm4713, %v4714, %v4705
      %v4716 = vsel %vm4709, %v4712, %v4715
      %v4717 = vsel %vm4706, nan, %v4716
      %v4718 = vand.u32 2147483647, %v4256
      %vm4719 = vcmp.le.f32.partialorder %v4718, 0.7853982
      %vm4720 = vcmp.lt.s32.totalorder %v4256, 0
      %v4721 = vand.u32 %v4256, 2139095040
      %v4722 = vshrl.u32 %v4721, 23
      %v4723 = vsub.s32 %v4722, 127
      %v4724 = vand.u32 2147483647, %v4256
      %v4725 = vand.u32 %v4724, 8388607
      %v4726 = vor.u32 %v4725, 8388608
      %v4727 = vsub.s32 0, %v4726
      %v4728 = vadd.s32 %v4723, 1
      %vm4729 = vcmp.gt.s32.totalorder %v4728, 0
      %v4730 = vsel %vm4729, %v4728, 0
      %v4731 = vshrl.u32 %v4730, 5
      %v4732 = vand.u32 %v4730, 31
      %v4733 = vsub.s32 32, %v4732
      %v4734 = vshrl.u32 683565275, %v4733
      %v4735 = vshll.u32 683565275, %v4732
      %v4736 = vshrl.u32 2475754826, %v4733
      %v4737 = vor.u32 %v4735, %v4736
      %v4738 = vshll.u32 2475754826, %v4732
      %v4739 = vshrl.u32 2131351028, %v4733
      %v4740 = vor.u32 %v4738, %v4739
      %v4741 = vshll.u32 2131351028, %v4732
      %v4742 = vshrl.u32 2102212464, %v4733
      %v4743 = vor.u32 %v4741, %v4742
      %v4744 = vshll.u32 2102212464, %v4732
      %v4745 = vshrl.u32 920167782, %v4733
      %v4746 = vor.u32 %v4744, %v4745
      %v4747 = vshll.u32 920167782, %v4732
      %v4748 = vshrl.u32 1326507024, %v4733
      %v4749 = vor.u32 %v4747, %v4748
      %vm4750 = vcmp.lt.s32.totalorder %v4731, 1
      %vm4751 = vcmp.lt.s32.totalorder %v4731, 2
      %vm4752 = vcmp.lt.s32.totalorder %v4731, 3
      %vm4753 = vcmp.lt.s32.totalorder %v4731, 4
      %v4754 = vsel %vm4750, %v4734, %v4737
      %v4755 = vsel %vm4753, %v4743, 2102212464
      %v4756 = vsel %vm4752, %v4740, %v4755
      %v4757 = vsel %vm4751, %v4754, %v4756
      %v4758 = vsel %vm4750, %v4737, %v4740
      %v4759 = vsel %vm4753, %v4746, 920167782
      %v4760 = vsel %vm4752, %v4743, %v4759
      %v4761 = vsel %vm4751, %v4758, %v4760
      %v4762 = vsel %vm4750, %v4740, %v4743
      %v4763 = vsel %vm4753, %v4749, 1326507024
      %v4764 = vsel %vm4752, %v4746, %v4763
      %v4765 = vsel %vm4751, %v4762, %v4764
      %v4766 = vshll.u32 %v4726, 8
      %v4767 = vmul.u32.u64.compose %v4766, %v4765
      %v4768 = vextract.low.u32 %v4767
      %v4769 = vextract.high.u32 %v4767
      %v4770 = vmul.u32.u64.compose %v4766, %v4761
      %v4771 = vextract.low.u32 %v4770
      %v4772 = vextract.high.u32 %v4770
      %v4773 = vmul.u32 %v4766, %v4757
      %v4774 = vadd.s32 %v4769, %v4771
      %vm4775 = vc.u32 %v4769, %v4771
      %v4776 = vadd.s32 %v4772, 1
      %v4777 = vsel %vm4775, %v4776, %v4772
      %v4778 = vadd.s32 %v4773, %v4777
      %v4779 = vadd.s32 %v4778, 536870912
      %v4780 = vshrl.u32 %v4779, 30
      %v4781 = vshll.u32 %v4780, 30
      %v4782 = vsub.s32 %v4778, %v4781
      %vm4783 = vcmp.lt.s32.totalorder %v4782, 0
      %v4784 = vsub.s32 0, %v4782
      %v4785 = vsel %vm4783, %v4784, %v4782
      %v4786 = vclz %v4785
      %v4787 = vsub.s32 %v4786, 2
      %vm4788 = vcmp.gt.s32.totalorder 0, %v4787
      %v4789 = vsel %vm4788, 0, %v4787
      %v4790 = vsub.s32 32, %v4789
      %v4791 = vshll.u32 %v4782, %v4789
      %v4792 = vshrl.u32 %v4774, %v4790
      %v4793 = vor.u32 %v4791, %v4792
      %v4794 = vsub.s32 4294967266, %v4789
      %v4795 = vadd.s32 %v4794, 127
      %v4796 = vshll.u32 %v4795, 23
      %v4797 = vor.u32 4788187, %v4796
      %v4798 = vand.u32 2147483647, %v4797
      %v4800 = vcvt.s32.f32 %v4793
      %v4801 = vmul.f32 %v4800, %v4798
      %v4802 = vxor.u32 %v4801, 2147483648
      %v4803 = vsel %vm4720, %v4802, %v4801
      %v4804 = vsub.s32 4, %v4780
      %v4805 = vsel %vm4720, %v4804, %v4780
      %v4806 = vsel %vm4719, %v4256, %v4803
      %v4807 = vsel %vm4719, 0, %v4805
      %v4808 = vcosq.f32.pop %v4806
      %v4809 = vsinq.f32.pop %v4806
      %vm4810 = vweird.f32 %v4256
      %v4811 = vadd.s32 %v4807, 3
      %v4812 = vand.u32 %v4811, 3
      %vm4813 = vcmp.lt.s32.totalorder %v4812, 2
      %vm4814 = vcmp.eq.s32.totalorder %v4812, 0
      %v4815 = vxor.u32 %v4809, 2147483648
      %v4816 = vsel %vm4814, %v4808, %v4815
      %vm4817 = vcmp.eq.s32.totalorder %v4812, 2
      %v4818 = vxor.u32 %v4808, 2147483648
      %v4819 = vsel %vm4817, %v4818, %v4809
      %v4820 = vsel %vm4813, %v4816, %v4819
      %v4821 = vsel %vm4810, nan, %v4820
      %v4822 = vand.u32 2147483647, %v4259
      %vm4823 = vcmp.le.f32.partialorder %v4822, 0.7853982
      %vm4824 = vcmp.lt.s32.totalorder %v4259, 0
      %v4825 = vand.u32 %v4259, 2139095040
      %v4826 = vshrl.u32 %v4825, 23
      %v4827 = vsub.s32 %v4826, 127
      %v4828 = vand.u32 2147483647, %v4259
      %v4829 = vand.u32 %v4828, 8388607
      %v4830 = vor.u32 %v4829, 8388608
      %v4831 = vsub.s32 0, %v4830
      %v4832 = vadd.s32 %v4827, 1
      %vm4833 = vcmp.gt.s32.totalorder %v4832, 0
      %v4834 = vsel %vm4833, %v4832, 0
      %v4835 = vshrl.u32 %v4834, 5
      %v4836 = vand.u32 %v4834, 31
      %v4837 = vsub.s32 32, %v4836
      %v4838 = vshrl.u32 683565275, %v4837
      %v4839 = vshll.u32 683565275, %v4836
      %v4840 = vshrl.u32 2475754826, %v4837
      %v4841 = vor.u32 %v4839, %v4840
      %v4842 = vshll.u32 2475754826, %v4836
      %v4843 = vshrl.u32 2131351028, %v4837
      %v4844 = vor.u32 %v4842, %v4843
      %v4845 = vshll.u32 2131351028, %v4836
      %v4846 = vshrl.u32 2102212464, %v4837
      %v4847 = vor.u32 %v4845, %v4846
      %v4848 = vshll.u32 2102212464, %v4836
      %v4849 = vshrl.u32 920167782, %v4837
      %v4850 = vor.u32 %v4848, %v4849
      %v4851 = vshll.u32 920167782, %v4836
      %v4852 = vshrl.u32 1326507024, %v4837
      %v4853 = vor.u32 %v4851, %v4852
      %vm4854 = vcmp.lt.s32.totalorder %v4835, 1
      %vm4855 = vcmp.lt.s32.totalorder %v4835, 2
      %vm4856 = vcmp.lt.s32.totalorder %v4835, 3
      %vm4857 = vcmp.lt.s32.totalorder %v4835, 4
      %v4858 = vsel %vm4854, %v4838, %v4841
      %v4859 = vsel %vm4857, %v4847, 2102212464
      %v4860 = vsel %vm4856, %v4844, %v4859
      %v4861 = vsel %vm4855, %v4858, %v4860
      %v4862 = vsel %vm4854, %v4841, %v4844
      %v4863 = vsel %vm4857, %v4850, 920167782
      %v4864 = vsel %vm4856, %v4847, %v4863
      %v4865 = vsel %vm4855, %v4862, %v4864
      %v4866 = vsel %vm4854, %v4844, %v4847
      %v4867 = vsel %vm4857, %v4853, 1326507024
      %v4868 = vsel %vm4856, %v4850, %v4867
      %v4869 = vsel %vm4855, %v4866, %v4868
      %v4870 = vshll.u32 %v4830, 8
      %v4871 = vmul.u32.u64.compose %v4870, %v4869
      %v4872 = vextract.low.u32 %v4871
      %v4873 = vextract.high.u32 %v4871
      %v4874 = vmul.u32.u64.compose %v4870, %v4865
      %v4875 = vextract.low.u32 %v4874
      %v4876 = vextract.high.u32 %v4874
      %v4877 = vmul.u32 %v4870, %v4861
      %v4878 = vadd.s32 %v4873, %v4875
      %vm4879 = vc.u32 %v4873, %v4875
      %v4880 = vadd.s32 %v4876, 1
      %v4881 = vsel %vm4879, %v4880, %v4876
      %v4882 = vadd.s32 %v4877, %v4881
      %v4883 = vadd.s32 %v4882, 536870912
      %v4884 = vshrl.u32 %v4883, 30
      %v4885 = vshll.u32 %v4884, 30
      %v4886 = vsub.s32 %v4882, %v4885
      %vm4887 = vcmp.lt.s32.totalorder %v4886, 0
      %v4888 = vsub.s32 0, %v4886
      %v4889 = vsel %vm4887, %v4888, %v4886
      %v4890 = vclz %v4889
      %v4891 = vsub.s32 %v4890, 2
      %vm4892 = vcmp.gt.s32.totalorder 0, %v4891
      %v4893 = vsel %vm4892, 0, %v4891
      %v4894 = vsub.s32 32, %v4893
      %v4895 = vshll.u32 %v4886, %v4893
      %v4896 = vshrl.u32 %v4878, %v4894
      %v4897 = vor.u32 %v4895, %v4896
      %v4898 = vsub.s32 4294967266, %v4893
      %v4899 = vadd.s32 %v4898, 127
      %v4900 = vshll.u32 %v4899, 23
      %v4901 = vor.u32 4788187, %v4900
      %v4902 = vand.u32 2147483647, %v4901
      %v4904 = vcvt.s32.f32 %v4897
      %v4905 = vmul.f32 %v4904, %v4902
      %v4906 = vxor.u32 %v4905, 2147483648
      %v4907 = vsel %vm4824, %v4906, %v4905
      %v4908 = vsub.s32 4, %v4884
      %v4909 = vsel %vm4824, %v4908, %v4884
      %v4910 = vsel %vm4823, %v4259, %v4907
      %v4911 = vsel %vm4823, 0, %v4909
      %v4912 = vcosq.f32.pop %v4910
      %v4913 = vsinq.f32.pop %v4910
      %vm4914 = vweird.f32 %v4259
      %v4915 = vadd.s32 %v4911, 3
      %v4916 = vand.u32 %v4915, 3
      %vm4917 = vcmp.lt.s32.totalorder %v4916, 2
      %vm4918 = vcmp.eq.s32.totalorder %v4916, 0
      %v4919 = vxor.u32 %v4913, 2147483648
      %v4920 = vsel %vm4918, %v4912, %v4919
      %vm4921 = vcmp.eq.s32.totalorder %v4916, 2
      %v4922 = vxor.u32 %v4912, 2147483648
      %v4923 = vsel %vm4921, %v4922, %v4913
      %v4924 = vsel %vm4917, %v4920, %v4923
      %v4925 = vsel %vm4914, nan, %v4924
      %v4926 = vand.u32 2147483647, %v4264
      %vm4927 = vcmp.le.f32.partialorder %v4926, 0.7853982
      %vm4928 = vcmp.lt.s32.totalorder %v4264, 0
      %v4929 = vand.u32 %v4264, 2139095040
      %v4930 = vshrl.u32 %v4929, 23
      %v4931 = vsub.s32 %v4930, 127
      %v4932 = vand.u32 2147483647, %v4264
      %v4933 = vand.u32 %v4932, 8388607
      %v4934 = vor.u32 %v4933, 8388608
      %v4935 = vsub.s32 0, %v4934
      %v4936 = vadd.s32 %v4931, 1
      %vm4937 = vcmp.gt.s32.totalorder %v4936, 0
      %v4938 = vsel %vm4937, %v4936, 0
      %v4939 = vshrl.u32 %v4938, 5
      %v4940 = vand.u32 %v4938, 31
      %v4941 = vsub.s32 32, %v4940
      %v4942 = vshrl.u32 683565275, %v4941
      %v4943 = vshll.u32 683565275, %v4940
      %v4944 = vshrl.u32 2475754826, %v4941
      %v4945 = vor.u32 %v4943, %v4944
      %v4946 = vshll.u32 2475754826, %v4940
      %v4947 = vshrl.u32 2131351028, %v4941
      %v4948 = vor.u32 %v4946, %v4947
      %v4949 = vshll.u32 2131351028, %v4940
      %v4950 = vshrl.u32 2102212464, %v4941
      %v4951 = vor.u32 %v4949, %v4950
      %v4952 = vshll.u32 2102212464, %v4940
      %v4953 = vshrl.u32 920167782, %v4941
      %v4954 = vor.u32 %v4952, %v4953
      %v4955 = vshll.u32 920167782, %v4940
      %v4956 = vshrl.u32 1326507024, %v4941
      %v4957 = vor.u32 %v4955, %v4956
      %vm4958 = vcmp.lt.s32.totalorder %v4939, 1
      %vm4959 = vcmp.lt.s32.totalorder %v4939, 2
      %vm4960 = vcmp.lt.s32.totalorder %v4939, 3
      %vm4961 = vcmp.lt.s32.totalorder %v4939, 4
      %v4962 = vsel %vm4958, %v4942, %v4945
      %v4963 = vsel %vm4961, %v4951, 2102212464
      %v4964 = vsel %vm4960, %v4948, %v4963
      %v4965 = vsel %vm4959, %v4962, %v4964
      %v4966 = vsel %vm4958, %v4945, %v4948
      %v4967 = vsel %vm4961, %v4954, 920167782
      %v4968 = vsel %vm4960, %v4951, %v4967
      %v4969 = vsel %vm4959, %v4966, %v4968
      %v4970 = vsel %vm4958, %v4948, %v4951
      %v4971 = vsel %vm4961, %v4957, 1326507024
      %v4972 = vsel %vm4960, %v4954, %v4971
      %v4973 = vsel %vm4959, %v4970, %v4972
      %v4974 = vshll.u32 %v4934, 8
      %v4975 = vmul.u32.u64.compose %v4974, %v4973
      %v4976 = vextract.low.u32 %v4975
      %v4977 = vextract.high.u32 %v4975
      %v4978 = vmul.u32.u64.compose %v4974, %v4969
      %v4979 = vextract.low.u32 %v4978
      %v4980 = vextract.high.u32 %v4978
      %v4981 = vmul.u32 %v4974, %v4965
      %v4982 = vadd.s32 %v4977, %v4979
      %vm4983 = vc.u32 %v4977, %v4979
      %v4984 = vadd.s32 %v4980, 1
      %v4985 = vsel %vm4983, %v4984, %v4980
      %v4986 = vadd.s32 %v4981, %v4985
      %v4987 = vadd.s32 %v4986, 536870912
      %v4988 = vshrl.u32 %v4987, 30
      %v4989 = vshll.u32 %v4988, 30
      %v4990 = vsub.s32 %v4986, %v4989
      %vm4991 = vcmp.lt.s32.totalorder %v4990, 0
      %v4992 = vsub.s32 0, %v4990
      %v4993 = vsel %vm4991, %v4992, %v4990
      %v4994 = vclz %v4993
      %v4995 = vsub.s32 %v4994, 2
      %vm4996 = vcmp.gt.s32.totalorder 0, %v4995
      %v4997 = vsel %vm4996, 0, %v4995
      %v4998 = vsub.s32 32, %v4997
      %v4999 = vshll.u32 %v4990, %v4997
      %v5000 = vshrl.u32 %v4982, %v4998
      %v5001 = vor.u32 %v4999, %v5000
      %v5002 = vsub.s32 4294967266, %v4997
      %v5003 = vadd.s32 %v5002, 127
      %v5004 = vshll.u32 %v5003, 23
      %v5005 = vor.u32 4788187, %v5004
      %v5006 = vand.u32 2147483647, %v5005
      %v5008 = vcvt.s32.f32 %v5001
      %v5009 = vmul.f32 %v5008, %v5006
      %v5010 = vxor.u32 %v5009, 2147483648
      %v5011 = vsel %vm4928, %v5010, %v5009
      %v5012 = vsub.s32 4, %v4988
      %v5013 = vsel %vm4928, %v5012, %v4988
      %v5014 = vsel %vm4927, %v4264, %v5011
      %v5015 = vsel %vm4927, 0, %v5013
      %v5016 = vcosq.f32.pop %v5014
      %v5017 = vsinq.f32.pop %v5014
      %vm5018 = vweird.f32 %v4264
      %v5019 = vadd.s32 %v5015, 3
      %v5020 = vand.u32 %v5019, 3
      %vm5021 = vcmp.lt.s32.totalorder %v5020, 2
      %vm5022 = vcmp.eq.s32.totalorder %v5020, 0
      %v5023 = vxor.u32 %v5017, 2147483648
      %v5024 = vsel %vm5022, %v5016, %v5023
      %vm5025 = vcmp.eq.s32.totalorder %v5020, 2
      %v5026 = vxor.u32 %v5016, 2147483648
      %v5027 = vsel %vm5025, %v5026, %v5017
      %v5028 = vsel %vm5021, %v5024, %v5027
      %v5029 = vsel %vm5018, nan, %v5028
      %v5030 = vand.u32 2147483647, %v4267
      %vm5031 = vcmp.le.f32.partialorder %v5030, 0.7853982
      %vm5032 = vcmp.lt.s32.totalorder %v4267, 0
      %v5033 = vand.u32 %v4267, 2139095040
      %v5034 = vshrl.u32 %v5033, 23
      %v5035 = vsub.s32 %v5034, 127
      %v5036 = vand.u32 2147483647, %v4267
      %v5037 = vand.u32 %v5036, 8388607
      %v5038 = vor.u32 %v5037, 8388608
      %v5039 = vsub.s32 0, %v5038
      %v5040 = vadd.s32 %v5035, 1
      %vm5041 = vcmp.gt.s32.totalorder %v5040, 0
      %v5042 = vsel %vm5041, %v5040, 0
      %v5043 = vshrl.u32 %v5042, 5
      %v5044 = vand.u32 %v5042, 31
      %v5045 = vsub.s32 32, %v5044
      %v5046 = vshrl.u32 683565275, %v5045
      %v5047 = vshll.u32 683565275, %v5044
      %v5048 = vshrl.u32 2475754826, %v5045
      %v5049 = vor.u32 %v5047, %v5048
      %v5050 = vshll.u32 2475754826, %v5044
      %v5051 = vshrl.u32 2131351028, %v5045
      %v5052 = vor.u32 %v5050, %v5051
      %v5053 = vshll.u32 2131351028, %v5044
      %v5054 = vshrl.u32 2102212464, %v5045
      %v5055 = vor.u32 %v5053, %v5054
      %v5056 = vshll.u32 2102212464, %v5044
      %v5057 = vshrl.u32 920167782, %v5045
      %v5058 = vor.u32 %v5056, %v5057
      %v5059 = vshll.u32 920167782, %v5044
      %v5060 = vshrl.u32 1326507024, %v5045
      %v5061 = vor.u32 %v5059, %v5060
      %vm5062 = vcmp.lt.s32.totalorder %v5043, 1
      %vm5063 = vcmp.lt.s32.totalorder %v5043, 2
      %vm5064 = vcmp.lt.s32.totalorder %v5043, 3
      %vm5065 = vcmp.lt.s32.totalorder %v5043, 4
      %v5066 = vsel %vm5062, %v5046, %v5049
      %v5067 = vsel %vm5065, %v5055, 2102212464
      %v5068 = vsel %vm5064, %v5052, %v5067
      %v5069 = vsel %vm5063, %v5066, %v5068
      %v5070 = vsel %vm5062, %v5049, %v5052
      %v5071 = vsel %vm5065, %v5058, 920167782
      %v5072 = vsel %vm5064, %v5055, %v5071
      %v5073 = vsel %vm5063, %v5070, %v5072
      %v5074 = vsel %vm5062, %v5052, %v5055
      %v5075 = vsel %vm5065, %v5061, 1326507024
      %v5076 = vsel %vm5064, %v5058, %v5075
      %v5077 = vsel %vm5063, %v5074, %v5076
      %v5078 = vshll.u32 %v5038, 8
      %v5079 = vmul.u32.u64.compose %v5078, %v5077
      %v5080 = vextract.low.u32 %v5079
      %v5081 = vextract.high.u32 %v5079
      %v5082 = vmul.u32.u64.compose %v5078, %v5073
      %v5083 = vextract.low.u32 %v5082
      %v5084 = vextract.high.u32 %v5082
      %v5085 = vmul.u32 %v5078, %v5069
      %v5086 = vadd.s32 %v5081, %v5083
      %vm5087 = vc.u32 %v5081, %v5083
      %v5088 = vadd.s32 %v5084, 1
      %v5089 = vsel %vm5087, %v5088, %v5084
      %v5090 = vadd.s32 %v5085, %v5089
      %v5091 = vadd.s32 %v5090, 536870912
      %v5092 = vshrl.u32 %v5091, 30
      %v5093 = vshll.u32 %v5092, 30
      %v5094 = vsub.s32 %v5090, %v5093
      %vm5095 = vcmp.lt.s32.totalorder %v5094, 0
      %v5096 = vsub.s32 0, %v5094
      %v5097 = vsel %vm5095, %v5096, %v5094
      %v5098 = vclz %v5097
      %v5099 = vsub.s32 %v5098, 2
      %vm5100 = vcmp.gt.s32.totalorder 0, %v5099
      %v5101 = vsel %vm5100, 0, %v5099
      %v5102 = vsub.s32 32, %v5101
      %v5103 = vshll.u32 %v5094, %v5101
      %v5104 = vshrl.u32 %v5086, %v5102
      %v5105 = vor.u32 %v5103, %v5104
      %v5106 = vsub.s32 4294967266, %v5101
      %v5107 = vadd.s32 %v5106, 127
      %v5108 = vshll.u32 %v5107, 23
      %v5109 = vor.u32 4788187, %v5108
      %v5110 = vand.u32 2147483647, %v5109
      %v5112 = vcvt.s32.f32 %v5105
      %v5113 = vmul.f32 %v5112, %v5110
      %v5114 = vxor.u32 %v5113, 2147483648
      %v5115 = vsel %vm5032, %v5114, %v5113
      %v5116 = vsub.s32 4, %v5092
      %v5117 = vsel %vm5032, %v5116, %v5092
      %v5118 = vsel %vm5031, %v4267, %v5115
      %v5119 = vsel %vm5031, 0, %v5117
      %v5120 = vcosq.f32.pop %v5118
      %v5121 = vsinq.f32.pop %v5118
      %vm5122 = vweird.f32 %v4267
      %v5123 = vadd.s32 %v5119, 3
      %v5124 = vand.u32 %v5123, 3
      %vm5125 = vcmp.lt.s32.totalorder %v5124, 2
      %vm5126 = vcmp.eq.s32.totalorder %v5124, 0
      %v5127 = vxor.u32 %v5121, 2147483648
      %v5128 = vsel %vm5126, %v5120, %v5127
      %vm5129 = vcmp.eq.s32.totalorder %v5124, 2
      %v5130 = vxor.u32 %v5120, 2147483648
      %v5131 = vsel %vm5129, %v5130, %v5121
      %v5132 = vsel %vm5125, %v5128, %v5131
      %v5133 = vsel %vm5122, nan, %v5132
      %v5134 = vand.u32 2147483647, %v4272
      %vm5135 = vcmp.le.f32.partialorder %v5134, 0.7853982
      %vm5136 = vcmp.lt.s32.totalorder %v4272, 0
      %v5137 = vand.u32 %v4272, 2139095040
      %v5138 = vshrl.u32 %v5137, 23
      %v5139 = vsub.s32 %v5138, 127
      %v5140 = vand.u32 2147483647, %v4272
      %v5141 = vand.u32 %v5140, 8388607
      %v5142 = vor.u32 %v5141, 8388608
      %v5143 = vsub.s32 0, %v5142
      %v5144 = vadd.s32 %v5139, 1
      %vm5145 = vcmp.gt.s32.totalorder %v5144, 0
      %v5146 = vsel %vm5145, %v5144, 0
      %v5147 = vshrl.u32 %v5146, 5
      %v5148 = vand.u32 %v5146, 31
      %v5149 = vsub.s32 32, %v5148
      %v5150 = vshrl.u32 683565275, %v5149
      %v5151 = vshll.u32 683565275, %v5148
      %v5152 = vshrl.u32 2475754826, %v5149
      %v5153 = vor.u32 %v5151, %v5152
      %v5154 = vshll.u32 2475754826, %v5148
      %v5155 = vshrl.u32 2131351028, %v5149
      %v5156 = vor.u32 %v5154, %v5155
      %v5157 = vshll.u32 2131351028, %v5148
      %v5158 = vshrl.u32 2102212464, %v5149
      %v5159 = vor.u32 %v5157, %v5158
      %v5160 = vshll.u32 2102212464, %v5148
      %v5161 = vshrl.u32 920167782, %v5149
      %v5162 = vor.u32 %v5160, %v5161
      %v5163 = vshll.u32 920167782, %v5148
      %v5164 = vshrl.u32 1326507024, %v5149
      %v5165 = vor.u32 %v5163, %v5164
      %vm5166 = vcmp.lt.s32.totalorder %v5147, 1
      %vm5167 = vcmp.lt.s32.totalorder %v5147, 2
      %vm5168 = vcmp.lt.s32.totalorder %v5147, 3
      %vm5169 = vcmp.lt.s32.totalorder %v5147, 4
      %v5170 = vsel %vm5166, %v5150, %v5153
      %v5171 = vsel %vm5169, %v5159, 2102212464
      %v5172 = vsel %vm5168, %v5156, %v5171
      %v5173 = vsel %vm5167, %v5170, %v5172
      %v5174 = vsel %vm5166, %v5153, %v5156
      %v5175 = vsel %vm5169, %v5162, 920167782
      %v5176 = vsel %vm5168, %v5159, %v5175
      %v5177 = vsel %vm5167, %v5174, %v5176
      %v5178 = vsel %vm5166, %v5156, %v5159
      %v5179 = vsel %vm5169, %v5165, 1326507024
      %v5180 = vsel %vm5168, %v5162, %v5179
      %v5181 = vsel %vm5167, %v5178, %v5180
      %v5182 = vshll.u32 %v5142, 8
      %v5183 = vmul.u32.u64.compose %v5182, %v5181
      %v5184 = vextract.low.u32 %v5183
      %v5185 = vextract.high.u32 %v5183
      %v5186 = vmul.u32.u64.compose %v5182, %v5177
      %v5187 = vextract.low.u32 %v5186
      %v5188 = vextract.high.u32 %v5186
      %v5189 = vmul.u32 %v5182, %v5173
      %v5190 = vadd.s32 %v5185, %v5187
      %vm5191 = vc.u32 %v5185, %v5187
      %v5192 = vadd.s32 %v5188, 1
      %v5193 = vsel %vm5191, %v5192, %v5188
      %v5194 = vadd.s32 %v5189, %v5193
      %v5195 = vadd.s32 %v5194, 536870912
      %v5196 = vshrl.u32 %v5195, 30
      %v5197 = vshll.u32 %v5196, 30
      %v5198 = vsub.s32 %v5194, %v5197
      %vm5199 = vcmp.lt.s32.totalorder %v5198, 0
      %v5200 = vsub.s32 0, %v5198
      %v5201 = vsel %vm5199, %v5200, %v5198
      %v5202 = vclz %v5201
      %v5203 = vsub.s32 %v5202, 2
      %vm5204 = vcmp.gt.s32.totalorder 0, %v5203
      %v5205 = vsel %vm5204, 0, %v5203
      %v5206 = vsub.s32 32, %v5205
      %v5207 = vshll.u32 %v5198, %v5205
      %v5208 = vshrl.u32 %v5190, %v5206
      %v5209 = vor.u32 %v5207, %v5208
      %v5210 = vsub.s32 4294967266, %v5205
      %v5211 = vadd.s32 %v5210, 127
      %v5212 = vshll.u32 %v5211, 23
      %v5213 = vor.u32 4788187, %v5212
      %v5214 = vand.u32 2147483647, %v5213
      %v5216 = vcvt.s32.f32 %v5209
      %v5217 = vmul.f32 %v5216, %v5214
      %v5218 = vxor.u32 %v5217, 2147483648
      %v5219 = vsel %vm5136, %v5218, %v5217
      %v5220 = vsub.s32 4, %v5196
      %v5221 = vsel %vm5136, %v5220, %v5196
      %v5222 = vsel %vm5135, %v4272, %v5219
      %v5223 = vsel %vm5135, 0, %v5221
      %v5224 = vcosq.f32.pop %v5222
      %v5225 = vsinq.f32.pop %v5222
      %vm5226 = vweird.f32 %v4272
      %v5227 = vadd.s32 %v5223, 3
      %v5228 = vand.u32 %v5227, 3
      %vm5229 = vcmp.lt.s32.totalorder %v5228, 2
      %vm5230 = vcmp.eq.s32.totalorder %v5228, 0
      %v5231 = vxor.u32 %v5225, 2147483648
      %v5232 = vsel %vm5230, %v5224, %v5231
      %vm5233 = vcmp.eq.s32.totalorder %v5228, 2
      %v5234 = vxor.u32 %v5224, 2147483648
      %v5235 = vsel %vm5233, %v5234, %v5225
      %v5236 = vsel %vm5229, %v5232, %v5235
      %v5237 = vsel %vm5226, nan, %v5236
      %v5238 = vand.u32 2147483647, %v4275
      %vm5239 = vcmp.le.f32.partialorder %v5238, 0.7853982
      %vm5240 = vcmp.lt.s32.totalorder %v4275, 0
      %v5241 = vand.u32 %v4275, 2139095040
      %v5242 = vshrl.u32 %v5241, 23
      %v5243 = vsub.s32 %v5242, 127
      %v5244 = vand.u32 2147483647, %v4275
      %v5245 = vand.u32 %v5244, 8388607
      %v5246 = vor.u32 %v5245, 8388608
      %v5247 = vsub.s32 0, %v5246
      %v5248 = vadd.s32 %v5243, 1
      %vm5249 = vcmp.gt.s32.totalorder %v5248, 0
      %v5250 = vsel %vm5249, %v5248, 0
      %v5251 = vshrl.u32 %v5250, 5
      %v5252 = vand.u32 %v5250, 31
      %v5253 = vsub.s32 32, %v5252
      %v5254 = vshrl.u32 683565275, %v5253
      %v5255 = vshll.u32 683565275, %v5252
      %v5256 = vshrl.u32 2475754826, %v5253
      %v5257 = vor.u32 %v5255, %v5256
      %v5258 = vshll.u32 2475754826, %v5252
      %v5259 = vshrl.u32 2131351028, %v5253
      %v5260 = vor.u32 %v5258, %v5259
      %v5261 = vshll.u32 2131351028, %v5252
      %v5262 = vshrl.u32 2102212464, %v5253
      %v5263 = vor.u32 %v5261, %v5262
      %v5264 = vshll.u32 2102212464, %v5252
      %v5265 = vshrl.u32 920167782, %v5253
      %v5266 = vor.u32 %v5264, %v5265
      %v5267 = vshll.u32 920167782, %v5252
      %v5268 = vshrl.u32 1326507024, %v5253
      %v5269 = vor.u32 %v5267, %v5268
      %vm5270 = vcmp.lt.s32.totalorder %v5251, 1
      %vm5271 = vcmp.lt.s32.totalorder %v5251, 2
      %vm5272 = vcmp.lt.s32.totalorder %v5251, 3
      %vm5273 = vcmp.lt.s32.totalorder %v5251, 4
      %v5274 = vsel %vm5270, %v5254, %v5257
      %v5275 = vsel %vm5273, %v5263, 2102212464
      %v5276 = vsel %vm5272, %v5260, %v5275
      %v5277 = vsel %vm5271, %v5274, %v5276
      %v5278 = vsel %vm5270, %v5257, %v5260
      %v5279 = vsel %vm5273, %v5266, 920167782
      %v5280 = vsel %vm5272, %v5263, %v5279
      %v5281 = vsel %vm5271, %v5278, %v5280
      %v5282 = vsel %vm5270, %v5260, %v5263
      %v5283 = vsel %vm5273, %v5269, 1326507024
      %v5284 = vsel %vm5272, %v5266, %v5283
      %v5285 = vsel %vm5271, %v5282, %v5284
      %v5286 = vshll.u32 %v5246, 8
      %v5287 = vmul.u32.u64.compose %v5286, %v5285
      %v5288 = vextract.low.u32 %v5287
      %v5289 = vextract.high.u32 %v5287
      %v5290 = vmul.u32.u64.compose %v5286, %v5281
      %v5291 = vextract.low.u32 %v5290
      %v5292 = vextract.high.u32 %v5290
      %v5293 = vmul.u32 %v5286, %v5277
      %v5294 = vadd.s32 %v5289, %v5291
      %vm5295 = vc.u32 %v5289, %v5291
      %v5296 = vadd.s32 %v5292, 1
      %v5297 = vsel %vm5295, %v5296, %v5292
      %v5298 = vadd.s32 %v5293, %v5297
      %v5299 = vadd.s32 %v5298, 536870912
      %v5300 = vshrl.u32 %v5299, 30
      %v5301 = vshll.u32 %v5300, 30
      %v5302 = vsub.s32 %v5298, %v5301
      %vm5303 = vcmp.lt.s32.totalorder %v5302, 0
      %v5304 = vsub.s32 0, %v5302
      %v5305 = vsel %vm5303, %v5304, %v5302
      %v5306 = vclz %v5305
      %v5307 = vsub.s32 %v5306, 2
      %vm5308 = vcmp.gt.s32.totalorder 0, %v5307
      %v5309 = vsel %vm5308, 0, %v5307
      %v5310 = vsub.s32 32, %v5309
      %v5311 = vshll.u32 %v5302, %v5309
      %v5312 = vshrl.u32 %v5294, %v5310
      %v5313 = vor.u32 %v5311, %v5312
      %v5314 = vsub.s32 4294967266, %v5309
      %v5315 = vadd.s32 %v5314, 127
      %v5316 = vshll.u32 %v5315, 23
      %v5317 = vor.u32 4788187, %v5316
      %v5318 = vand.u32 2147483647, %v5317
      %v5320 = vcvt.s32.f32 %v5313
      %v5321 = vmul.f32 %v5320, %v5318
      %v5322 = vxor.u32 %v5321, 2147483648
      %v5323 = vsel %vm5240, %v5322, %v5321
      %v5324 = vsub.s32 4, %v5300
      %v5325 = vsel %vm5240, %v5324, %v5300
      %v5326 = vsel %vm5239, %v4275, %v5323
      %v5327 = vsel %vm5239, 0, %v5325
      %v5328 = vcosq.f32.pop %v5326
      %v5329 = vsinq.f32.pop %v5326
      %vm5330 = vweird.f32 %v4275
      %v5331 = vadd.s32 %v5327, 3
      %v5332 = vand.u32 %v5331, 3
      %vm5333 = vcmp.lt.s32.totalorder %v5332, 2
      %vm5334 = vcmp.eq.s32.totalorder %v5332, 0
      %v5335 = vxor.u32 %v5329, 2147483648
      %v5336 = vsel %vm5334, %v5328, %v5335
      %vm5337 = vcmp.eq.s32.totalorder %v5332, 2
      %v5338 = vxor.u32 %v5328, 2147483648
      %v5339 = vsel %vm5337, %v5338, %v5329
      %v5340 = vsel %vm5333, %v5336, %v5339
      %v5341 = vsel %vm5330, nan, %v5340
      %v5342 = vand.u32 2147483647, %v4280
      %vm5343 = vcmp.le.f32.partialorder %v5342, 0.7853982
      %vm5344 = vcmp.lt.s32.totalorder %v4280, 0
      %v5345 = vand.u32 %v4280, 2139095040
      %v5346 = vshrl.u32 %v5345, 23
      %v5347 = vsub.s32 %v5346, 127
      %v5348 = vand.u32 2147483647, %v4280
      %v5349 = vand.u32 %v5348, 8388607
      %v5350 = vor.u32 %v5349, 8388608
      %v5351 = vsub.s32 0, %v5350
      %v5352 = vadd.s32 %v5347, 1
      %vm5353 = vcmp.gt.s32.totalorder %v5352, 0
      %v5354 = vsel %vm5353, %v5352, 0
      %v5355 = vshrl.u32 %v5354, 5
      %v5356 = vand.u32 %v5354, 31
      %v5357 = vsub.s32 32, %v5356
      %v5358 = vshrl.u32 683565275, %v5357
      %v5359 = vshll.u32 683565275, %v5356
      %v5360 = vshrl.u32 2475754826, %v5357
      %v5361 = vor.u32 %v5359, %v5360
      %v5362 = vshll.u32 2475754826, %v5356
      %v5363 = vshrl.u32 2131351028, %v5357
      %v5364 = vor.u32 %v5362, %v5363
      %v5365 = vshll.u32 2131351028, %v5356
      %v5366 = vshrl.u32 2102212464, %v5357
      %v5367 = vor.u32 %v5365, %v5366
      %v5368 = vshll.u32 2102212464, %v5356
      %v5369 = vshrl.u32 920167782, %v5357
      %v5370 = vor.u32 %v5368, %v5369
      %v5371 = vshll.u32 920167782, %v5356
      %v5372 = vshrl.u32 1326507024, %v5357
      %v5373 = vor.u32 %v5371, %v5372
      %vm5374 = vcmp.lt.s32.totalorder %v5355, 1
      %vm5375 = vcmp.lt.s32.totalorder %v5355, 2
      %vm5376 = vcmp.lt.s32.totalorder %v5355, 3
      %vm5377 = vcmp.lt.s32.totalorder %v5355, 4
      %v5378 = vsel %vm5374, %v5358, %v5361
      %v5379 = vsel %vm5377, %v5367, 2102212464
      %v5380 = vsel %vm5376, %v5364, %v5379
      %v5381 = vsel %vm5375, %v5378, %v5380
      %v5382 = vsel %vm5374, %v5361, %v5364
      %v5383 = vsel %vm5377, %v5370, 920167782
      %v5384 = vsel %vm5376, %v5367, %v5383
      %v5385 = vsel %vm5375, %v5382, %v5384
      %v5386 = vsel %vm5374, %v5364, %v5367
      %v5387 = vsel %vm5377, %v5373, 1326507024
      %v5388 = vsel %vm5376, %v5370, %v5387
      %v5389 = vsel %vm5375, %v5386, %v5388
      %v5390 = vshll.u32 %v5350, 8
      %v5391 = vmul.u32.u64.compose %v5390, %v5389
      %v5392 = vextract.low.u32 %v5391
      %v5393 = vextract.high.u32 %v5391
      %v5394 = vmul.u32.u64.compose %v5390, %v5385
      %v5395 = vextract.low.u32 %v5394
      %v5396 = vextract.high.u32 %v5394
      %v5397 = vmul.u32 %v5390, %v5381
      %v5398 = vadd.s32 %v5393, %v5395
      %vm5399 = vc.u32 %v5393, %v5395
      %v5400 = vadd.s32 %v5396, 1
      %v5401 = vsel %vm5399, %v5400, %v5396
      %v5402 = vadd.s32 %v5397, %v5401
      %v5403 = vadd.s32 %v5402, 536870912
      %v5404 = vshrl.u32 %v5403, 30
      %v5405 = vshll.u32 %v5404, 30
      %v5406 = vsub.s32 %v5402, %v5405
      %vm5407 = vcmp.lt.s32.totalorder %v5406, 0
      %v5408 = vsub.s32 0, %v5406
      %v5409 = vsel %vm5407, %v5408, %v5406
      %v5410 = vclz %v5409
      %v5411 = vsub.s32 %v5410, 2
      %vm5412 = vcmp.gt.s32.totalorder 0, %v5411
      %v5413 = vsel %vm5412, 0, %v5411
      %v5414 = vsub.s32 32, %v5413
      %v5415 = vshll.u32 %v5406, %v5413
      %v5416 = vshrl.u32 %v5398, %v5414
      %v5417 = vor.u32 %v5415, %v5416
      %v5418 = vsub.s32 4294967266, %v5413
      %v5419 = vadd.s32 %v5418, 127
      %v5420 = vshll.u32 %v5419, 23
      %v5421 = vor.u32 4788187, %v5420
      %v5422 = vand.u32 2147483647, %v5421
      %v5424 = vcvt.s32.f32 %v5417
      %v5425 = vmul.f32 %v5424, %v5422
      %v5426 = vxor.u32 %v5425, 2147483648
      %v5427 = vsel %vm5344, %v5426, %v5425
      %v5428 = vsub.s32 4, %v5404
      %v5429 = vsel %vm5344, %v5428, %v5404
      %v5430 = vsel %vm5343, %v4280, %v5427
      %v5431 = vsel %vm5343, 0, %v5429
      %v5432 = vcosq.f32.pop %v5430
      %v5433 = vsinq.f32.pop %v5430
      %vm5434 = vweird.f32 %v4280
      %v5435 = vadd.s32 %v5431, 3
      %v5436 = vand.u32 %v5435, 3
      %vm5437 = vcmp.lt.s32.totalorder %v5436, 2
      %vm5438 = vcmp.eq.s32.totalorder %v5436, 0
      %v5439 = vxor.u32 %v5433, 2147483648
      %v5440 = vsel %vm5438, %v5432, %v5439
      %vm5441 = vcmp.eq.s32.totalorder %v5436, 2
      %v5442 = vxor.u32 %v5432, 2147483648
      %v5443 = vsel %vm5441, %v5442, %v5433
      %v5444 = vsel %vm5437, %v5440, %v5443
      %v5445 = vsel %vm5434, nan, %v5444
      %v5446 = vand.u32 2147483647, %v4283
      %vm5447 = vcmp.le.f32.partialorder %v5446, 0.7853982
      %vm5448 = vcmp.lt.s32.totalorder %v4283, 0
      %v5449 = vand.u32 %v4283, 2139095040
      %v5450 = vshrl.u32 %v5449, 23
      %v5451 = vsub.s32 %v5450, 127
      %v5452 = vand.u32 2147483647, %v4283
      %v5453 = vand.u32 %v5452, 8388607
      %v5454 = vor.u32 %v5453, 8388608
      %v5455 = vsub.s32 0, %v5454
      %v5456 = vadd.s32 %v5451, 1
      %vm5457 = vcmp.gt.s32.totalorder %v5456, 0
      %v5458 = vsel %vm5457, %v5456, 0
      %v5459 = vshrl.u32 %v5458, 5
      %v5460 = vand.u32 %v5458, 31
      %v5461 = vsub.s32 32, %v5460
      %v5462 = vshrl.u32 683565275, %v5461
      %v5463 = vshll.u32 683565275, %v5460
      %v5464 = vshrl.u32 2475754826, %v5461
      %v5465 = vor.u32 %v5463, %v5464
      %v5466 = vshll.u32 2475754826, %v5460
      %v5467 = vshrl.u32 2131351028, %v5461
      %v5468 = vor.u32 %v5466, %v5467
      %v5469 = vshll.u32 2131351028, %v5460
      %v5470 = vshrl.u32 2102212464, %v5461
      %v5471 = vor.u32 %v5469, %v5470
      %v5472 = vshll.u32 2102212464, %v5460
      %v5473 = vshrl.u32 920167782, %v5461
      %v5474 = vor.u32 %v5472, %v5473
      %v5475 = vshll.u32 920167782, %v5460
      %v5476 = vshrl.u32 1326507024, %v5461
      %v5477 = vor.u32 %v5475, %v5476
      %vm5478 = vcmp.lt.s32.totalorder %v5459, 1
      %vm5479 = vcmp.lt.s32.totalorder %v5459, 2
      %vm5480 = vcmp.lt.s32.totalorder %v5459, 3
      %vm5481 = vcmp.lt.s32.totalorder %v5459, 4
      %v5482 = vsel %vm5478, %v5462, %v5465
      %v5483 = vsel %vm5481, %v5471, 2102212464
      %v5484 = vsel %vm5480, %v5468, %v5483
      %v5485 = vsel %vm5479, %v5482, %v5484
      %v5486 = vsel %vm5478, %v5465, %v5468
      %v5487 = vsel %vm5481, %v5474, 920167782
      %v5488 = vsel %vm5480, %v5471, %v5487
      %v5489 = vsel %vm5479, %v5486, %v5488
      %v5490 = vsel %vm5478, %v5468, %v5471
      %v5491 = vsel %vm5481, %v5477, 1326507024
      %v5492 = vsel %vm5480, %v5474, %v5491
      %v5493 = vsel %vm5479, %v5490, %v5492
      %v5494 = vshll.u32 %v5454, 8
      %v5495 = vmul.u32.u64.compose %v5494, %v5493
      %v5496 = vextract.low.u32 %v5495
      %v5497 = vextract.high.u32 %v5495
      %v5498 = vmul.u32.u64.compose %v5494, %v5489
      %v5499 = vextract.low.u32 %v5498
      %v5500 = vextract.high.u32 %v5498
      %v5501 = vmul.u32 %v5494, %v5485
      %v5502 = vadd.s32 %v5497, %v5499
      %vm5503 = vc.u32 %v5497, %v5499
      %v5504 = vadd.s32 %v5500, 1
      %v5505 = vsel %vm5503, %v5504, %v5500
      %v5506 = vadd.s32 %v5501, %v5505
      %v5507 = vadd.s32 %v5506, 536870912
      %v5508 = vshrl.u32 %v5507, 30
      %v5509 = vshll.u32 %v5508, 30
      %v5510 = vsub.s32 %v5506, %v5509
      %vm5511 = vcmp.lt.s32.totalorder %v5510, 0
      %v5512 = vsub.s32 0, %v5510
      %v5513 = vsel %vm5511, %v5512, %v5510
      %v5514 = vclz %v5513
      %v5515 = vsub.s32 %v5514, 2
      %vm5516 = vcmp.gt.s32.totalorder 0, %v5515
      %v5517 = vsel %vm5516, 0, %v5515
      %v5518 = vsub.s32 32, %v5517
      %v5519 = vshll.u32 %v5510, %v5517
      %v5520 = vshrl.u32 %v5502, %v5518
      %v5521 = vor.u32 %v5519, %v5520
      %v5522 = vsub.s32 4294967266, %v5517
      %v5523 = vadd.s32 %v5522, 127
      %v5524 = vshll.u32 %v5523, 23
      %v5525 = vor.u32 4788187, %v5524
      %v5526 = vand.u32 2147483647, %v5525
      %v5528 = vcvt.s32.f32 %v5521
      %v5529 = vmul.f32 %v5528, %v5526
      %v5530 = vxor.u32 %v5529, 2147483648
      %v5531 = vsel %vm5448, %v5530, %v5529
      %v5532 = vsub.s32 4, %v5508
      %v5533 = vsel %vm5448, %v5532, %v5508
      %v5534 = vsel %vm5447, %v4283, %v5531
      %v5535 = vsel %vm5447, 0, %v5533
      %v5536 = vcosq.f32.pop %v5534
      %v5537 = vsinq.f32.pop %v5534
      %vm5538 = vweird.f32 %v4283
      %v5539 = vadd.s32 %v5535, 3
      %v5540 = vand.u32 %v5539, 3
      %vm5541 = vcmp.lt.s32.totalorder %v5540, 2
      %vm5542 = vcmp.eq.s32.totalorder %v5540, 0
      %v5543 = vxor.u32 %v5537, 2147483648
      %v5544 = vsel %vm5542, %v5536, %v5543
      %vm5545 = vcmp.eq.s32.totalorder %v5540, 2
      %v5546 = vxor.u32 %v5536, 2147483648
      %v5547 = vsel %vm5545, %v5546, %v5537
      %v5548 = vsel %vm5541, %v5544, %v5547
      %v5549 = vsel %vm5538, nan, %v5548
      %v5550 = vand.u32 2147483647, %v4288
      %vm5551 = vcmp.le.f32.partialorder %v5550, 0.7853982
      %vm5552 = vcmp.lt.s32.totalorder %v4288, 0
      %v5553 = vand.u32 %v4288, 2139095040
      %v5554 = vshrl.u32 %v5553, 23
      %v5555 = vsub.s32 %v5554, 127
      %v5556 = vand.u32 2147483647, %v4288
      %v5557 = vand.u32 %v5556, 8388607
      %v5558 = vor.u32 %v5557, 8388608
      %v5559 = vsub.s32 0, %v5558
      %v5560 = vadd.s32 %v5555, 1
      %vm5561 = vcmp.gt.s32.totalorder %v5560, 0
      %v5562 = vsel %vm5561, %v5560, 0
      %v5563 = vshrl.u32 %v5562, 5
      %v5564 = vand.u32 %v5562, 31
      %v5565 = vsub.s32 32, %v5564
      %v5566 = vshrl.u32 683565275, %v5565
      %v5567 = vshll.u32 683565275, %v5564
      %v5568 = vshrl.u32 2475754826, %v5565
      %v5569 = vor.u32 %v5567, %v5568
      %v5570 = vshll.u32 2475754826, %v5564
      %v5571 = vshrl.u32 2131351028, %v5565
      %v5572 = vor.u32 %v5570, %v5571
      %v5573 = vshll.u32 2131351028, %v5564
      %v5574 = vshrl.u32 2102212464, %v5565
      %v5575 = vor.u32 %v5573, %v5574
      %v5576 = vshll.u32 2102212464, %v5564
      %v5577 = vshrl.u32 920167782, %v5565
      %v5578 = vor.u32 %v5576, %v5577
      %v5579 = vshll.u32 920167782, %v5564
      %v5580 = vshrl.u32 1326507024, %v5565
      %v5581 = vor.u32 %v5579, %v5580
      %vm5582 = vcmp.lt.s32.totalorder %v5563, 1
      %vm5583 = vcmp.lt.s32.totalorder %v5563, 2
      %vm5584 = vcmp.lt.s32.totalorder %v5563, 3
      %vm5585 = vcmp.lt.s32.totalorder %v5563, 4
      %v5586 = vsel %vm5582, %v5566, %v5569
      %v5587 = vsel %vm5585, %v5575, 2102212464
      %v5588 = vsel %vm5584, %v5572, %v5587
      %v5589 = vsel %vm5583, %v5586, %v5588
      %v5590 = vsel %vm5582, %v5569, %v5572
      %v5591 = vsel %vm5585, %v5578, 920167782
      %v5592 = vsel %vm5584, %v5575, %v5591
      %v5593 = vsel %vm5583, %v5590, %v5592
      %v5594 = vsel %vm5582, %v5572, %v5575
      %v5595 = vsel %vm5585, %v5581, 1326507024
      %v5596 = vsel %vm5584, %v5578, %v5595
      %v5597 = vsel %vm5583, %v5594, %v5596
      %v5598 = vshll.u32 %v5558, 8
      %v5599 = vmul.u32.u64.compose %v5598, %v5597
      %v5600 = vextract.low.u32 %v5599
      %v5601 = vextract.high.u32 %v5599
      %v5602 = vmul.u32.u64.compose %v5598, %v5593
      %v5603 = vextract.low.u32 %v5602
      %v5604 = vextract.high.u32 %v5602
      %v5605 = vmul.u32 %v5598, %v5589
      %v5606 = vadd.s32 %v5601, %v5603
      %vm5607 = vc.u32 %v5601, %v5603
      %v5608 = vadd.s32 %v5604, 1
      %v5609 = vsel %vm5607, %v5608, %v5604
      %v5610 = vadd.s32 %v5605, %v5609
      %v5611 = vadd.s32 %v5610, 536870912
      %v5612 = vshrl.u32 %v5611, 30
      %v5613 = vshll.u32 %v5612, 30
      %v5614 = vsub.s32 %v5610, %v5613
      %vm5615 = vcmp.lt.s32.totalorder %v5614, 0
      %v5616 = vsub.s32 0, %v5614
      %v5617 = vsel %vm5615, %v5616, %v5614
      %v5618 = vclz %v5617
      %v5619 = vsub.s32 %v5618, 2
      %vm5620 = vcmp.gt.s32.totalorder 0, %v5619
      %v5621 = vsel %vm5620, 0, %v5619
      %v5622 = vsub.s32 32, %v5621
      %v5623 = vshll.u32 %v5614, %v5621
      %v5624 = vshrl.u32 %v5606, %v5622
      %v5625 = vor.u32 %v5623, %v5624
      %v5626 = vsub.s32 4294967266, %v5621
      %v5627 = vadd.s32 %v5626, 127
      %v5628 = vshll.u32 %v5627, 23
      %v5629 = vor.u32 4788187, %v5628
      %v5630 = vand.u32 2147483647, %v5629
      %v5632 = vcvt.s32.f32 %v5625
      %v5633 = vmul.f32 %v5632, %v5630
      %v5634 = vxor.u32 %v5633, 2147483648
      %v5635 = vsel %vm5552, %v5634, %v5633
      %v5636 = vsub.s32 4, %v5612
      %v5637 = vsel %vm5552, %v5636, %v5612
      %v5638 = vsel %vm5551, %v4288, %v5635
      %v5639 = vsel %vm5551, 0, %v5637
      %v5640 = vcosq.f32.pop %v5638
      %v5641 = vsinq.f32.pop %v5638
      %vm5642 = vweird.f32 %v4288
      %v5643 = vadd.s32 %v5639, 3
      %v5644 = vand.u32 %v5643, 3
      %vm5645 = vcmp.lt.s32.totalorder %v5644, 2
      %vm5646 = vcmp.eq.s32.totalorder %v5644, 0
      %v5647 = vxor.u32 %v5641, 2147483648
      %v5648 = vsel %vm5646, %v5640, %v5647
      %vm5649 = vcmp.eq.s32.totalorder %v5644, 2
      %v5650 = vxor.u32 %v5640, 2147483648
      %v5651 = vsel %vm5649, %v5650, %v5641
      %v5652 = vsel %vm5645, %v5648, %v5651
      %v5653 = vsel %vm5642, nan, %v5652
      %v5654 = vand.u32 2147483647, %v4291
      %vm5655 = vcmp.le.f32.partialorder %v5654, 0.7853982
      %vm5656 = vcmp.lt.s32.totalorder %v4291, 0
      %v5657 = vand.u32 %v4291, 2139095040
      %v5658 = vshrl.u32 %v5657, 23
      %v5659 = vsub.s32 %v5658, 127
      %v5660 = vand.u32 2147483647, %v4291
      %v5661 = vand.u32 %v5660, 8388607
      %v5662 = vor.u32 %v5661, 8388608
      %v5663 = vsub.s32 0, %v5662
      %v5664 = vadd.s32 %v5659, 1
      %vm5665 = vcmp.gt.s32.totalorder %v5664, 0
      %v5666 = vsel %vm5665, %v5664, 0
      %v5667 = vshrl.u32 %v5666, 5
      %v5668 = vand.u32 %v5666, 31
      %v5669 = vsub.s32 32, %v5668
      %v5670 = vshrl.u32 683565275, %v5669
      %v5671 = vshll.u32 683565275, %v5668
      %v5672 = vshrl.u32 2475754826, %v5669
      %v5673 = vor.u32 %v5671, %v5672
      %v5674 = vshll.u32 2475754826, %v5668
      %v5675 = vshrl.u32 2131351028, %v5669
      %v5676 = vor.u32 %v5674, %v5675
      %v5677 = vshll.u32 2131351028, %v5668
      %v5678 = vshrl.u32 2102212464, %v5669
      %v5679 = vor.u32 %v5677, %v5678
      %v5680 = vshll.u32 2102212464, %v5668
      %v5681 = vshrl.u32 920167782, %v5669
      %v5682 = vor.u32 %v5680, %v5681
      %v5683 = vshll.u32 920167782, %v5668
      %v5684 = vshrl.u32 1326507024, %v5669
      %v5685 = vor.u32 %v5683, %v5684
      %vm5686 = vcmp.lt.s32.totalorder %v5667, 1
      %vm5687 = vcmp.lt.s32.totalorder %v5667, 2
      %vm5688 = vcmp.lt.s32.totalorder %v5667, 3
      %vm5689 = vcmp.lt.s32.totalorder %v5667, 4
      %v5690 = vsel %vm5686, %v5670, %v5673
      %v5691 = vsel %vm5689, %v5679, 2102212464
      %v5692 = vsel %vm5688, %v5676, %v5691
      %v5693 = vsel %vm5687, %v5690, %v5692
      %v5694 = vsel %vm5686, %v5673, %v5676
      %v5695 = vsel %vm5689, %v5682, 920167782
      %v5696 = vsel %vm5688, %v5679, %v5695
      %v5697 = vsel %vm5687, %v5694, %v5696
      %v5698 = vsel %vm5686, %v5676, %v5679
      %v5699 = vsel %vm5689, %v5685, 1326507024
      %v5700 = vsel %vm5688, %v5682, %v5699
      %v5701 = vsel %vm5687, %v5698, %v5700
      %v5702 = vshll.u32 %v5662, 8
      %v5703 = vmul.u32.u64.compose %v5702, %v5701
      %v5704 = vextract.low.u32 %v5703
      %v5705 = vextract.high.u32 %v5703
      %v5706 = vmul.u32.u64.compose %v5702, %v5697
      %v5707 = vextract.low.u32 %v5706
      %v5708 = vextract.high.u32 %v5706
      %v5709 = vmul.u32 %v5702, %v5693
      %v5710 = vadd.s32 %v5705, %v5707
      %vm5711 = vc.u32 %v5705, %v5707
      %v5712 = vadd.s32 %v5708, 1
      %v5713 = vsel %vm5711, %v5712, %v5708
      %v5714 = vadd.s32 %v5709, %v5713
      %v5715 = vadd.s32 %v5714, 536870912
      %v5716 = vshrl.u32 %v5715, 30
      %v5717 = vshll.u32 %v5716, 30
      %v5718 = vsub.s32 %v5714, %v5717
      %vm5719 = vcmp.lt.s32.totalorder %v5718, 0
      %v5720 = vsub.s32 0, %v5718
      %v5721 = vsel %vm5719, %v5720, %v5718
      %v5722 = vclz %v5721
      %v5723 = vsub.s32 %v5722, 2
      %vm5724 = vcmp.gt.s32.totalorder 0, %v5723
      %v5725 = vsel %vm5724, 0, %v5723
      %v5726 = vsub.s32 32, %v5725
      %v5727 = vshll.u32 %v5718, %v5725
      %v5728 = vshrl.u32 %v5710, %v5726
      %v5729 = vor.u32 %v5727, %v5728
      %v5730 = vsub.s32 4294967266, %v5725
      %v5731 = vadd.s32 %v5730, 127
      %v5732 = vshll.u32 %v5731, 23
      %v5733 = vor.u32 4788187, %v5732
      %v5734 = vand.u32 2147483647, %v5733
      %v5736 = vcvt.s32.f32 %v5729
      %v5737 = vmul.f32 %v5736, %v5734
      %v5738 = vxor.u32 %v5737, 2147483648
      %v5739 = vsel %vm5656, %v5738, %v5737
      %v5740 = vsub.s32 4, %v5716
      %v5741 = vsel %vm5656, %v5740, %v5716
      %v5742 = vsel %vm5655, %v4291, %v5739
      %v5743 = vsel %vm5655, 0, %v5741
      %v5744 = vcosq.f32.pop %v5742
      %v5745 = vsinq.f32.pop %v5742
      %vm5746 = vweird.f32 %v4291
      %v5747 = vadd.s32 %v5743, 3
      %v5748 = vand.u32 %v5747, 3
      %vm5749 = vcmp.lt.s32.totalorder %v5748, 2
      %vm5750 = vcmp.eq.s32.totalorder %v5748, 0
      %v5751 = vxor.u32 %v5745, 2147483648
      %v5752 = vsel %vm5750, %v5744, %v5751
      %vm5753 = vcmp.eq.s32.totalorder %v5748, 2
      %v5754 = vxor.u32 %v5744, 2147483648
      %v5755 = vsel %vm5753, %v5754, %v5745
      %v5756 = vsel %vm5749, %v5752, %v5755
      %v5757 = vsel %vm5746, nan, %v5756
      %v5758 = vand.u32 2147483647, %v4296
      %vm5759 = vcmp.le.f32.partialorder %v5758, 0.7853982
      %vm5760 = vcmp.lt.s32.totalorder %v4296, 0
      %v5761 = vand.u32 %v4296, 2139095040
      %v5762 = vshrl.u32 %v5761, 23
      %v5763 = vsub.s32 %v5762, 127
      %v5764 = vand.u32 2147483647, %v4296
      %v5765 = vand.u32 %v5764, 8388607
      %v5766 = vor.u32 %v5765, 8388608
      %v5767 = vsub.s32 0, %v5766
      %v5768 = vadd.s32 %v5763, 1
      %vm5769 = vcmp.gt.s32.totalorder %v5768, 0
      %v5770 = vsel %vm5769, %v5768, 0
      %v5771 = vshrl.u32 %v5770, 5
      %v5772 = vand.u32 %v5770, 31
      %v5773 = vsub.s32 32, %v5772
      %v5774 = vshrl.u32 683565275, %v5773
      %v5775 = vshll.u32 683565275, %v5772
      %v5776 = vshrl.u32 2475754826, %v5773
      %v5777 = vor.u32 %v5775, %v5776
      %v5778 = vshll.u32 2475754826, %v5772
      %v5779 = vshrl.u32 2131351028, %v5773
      %v5780 = vor.u32 %v5778, %v5779
      %v5781 = vshll.u32 2131351028, %v5772
      %v5782 = vshrl.u32 2102212464, %v5773
      %v5783 = vor.u32 %v5781, %v5782
      %v5784 = vshll.u32 2102212464, %v5772
      %v5785 = vshrl.u32 920167782, %v5773
      %v5786 = vor.u32 %v5784, %v5785
      %v5787 = vshll.u32 920167782, %v5772
      %v5788 = vshrl.u32 1326507024, %v5773
      %v5789 = vor.u32 %v5787, %v5788
      %vm5790 = vcmp.lt.s32.totalorder %v5771, 1
      %vm5791 = vcmp.lt.s32.totalorder %v5771, 2
      %vm5792 = vcmp.lt.s32.totalorder %v5771, 3
      %vm5793 = vcmp.lt.s32.totalorder %v5771, 4
      %v5794 = vsel %vm5790, %v5774, %v5777
      %v5795 = vsel %vm5793, %v5783, 2102212464
      %v5796 = vsel %vm5792, %v5780, %v5795
      %v5797 = vsel %vm5791, %v5794, %v5796
      %v5798 = vsel %vm5790, %v5777, %v5780
      %v5799 = vsel %vm5793, %v5786, 920167782
      %v5800 = vsel %vm5792, %v5783, %v5799
      %v5801 = vsel %vm5791, %v5798, %v5800
      %v5802 = vsel %vm5790, %v5780, %v5783
      %v5803 = vsel %vm5793, %v5789, 1326507024
      %v5804 = vsel %vm5792, %v5786, %v5803
      %v5805 = vsel %vm5791, %v5802, %v5804
      %v5806 = vshll.u32 %v5766, 8
      %v5807 = vmul.u32.u64.compose %v5806, %v5805
      %v5808 = vextract.low.u32 %v5807
      %v5809 = vextract.high.u32 %v5807
      %v5810 = vmul.u32.u64.compose %v5806, %v5801
      %v5811 = vextract.low.u32 %v5810
      %v5812 = vextract.high.u32 %v5810
      %v5813 = vmul.u32 %v5806, %v5797
      %v5814 = vadd.s32 %v5809, %v5811
      %vm5815 = vc.u32 %v5809, %v5811
      %v5816 = vadd.s32 %v5812, 1
      %v5817 = vsel %vm5815, %v5816, %v5812
      %v5818 = vadd.s32 %v5813, %v5817
      %v5819 = vadd.s32 %v5818, 536870912
      %v5820 = vshrl.u32 %v5819, 30
      %v5821 = vshll.u32 %v5820, 30
      %v5822 = vsub.s32 %v5818, %v5821
      %vm5823 = vcmp.lt.s32.totalorder %v5822, 0
      %v5824 = vsub.s32 0, %v5822
      %v5825 = vsel %vm5823, %v5824, %v5822
      %v5826 = vclz %v5825
      %v5827 = vsub.s32 %v5826, 2
      %vm5828 = vcmp.gt.s32.totalorder 0, %v5827
      %v5829 = vsel %vm5828, 0, %v5827
      %v5830 = vsub.s32 32, %v5829
      %v5831 = vshll.u32 %v5822, %v5829
      %v5832 = vshrl.u32 %v5814, %v5830
      %v5833 = vor.u32 %v5831, %v5832
      %v5834 = vsub.s32 4294967266, %v5829
      %v5835 = vadd.s32 %v5834, 127
      %v5836 = vshll.u32 %v5835, 23
      %v5837 = vor.u32 4788187, %v5836
      %v5838 = vand.u32 2147483647, %v5837
      %v5840 = vcvt.s32.f32 %v5833
      %v5841 = vmul.f32 %v5840, %v5838
      %v5842 = vxor.u32 %v5841, 2147483648
      %v5843 = vsel %vm5760, %v5842, %v5841
      %v5844 = vsub.s32 4, %v5820
      %v5845 = vsel %vm5760, %v5844, %v5820
      %v5846 = vsel %vm5759, %v4296, %v5843
      %v5847 = vsel %vm5759, 0, %v5845
      %v5848 = vcosq.f32.pop %v5846
      %v5849 = vsinq.f32.pop %v5846
      %vm5850 = vweird.f32 %v4296
      %v5851 = vadd.s32 %v5847, 3
      %v5852 = vand.u32 %v5851, 3
      %vm5853 = vcmp.lt.s32.totalorder %v5852, 2
      %vm5854 = vcmp.eq.s32.totalorder %v5852, 0
      %v5855 = vxor.u32 %v5849, 2147483648
      %v5856 = vsel %vm5854, %v5848, %v5855
      %vm5857 = vcmp.eq.s32.totalorder %v5852, 2
      %v5858 = vxor.u32 %v5848, 2147483648
      %v5859 = vsel %vm5857, %v5858, %v5849
      %v5860 = vsel %vm5853, %v5856, %v5859
      %v5861 = vsel %vm5850, nan, %v5860
      %v5862 = vand.u32 2147483647, %v4299
      %vm5863 = vcmp.le.f32.partialorder %v5862, 0.7853982
      %vm5864 = vcmp.lt.s32.totalorder %v4299, 0
      %v5865 = vand.u32 %v4299, 2139095040
      %v5866 = vshrl.u32 %v5865, 23
      %v5867 = vsub.s32 %v5866, 127
      %v5868 = vand.u32 2147483647, %v4299
      %v5869 = vand.u32 %v5868, 8388607
      %v5870 = vor.u32 %v5869, 8388608
      %v5871 = vsub.s32 0, %v5870
      %v5872 = vadd.s32 %v5867, 1
      %vm5873 = vcmp.gt.s32.totalorder %v5872, 0
      %v5874 = vsel %vm5873, %v5872, 0
      %v5875 = vshrl.u32 %v5874, 5
      %v5876 = vand.u32 %v5874, 31
      %v5877 = vsub.s32 32, %v5876
      %v5878 = vshrl.u32 683565275, %v5877
      %v5879 = vshll.u32 683565275, %v5876
      %v5880 = vshrl.u32 2475754826, %v5877
      %v5881 = vor.u32 %v5879, %v5880
      %v5882 = vshll.u32 2475754826, %v5876
      %v5883 = vshrl.u32 2131351028, %v5877
      %v5884 = vor.u32 %v5882, %v5883
      %v5885 = vshll.u32 2131351028, %v5876
      %v5886 = vshrl.u32 2102212464, %v5877
      %v5887 = vor.u32 %v5885, %v5886
      %v5888 = vshll.u32 2102212464, %v5876
      %v5889 = vshrl.u32 920167782, %v5877
      %v5890 = vor.u32 %v5888, %v5889
      %v5891 = vshll.u32 920167782, %v5876
      %v5892 = vshrl.u32 1326507024, %v5877
      %v5893 = vor.u32 %v5891, %v5892
      %vm5894 = vcmp.lt.s32.totalorder %v5875, 1
      %vm5895 = vcmp.lt.s32.totalorder %v5875, 2
      %vm5896 = vcmp.lt.s32.totalorder %v5875, 3
      %vm5897 = vcmp.lt.s32.totalorder %v5875, 4
      %v5898 = vsel %vm5894, %v5878, %v5881
      %v5899 = vsel %vm5897, %v5887, 2102212464
      %v5900 = vsel %vm5896, %v5884, %v5899
      %v5901 = vsel %vm5895, %v5898, %v5900
      %v5902 = vsel %vm5894, %v5881, %v5884
      %v5903 = vsel %vm5897, %v5890, 920167782
      %v5904 = vsel %vm5896, %v5887, %v5903
      %v5905 = vsel %vm5895, %v5902, %v5904
      %v5906 = vsel %vm5894, %v5884, %v5887
      %v5907 = vsel %vm5897, %v5893, 1326507024
      %v5908 = vsel %vm5896, %v5890, %v5907
      %v5909 = vsel %vm5895, %v5906, %v5908
      %v5910 = vshll.u32 %v5870, 8
      %v5911 = vmul.u32.u64.compose %v5910, %v5909
      %v5912 = vextract.low.u32 %v5911
      %v5913 = vextract.high.u32 %v5911
      %v5914 = vmul.u32.u64.compose %v5910, %v5905
      %v5915 = vextract.low.u32 %v5914
      %v5916 = vextract.high.u32 %v5914
      %v5917 = vmul.u32 %v5910, %v5901
      %v5918 = vadd.s32 %v5913, %v5915
      %vm5919 = vc.u32 %v5913, %v5915
      %v5920 = vadd.s32 %v5916, 1
      %v5921 = vsel %vm5919, %v5920, %v5916
      %v5922 = vadd.s32 %v5917, %v5921
      %v5923 = vadd.s32 %v5922, 536870912
      %v5924 = vshrl.u32 %v5923, 30
      %v5925 = vshll.u32 %v5924, 30
      %v5926 = vsub.s32 %v5922, %v5925
      %vm5927 = vcmp.lt.s32.totalorder %v5926, 0
      %v5928 = vsub.s32 0, %v5926
      %v5929 = vsel %vm5927, %v5928, %v5926
      %v5930 = vclz %v5929
      %v5931 = vsub.s32 %v5930, 2
      %vm5932 = vcmp.gt.s32.totalorder 0, %v5931
      %v5933 = vsel %vm5932, 0, %v5931
      %v5934 = vsub.s32 32, %v5933
      %v5935 = vshll.u32 %v5926, %v5933
      %v5936 = vshrl.u32 %v5918, %v5934
      %v5937 = vor.u32 %v5935, %v5936
      %v5938 = vsub.s32 4294967266, %v5933
      %v5939 = vadd.s32 %v5938, 127
      %v5940 = vshll.u32 %v5939, 23
      %v5941 = vor.u32 4788187, %v5940
      %v5942 = vand.u32 2147483647, %v5941
      %v5944 = vcvt.s32.f32 %v5937
      %v5945 = vmul.f32 %v5944, %v5942
      %v5946 = vxor.u32 %v5945, 2147483648
      %v5947 = vsel %vm5864, %v5946, %v5945
      %v5948 = vsub.s32 4, %v5924
      %v5949 = vsel %vm5864, %v5948, %v5924
      %v5950 = vsel %vm5863, %v4299, %v5947
      %v5951 = vsel %vm5863, 0, %v5949
      %v5952 = vcosq.f32.pop %v5950
      %v5953 = vsinq.f32.pop %v5950
      %vm5954 = vweird.f32 %v4299
      %v5955 = vadd.s32 %v5951, 3
      %v5956 = vand.u32 %v5955, 3
      %vm5957 = vcmp.lt.s32.totalorder %v5956, 2
      %vm5958 = vcmp.eq.s32.totalorder %v5956, 0
      %v5959 = vxor.u32 %v5953, 2147483648
      %v5960 = vsel %vm5958, %v5952, %v5959
      %vm5961 = vcmp.eq.s32.totalorder %v5956, 2
      %v5962 = vxor.u32 %v5952, 2147483648
      %v5963 = vsel %vm5961, %v5962, %v5953
      %v5964 = vsel %vm5957, %v5960, %v5963
      %v5965 = vsel %vm5954, nan, %v5964
      %v5966 = vpack.c.bf16 %v4509, %v4405
      %v5967 = vpack.c.bf16 %v4717, %v4613
      %v5968 = vpack.c.bf16 %v4925, %v4821
      %v5969 = vpack.c.bf16 %v5133, %v5029
      %v5970 = vpack.c.bf16 %v5341, %v5237
      %v5971 = vpack.c.bf16 %v5549, %v5445
      %v5972 = vpack.c.bf16 %v5757, %v5653
      %v5973 = vpack.c.bf16 %v5965, %v5861
      %v5974 = vld [vmem:[%s5] sm:$0xf]
      %v5975 = vld [vmem:[%s5 + $0x4] sm:$0xf]
      %v5976 = vld [vmem:[%s5 + $0x8] sm:$0xf]
      %v5977 = vld [vmem:[%s5 + $0xc] sm:$0xf]
      %v5978 = vld [vmem:[%s5 + $0x10] sm:$0xf]
      %v5979 = vld [vmem:[%s5 + $0x14] sm:$0xf]
      %v5980 = vld [vmem:[%s5 + $0x18] sm:$0xf]
      %v5981 = vld [vmem:[%s5 + $0x1c] sm:$0xf]
      %v5982 = vld [vmem:[%s5 + $0x20] sm:$0xf]
      %v5983 = vld [vmem:[%s5 + $0x24] sm:$0xf]
      %v5984 = vld [vmem:[%s5 + $0x28] sm:$0xf]
      %v5985 = vld [vmem:[%s5 + $0x2c] sm:$0xf]
      %v5986 = vld [vmem:[%s5 + $0x30] sm:$0xf]
      %v5987 = vld [vmem:[%s5 + $0x34] sm:$0xf]
      %v5988 = vld [vmem:[%s5 + $0x38] sm:$0xf]
      %v5989 = vld [vmem:[%s5 + $0x3c] sm:$0xf]
      %v5990 = vld [vmem:[%s6] sm:$0x1]
      %v5992 = vlaneseq
      %v5993 = vshrl.u32 %v5992, 7
      %v5994 = vsub.s32 0, %v5993
      %v5995 = vrot.slane %v5990, %v5994
      %v6013 = vunpack.c.l.b16 %v5974
      %v6014 = vunpack.c.l.b16 %v5975
      %v6015 = vunpack.c.l.b16 %v5976
      %v6016 = vunpack.c.l.b16 %v5977
      %v6017 = vunpack.c.l.b16 %v5978
      %v6018 = vunpack.c.l.b16 %v5979
      %v6019 = vunpack.c.l.b16 %v5980
      %v6020 = vunpack.c.l.b16 %v5981
      %v6021 = vunpack.c.l.b16 %v5982
      %v6022 = vunpack.c.l.b16 %v5983
      %v6023 = vunpack.c.l.b16 %v5984
      %v6024 = vunpack.c.l.b16 %v5985
      %v6025 = vunpack.c.l.b16 %v5986
      %v6026 = vunpack.c.l.b16 %v5987
      %v6027 = vunpack.c.l.b16 %v5988
      %v6028 = vunpack.c.l.b16 %v5989
      %v6029 = vpack.c.b16 %v6014, %v6013
      %v6030 = vpack.c.b16 %v6016, %v6015
      %v6031 = vpack.c.b16 %v6018, %v6017
      %v6032 = vpack.c.b16 %v6020, %v6019
      %v6033 = vpack.c.b16 %v6022, %v6021
      %v6034 = vpack.c.b16 %v6024, %v6023
      %v6035 = vpack.c.b16 %v6026, %v6025
      %v6036 = vpack.c.b16 %v6028, %v6027
      %6045 = vmatprep.subr.bf16.mxu0 0
      %6046 = vmatpush1.bf16.msra.mxu0 %v6029
      %6047 = vmatprep.subr.bf16.mxu0 0
      %6048 = vmatpush1.bf16.msra.mxu0 %v6030
      %6049 = vmatprep.subr.bf16.mxu0 0
      %6050 = vmatpush1.bf16.msra.mxu0 %v6031
      %6051 = vmatprep.subr.bf16.mxu0 0
      %6052 = vmatpush1.bf16.msra.mxu0 %v6032
      %6053 = vmatprep.subr.bf16.mxu0 0
      %6054 = vmatpush1.bf16.msra.mxu0 %v6033
      %6055 = vmatprep.subr.bf16.mxu0 0
      %6056 = vmatpush1.bf16.msra.mxu0 %v6034
      %6057 = vmatprep.subr.bf16.mxu0 0
      %6058 = vmatpush1.bf16.msra.mxu0 %v6035
      %6059 = vmatprep.subr.bf16.mxu0 0
      %6060 = vmatpush1.bf16.msra.mxu0 %v6036
      %6061 = vmatprep.subr.bf16.mxu0 0
      %6062 = vmatpush1.bf16.msra.mxu0 0
      %6063 = vmatprep.subr.bf16.mxu0 0
      %6064 = vmatpush1.bf16.msra.mxu0 0
      %6065 = vmatprep.subr.bf16.mxu0 0
      %6066 = vmatpush1.bf16.msra.mxu0 0
      %6067 = vmatprep.subr.bf16.mxu0 0
      %6068 = vmatpush1.bf16.msra.mxu0 0
      %6069 = vmatprep.subr.bf16.mxu0 0
      %6070 = vmatpush1.bf16.msra.mxu0 0
      %6071 = vmatprep.subr.bf16.mxu0 0
      %6072 = vmatpush1.bf16.msra.mxu0 0
      %6073 = vmatprep.subr.bf16.mxu0 0
      %6074 = vmatpush1.bf16.msra.mxu0 0
      %6075 = vmatprep.subr.bf16.mxu0 0
      %6076 = vmatpush1.bf16.msra.mxu0 0
      %6077 = vmatprep.mubr.bf16.mxu0 0
      %6078 = vmatmul.mubr.bf16.gmra.mrb[0].mxu0 %v5966
      %v6079 = vpop.f32.mrb[0].mxu0
      %v6080 = vadd.f32 %v5995, %v6079
      %v6081 = vpop.f32.mrb[0].mxu0
      %v6082 = vpop.f32.mrb[0].mxu0
      %v6083 = vadd.f32 %v5995, %v6082
      %v6084 = vpop.f32.mrb[0].mxu0
      %6085 = vmatprep.mubr.bf16.mxu0 0
      %6086 = vmatmul.mubr.bf16.gmra.mrb[0].mxu0 %v5967
      %v6087 = vpop.f32.mrb[0].mxu0
      %v6088 = vadd.f32 %v5995, %v6087
      %v6089 = vpop.f32.mrb[0].mxu0
      %v6090 = vpop.f32.mrb[0].mxu0
      %v6091 = vadd.f32 %v5995, %v6090
      %v6092 = vpop.f32.mrb[0].mxu0
      %6093 = vmatprep.mubr.bf16.mxu0 0
      %6094 = vmatmul.mubr.bf16.gmra.mrb[0].mxu0 %v5968
      %v6095 = vpop.f32.mrb[0].mxu0
      %v6096 = vadd.f32 %v5995, %v6095
      %v6097 = vpop.f32.mrb[0].mxu0
      %v6098 = vpop.f32.mrb[0].mxu0
      %v6099 = vadd.f32 %v5995, %v6098
      %v6100 = vpop.f32.mrb[0].mxu0
      %6101 = vmatprep.mubr.bf16.mxu0 0
      %6102 = vmatmul.mubr.bf16.gmra.mrb[0].mxu0 %v5969
      %v6103 = vpop.f32.mrb[0].mxu0
      %v6104 = vadd.f32 %v5995, %v6103
      %v6105 = vpop.f32.mrb[0].mxu0
      %v6106 = vpop.f32.mrb[0].mxu0
      %v6107 = vadd.f32 %v5995, %v6106
      %v6108 = vpop.f32.mrb[0].mxu0
      %6109 = vmatprep.mubr.bf16.mxu0 0
      %6110 = vmatmul.mubr.bf16.gmra.mrb[0].mxu0 %v5970
      %v6111 = vpop.f32.mrb[0].mxu0
      %v6112 = vadd.f32 %v5995, %v6111
      %v6113 = vpop.f32.mrb[0].mxu0
      %v6114 = vpop.f32.mrb[0].mxu0
      %v6115 = vadd.f32 %v5995, %v6114
      %v6116 = vpop.f32.mrb[0].mxu0
      %6117 = vmatprep.mubr.bf16.mxu0 0
      %6118 = vmatmul.mubr.bf16.gmra.mrb[0].mxu0 %v5971
      %v6119 = vpop.f32.mrb[0].mxu0
      %v6120 = vadd.f32 %v5995, %v6119
      %v6121 = vpop.f32.mrb[0].mxu0
      %v6122 = vpop.f32.mrb[0].mxu0
      %v6123 = vadd.f32 %v5995, %v6122
      %v6124 = vpop.f32.mrb[0].mxu0
      %6125 = vmatprep.mubr.bf16.mxu0 0
      %6126 = vmatmul.mubr.bf16.gmra.mrb[0].mxu0 %v5972
      %v6127 = vpop.f32.mrb[0].mxu0
      %v6128 = vadd.f32 %v5995, %v6127
      %v6129 = vpop.f32.mrb[0].mxu0
      %v6130 = vpop.f32.mrb[0].mxu0
      %v6131 = vadd.f32 %v5995, %v6130
      %v6132 = vpop.f32.mrb[0].mxu0
      %6133 = vmatprep.mubr.bf16.mxu0 0
      %6134 = vmatmul.mubr.bf16.gmra.mrb[0].mxu0 %v5973
      %v6135 = vpop.f32.mrb[0].mxu0
      %v6136 = vadd.f32 %v5995, %v6135
      %v6137 = vpop.f32.mrb[0].mxu0
      %v6138 = vpop.f32.mrb[0].mxu0
      %v6139 = vadd.f32 %v5995, %v6138
      %v6140 = vpop.f32.mrb[0].mxu0
      %6141 = vdwg.mxu0
      %vm6142 = vcmask 31744
      %6143 = vst.msk [vmem:[%s280] sm:$0xff] %vm6142, %v6080
      %6144 = vst.msk [vmem:[%s280 + $0x8] sm:$0xff] %vm6142, %v6083
      %6145 = vst.msk [vmem:[%s280 + $0x10] sm:$0xff] %vm6142, %v6088
      %6146 = vst.msk [vmem:[%s280 + $0x18] sm:$0xff] %vm6142, %v6091
      %6147 = vst.msk [vmem:[%s280 + $0x20] sm:$0xff] %vm6142, %v6096
      %6148 = vst.msk [vmem:[%s280 + $0x28] sm:$0xff] %vm6142, %v6099
      %6149 = vst.msk [vmem:[%s280 + $0x30] sm:$0xff] %vm6142, %v6104
      %6150 = vst.msk [vmem:[%s280 + $0x38] sm:$0xff] %vm6142, %v6107
      %6151 = vst.msk [vmem:[%s280 + $0x40] sm:$0xff] %vm6142, %v6112
      %6152 = vst.msk [vmem:[%s280 + $0x48] sm:$0xff] %vm6142, %v6115
      %6153 = vst.msk [vmem:[%s280 + $0x50] sm:$0xff] %vm6142, %v6120
      %6154 = vst.msk [vmem:[%s280 + $0x58] sm:$0xff] %vm6142, %v6123
      %6155 = vst.msk [vmem:[%s280 + $0x60] sm:$0xff] %vm6142, %v6128
      %6156 = vst.msk [vmem:[%s280 + $0x68] sm:$0xff] %vm6142, %v6131
      %6157 = vst.msk [vmem:[%s280 + $0x70] sm:$0xff] %vm6142, %v6136
      %6158 = vst.msk [vmem:[%s280 + $0x78] sm:$0xff] %vm6142, %v6139
      %s6159 = smul.u32 16, %s18
      %p6160 = scmp.lt.s32.totalorder %s6159, 63
      %s6161 = scalar_select %p6160, %s6159, 63
      %s6162 = smul.addr %s6161, 8
      %s6163 = scalar_lea.vmem %s7, %s6162
      // Predicated region
      $region49: #{tpu_custom_call.1} parent=47 // pred_check
        %p6164 = pneg %p188
      $region50: #{tpu_custom_call.1} parent=47 // pred_check_branch
        %6166 = sbr.rel (%p6164) target = $region52
      $region51: #{tpu_custom_call.1} parent=47 // pred_region
        %s6167 = smul.u32 16, %s18
      $region52: #{tpu_custom_call.1} parent=47 // pred_fallthru
        _
    $region48: #{tpu_custom_call.1} parent=5 // pred_fallthru
      _
    %p6168 = scmp.le.s32.totalorder 2, %s13
    // Predicated region
    $region53: #{tpu_custom_call.1} parent=5 // pred_check
      %p6169 = pneg %p6168
    $region54: #{tpu_custom_call.1} parent=5 // pred_check_branch
      %6171 = sbr.rel (%p6169) target = $region56
    $region55: #{tpu_custom_call.1} parent=5 // pred_region
      %s6172 = ssub.s32 %s13, 2
      // Predicated region
      $region57: #{tpu_custom_call.1} parent=55 // pred_check
        %p6173 = pneg %p194
      $region58: #{tpu_custom_call.1} parent=55 // pred_check_branch
        %6175 = sbr.rel (%p6173) target = $region60
      $region59: #{tpu_custom_call.1} parent=55 // pred_region
        %s6176 = smul.u32 16, %s19
        %p6177 = scmp.lt.s32.totalorder %s6176, 63
        %s6178 = scalar_select %p6177, %s6176, 63
        %s6179 = smul.addr %s6178, 8
        %s6180 = scalar_lea.vmem %s7, %s6179
      $region60: #{tpu_custom_call.1} parent=55 // pred_fallthru
        _
    $region56: #{tpu_custom_call.1} parent=5 // pred_fallthru
      _
  $region6: #{tpu_custom_call.1} parent=0 // loop_footer
    %s17 = sadd.s32 1, %s13
  $region7: #{tpu_custom_call.1} parent=0 // loop_footer_branch
    %12 = sbr.rel target = $region3
  $region8: #{tpu_custom_call.1} parent=0 // loop_exit
    _

</llo_original>
